<compile_context>
chip_gen: v7x
topology: tpu7x:2x2x1
jax: 0.10.0
libtpu: 0.0.40
codegen_flags: <defaults>
</compile_context>

<pallas_src>
import math
import functools

import jax
import jax.numpy as jnp
from jax.experimental import pallas as pl
from jax.experimental.pallas import tpu as pltpu

EPS = 1e-5  # nn.LayerNorm default


def _encoder_layer_kernel(
    xq_ref, xf_ref,
    wq_ref, bq_ref, wk_ref, bk_ref, wv_ref, bv_ref, wo_ref, bo_ref,
    g1_ref, be1_ref, w1_ref, b1_ref, w2_ref, b2_ref, g2_ref, be2_ref,
    out_ref, *maybe_attn,
    n_heads: int, mxu_dtype,
):
    attn_ref = maybe_attn[0] if maybe_attn else None

    Bt, Lq, D = xq_ref.shape          # query-row tile of this grid step
    L = xf_ref.shape[1]               # full sequence length (K/V source)
    dh = D // n_heads
    scale = 1.0 / math.sqrt(dh)

    xq = xq_ref[...]                                   # (Bt, Lq, D) f32
    xq2 = xq.reshape(Bt * Lq, D)                       # fold batch into matmul M
    xf2 = xf_ref[...].reshape(Bt * L, D)

    def mm(a, b):
        # bf16 MXU operands, f32 accumulation. `b` (weight) is already mxu_dtype.
        return jnp.dot(a.astype(mxu_dtype), b, preferred_element_type=jnp.float32)

    # ---- QKV projections (batch folded into M) -------------------------------
    q = mm(xq2, wq_ref[...]) + bq_ref[...]             # (Bt*Lq, D) f32
    k = mm(xf2, wk_ref[...]) + bk_ref[...]             # (Bt*L,  D) f32
    v = mm(xf2, wv_ref[...]) + bv_ref[...]

    q3 = q.reshape(Bt, Lq, D)
    k3 = k.reshape(Bt, L, D)
    v3 = v.reshape(Bt, L, D)

    # ---- multi-head attention; heads accumulate straight into Wo projection ----
    new_x = jnp.zeros((Bt * Lq, D), jnp.float32)
    for h in range(n_heads):                           # static unroll over heads
        sl = slice(h * dh, (h + 1) * dh)
        qh = q3[:, :, sl].astype(mxu_dtype)            # (Bt, Lq, dh)
        kh = k3[:, :, sl].astype(mxu_dtype)            # (Bt, L,  dh)
        vh = v3[:, :, sl].astype(mxu_dtype)

        s = jnp.einsum("bqd,bkd->bqk", qh, kh,
                       preferred_element_type=jnp.float32) * scale   # (Bt, Lq, L)
        s = s - jnp.max(s, axis=-1, keepdims=True)
        e = jnp.exp(s)
        den = jnp.sum(e, axis=-1, keepdims=True)
        r = pl.reciprocal(den, approx=True)            # EUP slot
        r = r * (2.0 - den * r)                        # one Newton step -> ~f32 exact
        a = e * r                                      # (Bt, Lq, L) f32

        if attn_ref is not None:
            for b in range(Bt):
                attn_ref[b, h] = a[b].astype(attn_ref.dtype)

        ctx = jnp.einsum("bqk,bkd->bqd", a.astype(mxu_dtype), vh,
                         preferred_element_type=jnp.float32)          # (Bt, Lq, dh)
        # ctx_h @ Wo[rows of head h]  ==  (concat of heads) @ Wo, without the concat.
        new_x = new_x + mm(ctx.reshape(Bt * Lq, dh), wo_ref[sl, :])
    new_x = new_x + bo_ref[...]

    # ---- residual + LayerNorm1 (dropout = identity) ---------------------------
    x1 = xq2 + new_x
    mu1 = jnp.mean(x1, axis=-1, keepdims=True)
    var1 = jnp.mean((x1 - mu1) ** 2, axis=-1, keepdims=True)
    xn = (x1 - mu1) * jax.lax.rsqrt(var1 + EPS) * g1_ref[...] + be1_ref[...]

    # ---- position-wise FFN (Conv1d k=1 == per-token linear) -> relu -> linear --
    h1 = mm(xn, w1_ref[...]) + b1_ref[...]
    h1 = jnp.maximum(h1, 0.0)
    y = mm(h1, w2_ref[...]) + b2_ref[...]

    # ---- residual + LayerNorm2 -------------------------------------------------
    z = xn + y
    mu2 = jnp.mean(z, axis=-1, keepdims=True)
    var2 = jnp.mean((z - mu2) ** 2, axis=-1, keepdims=True)
    out = (z - mu2) * jax.lax.rsqrt(var2 + EPS) * g2_ref[...] + be2_ref[...]
    out_ref[...] = out.reshape(Bt, Lq, D).astype(out_ref.dtype)


def encoder_layer(x, params, *, n_heads, batch_tile=None, q_tile=None,
                  return_attn=True, attn_dtype=jnp.bfloat16, mxu_dtype=jnp.bfloat16):
    B, L, D = x.shape
    assert D % n_heads == 0
    bt = B if batch_tile is None else batch_tile
    lq = L if q_tile is None else q_tile
    assert B % bt == 0 and L % lq == 0

    # Cast matmul weights to the MXU dtype once on the host side; biases / LN params stay f32.
    mxu_names = {"wq", "wk", "wv", "wo", "w1", "w2"}
    order = ["wq", "bq", "wk", "bk", "wv", "bv", "wo", "bo",
             "g1", "be1", "w1", "b1", "w2", "b2", "g2", "be2"]
    pargs = [params[n].astype(mxu_dtype) if n in mxu_names else params[n].astype(jnp.float32)
             for n in order]

    def full_spec(shape):
        nd = len(shape)
        return pl.BlockSpec(shape, lambda b, qi, _nd=nd: (0,) * _nd)

    in_specs = [
        pl.BlockSpec((bt, lq, D), lambda b, qi: (b, qi, 0)),   # query rows of this tile
        pl.BlockSpec((bt, L, D), lambda b, qi: (b, 0, 0)),     # full sequence (K/V source)
    ] + [full_spec(p.shape) for p in pargs]

    out_spec = pl.BlockSpec((bt, lq, D), lambda b, qi: (b, qi, 0))
    if return_attn:
        out_shape = (
            jax.ShapeDtypeStruct((B, L, D), jnp.float32),
            jax.ShapeDtypeStruct((B, n_heads, L, L), attn_dtype),
        )
        out_specs = [out_spec,
                     pl.BlockSpec((bt, n_heads, lq, L), lambda b, qi: (b, 0, qi, 0))]
    else:
        out_shape = jax.ShapeDtypeStruct((B, L, D), jnp.float32)
        out_specs = out_spec

    kernel = functools.partial(_encoder_layer_kernel, n_heads=n_heads, mxu_dtype=mxu_dtype)

    xf32 = x.astype(jnp.float32)
    result = pl.pallas_call(
        kernel,
        out_shape=out_shape,
        grid_spec=pltpu.PrefetchScalarGridSpec(
            num_scalar_prefetch=0,
            grid=(B // bt, L // lq),
            in_specs=in_specs,
            out_specs=out_specs,
        ),
        compiler_params=pltpu.CompilerParams(
            dimension_semantics=("parallel", "parallel"),
            vmem_limit_bytes=48 * 1024 * 1024,   # safe on v5e/v6e (128 MiB) and v7x (64 MiB)
        ),
    )(xf32, xf32, *pargs)
    return result


def _reference(x, p, n_heads, mxu_dtype=jnp.float32):
    """Pure-JAX reference (eval-mode dropout). mxu_dtype=bf16 mirrors the kernel's
    MXU-operand precision; mxu_dtype=f32 gives the exact module semantics."""
    B, L, D = x.shape
    dh = D // n_heads

    def c(t):
        return t.astype(mxu_dtype)

    def mm(a, b):
        return jnp.dot(c(a), c(b), preferred_element_type=jnp.float32)

    x2 = x.reshape(B * L, D)
    q = (mm(x2, p["wq"]) + p["bq"]).reshape(B, L, D)
    k = (mm(x2, p["wk"]) + p["bk"]).reshape(B, L, D)
    v = (mm(x2, p["wv"]) + p["bv"]).reshape(B, L, D)

    new_x = jnp.zeros((B * L, D), jnp.float32)
    attn_heads = []
    for h in range(n_heads):
        sl = slice(h * dh, (h + 1) * dh)
        s = jnp.einsum("bqd,bkd->bqk", c(q[..., sl]), c(k[..., sl]),
                       preferred_element_type=jnp.float32) / math.sqrt(dh)
        a = jax.nn.softmax(s, axis=-1)
        attn_heads.append(a)
        ctx = jnp.einsum("bqk,bkd->bqd", c(a), c(v[..., sl]),
                         preferred_element_type=jnp.float32)
        new_x = new_x + mm(ctx.reshape(B * L, dh), p["wo"][sl, :])
    attn = jnp.stack(attn_heads, axis=1)                # (B, H, L, L)
    new_x = new_x + p["bo"]

    def ln(z, g, b):
        mu = jnp.mean(z, -1, keepdims=True)
        var = jnp.mean((z - mu) ** 2, -1, keepdims=True)
        return (z - mu) * jax.lax.rsqrt(var + EPS) * g + b

    x1 = ln(x2 + new_x, p["g1"], p["be1"])
    h1 = jnp.maximum(mm(x1, p["w1"]) + p["b1"], 0.0)
    y = mm(h1, p["w2"]) + p["b2"]
    out = ln(x1 + y, p["g2"], p["be2"])
    return out.reshape(B, L, D), attn


if __name__ == "__main__":
    # Small but lane-friendly shapes: D and d_ff are multiples of 128.
    B, L, D, H = 2, 16, 128, 4
    d_ff = 4 * D

    key = jax.random.PRNGKey(0)
    keys = jax.random.split(key, 16)
    sc = 0.1
    params = {
        "wq": sc * jax.random.normal(keys[0], (D, D), jnp.float32),
        "bq": sc * jax.random.normal(keys[1], (1, D), jnp.float32),
        "wk": sc * jax.random.normal(keys[2], (D, D), jnp.float32),
        "bk": sc * jax.random.normal(keys[3], (1, D), jnp.float32),
        "wv": sc * jax.random.normal(keys[4], (D, D), jnp.float32),
        "bv": sc * jax.random.normal(keys[5], (1, D), jnp.float32),
        "wo": sc * jax.random.normal(keys[6], (D, D), jnp.float32),
        "bo": sc * jax.random.normal(keys[7], (1, D), jnp.float32),
        "g1": jnp.ones((1, D), jnp.float32),
        "be1": jnp.zeros((1, D), jnp.float32),
        "w1": sc * jax.random.normal(keys[8], (D, d_ff), jnp.float32),   # conv1 (k=1) as linear
        "b1": sc * jax.random.normal(keys[9], (1, d_ff), jnp.float32),
        "w2": sc * jax.random.normal(keys[10], (d_ff, D), jnp.float32),  # conv2 (k=1) as linear
        "b2": sc * jax.random.normal(keys[11], (1, D), jnp.float32),
        "g2": jnp.ones((1, D), jnp.float32),
        "be2": jnp.zeros((1, D), jnp.float32),
    }
    x = jax.random.normal(keys[12], (B, L, D), jnp.float32)

    # Full path: batch folded into M (bt=B), query axis tiled (lq=8), attn returned in bf16.
    out, attn = encoder_layer(x, params, n_heads=H, batch_tile=B, q_tile=8,
                              return_attn=True)
    out = jax.block_until_ready(out)
    attn = jax.block_until_ready(attn)

    # Precision-matched reference (bf16 MXU operands, f32 accumulation) -> tight check.
    ref_out, ref_attn = _reference(x, params, H, mxu_dtype=jnp.bfloat16)
    assert jnp.allclose(out, ref_out, atol=2e-3, rtol=2e-3), "output mismatch (bf16-matched ref)"
    assert jnp.allclose(attn.astype(jnp.float32), ref_attn, atol=1e-2, rtol=1e-2), \
        "attention mismatch (bf16-matched ref)"

    # Pure-f32 module semantics -> loose sanity check (bf16 MXU inputs only cause small drift).
    f32_out, _ = _reference(x, params, H, mxu_dtype=jnp.float32)
    assert jnp.allclose(out, f32_out, atol=1e-1, rtol=1e-1), "output drifted from f32 semantics"

    # attn-free path (saves the (B,H,L,L) writeback entirely), different tiling for coverage.
    out_noattn = encoder_layer(x, params, n_heads=H, batch_tile=1, q_tile=L,
                               return_attn=False)
    out_noattn = jax.block_until_ready(out_noattn)
    assert jnp.allclose(out_noattn, ref_out, atol=2e-3, rtol=2e-3), "no-attn path mismatch"

    print("KERNEL_OK")
</pallas_src>

<mosaic_0001>
module attributes {stable_mosaic.version = 11 : i64} {
  func.func @_encoder_layer_kernel(%arg0: i32, %arg1: i32, %arg2: memref<2x8x128xf32, #tpu.memory_space<vmem>>, %arg3: memref<2x16x128xf32, #tpu.memory_space<vmem>>, %arg4: memref<128x128xbf16, #tpu.memory_space<vmem>>, %arg5: memref<1x128xf32, #tpu.memory_space<vmem>>, %arg6: memref<128x128xbf16, #tpu.memory_space<vmem>>, %arg7: memref<1x128xf32, #tpu.memory_space<vmem>>, %arg8: memref<128x128xbf16, #tpu.memory_space<vmem>>, %arg9: memref<1x128xf32, #tpu.memory_space<vmem>>, %arg10: memref<128x128xbf16, #tpu.memory_space<vmem>>, %arg11: memref<1x128xf32, #tpu.memory_space<vmem>>, %arg12: memref<1x128xf32, #tpu.memory_space<vmem>>, %arg13: memref<1x128xf32, #tpu.memory_space<vmem>>, %arg14: memref<128x512xbf16, #tpu.memory_space<vmem>>, %arg15: memref<1x512xf32, #tpu.memory_space<vmem>>, %arg16: memref<512x128xbf16, #tpu.memory_space<vmem>>, %arg17: memref<1x128xf32, #tpu.memory_space<vmem>>, %arg18: memref<1x128xf32, #tpu.memory_space<vmem>>, %arg19: memref<1x128xf32, #tpu.memory_space<vmem>>, %arg20: memref<2x8x128xf32, #tpu.memory_space<vmem>>, %arg21: memref<2x4x8x16xbf16, #tpu.memory_space<vmem>>) attributes {dimension_semantics = [#tpu.dimension_semantics<parallel>, #tpu.dimension_semantics<parallel>], iteration_bounds = array<i64: 1, 2>, scalar_prefetch = 0 : i64, scratch_operands = 0 : i64, tpu.core_type = #tpu.core_type<tc>, window_params = [{transform_indices = @transform_0, window_bounds = array<i64: 2, 8, 128>}, {transform_indices = @transform_1, window_bounds = array<i64: 2, 16, 128>}, {pipeline_mode = #tpu.pipeline_mode<synchronous>, transform_indices = @transform_2, window_bounds = array<i64: 128, 128>}, {pipeline_mode = #tpu.pipeline_mode<synchronous>, transform_indices = @transform_3, window_bounds = array<i64: 1, 128>}, {pipeline_mode = #tpu.pipeline_mode<synchronous>, transform_indices = @transform_4, window_bounds = array<i64: 128, 128>}, {pipeline_mode = #tpu.pipeline_mode<synchronous>, transform_indices = @transform_5, window_bounds = array<i64: 1, 128>}, {pipeline_mode = #tpu.pipeline_mode<synchronous>, transform_indices = @transform_6, window_bounds = array<i64: 128, 128>}, {pipeline_mode = #tpu.pipeline_mode<synchronous>, transform_indices = @transform_7, window_bounds = array<i64: 1, 128>}, {pipeline_mode = #tpu.pipeline_mode<synchronous>, transform_indices = @transform_8, window_bounds = array<i64: 128, 128>}, {pipeline_mode = #tpu.pipeline_mode<synchronous>, transform_indices = @transform_9, window_bounds = array<i64: 1, 128>}, {pipeline_mode = #tpu.pipeline_mode<synchronous>, transform_indices = @transform_10, window_bounds = array<i64: 1, 128>}, {pipeline_mode = #tpu.pipeline_mode<synchronous>, transform_indices = @transform_11, window_bounds = array<i64: 1, 128>}, {pipeline_mode = #tpu.pipeline_mode<synchronous>, transform_indices = @transform_12, window_bounds = array<i64: 128, 512>}, {pipeline_mode = #tpu.pipeline_mode<synchronous>, transform_indices = @transform_13, window_bounds = array<i64: 1, 512>}, {pipeline_mode = #tpu.pipeline_mode<synchronous>, transform_indices = @transform_14, window_bounds = array<i64: 512, 128>}, {pipeline_mode = #tpu.pipeline_mode<synchronous>, transform_indices = @transform_15, window_bounds = array<i64: 1, 128>}, {pipeline_mode = #tpu.pipeline_mode<synchronous>, transform_indices = @transform_16, window_bounds = array<i64: 1, 128>}, {pipeline_mode = #tpu.pipeline_mode<synchronous>, transform_indices = @transform_17, window_bounds = array<i64: 1, 128>}, {transform_indices = @transform_18, window_bounds = array<i64: 2, 8, 128>}, {transform_indices = @transform_19, window_bounds = array<i64: 2, 4, 8, 16>}]} {
    %c0 = arith.constant 0 : index
    %c0_0 = arith.constant 0 : index
    %c0_1 = arith.constant 0 : index
    %0 = vector.load %arg2[%c0, %c0_0, %c0_1] : memref<2x8x128xf32, #tpu.memory_space<vmem>>, vector<2x8x128xf32>
    %1 = vector.shape_cast %0 : vector<2x8x128xf32> to vector<16x128xf32>
    %c0_2 = arith.constant 0 : index
    %c0_3 = arith.constant 0 : index
    %c0_4 = arith.constant 0 : index
    %2 = vector.load %arg3[%c0_2, %c0_3, %c0_4] : memref<2x16x128xf32, #tpu.memory_space<vmem>>, vector<2x16x128xf32>
    %3 = vector.shape_cast %2 : vector<2x16x128xf32> to vector<32x128xf32>
    %c0_5 = arith.constant 0 : index
    %c0_6 = arith.constant 0 : index
    %4 = vector.load %arg4[%c0_5, %c0_6] : memref<128x128xbf16, #tpu.memory_space<vmem>>, vector<128x128xbf16>
    %5 = arith.truncf %1 : vector<16x128xf32> to vector<16x128xbf16>
    %cst = arith.constant dense<0.000000e+00> : vector<16x128xf32>
    %6 = tpu.matmul %5, %4, %cst {dimension_numbers = #tpu.dot_dimension_numbers<[1], [0], [0], [1], [0, 0, 1, 1], [], []>} : vector<16x128xbf16>, vector<128x128xbf16>, vector<16x128xf32> -> vector<16x128xf32>
    %c0_7 = arith.constant 0 : index
    %c0_8 = arith.constant 0 : index
    %7 = vector.load %arg5[%c0_7, %c0_8] : memref<1x128xf32, #tpu.memory_space<vmem>>, vector<1x128xf32>
    %8 = vector.broadcast %7 : vector<1x128xf32> to vector<16x128xf32>
    %9 = arith.addf %6, %8 : vector<16x128xf32>
    %c0_9 = arith.constant 0 : index
    %c0_10 = arith.constant 0 : index
    %10 = vector.load %arg6[%c0_9, %c0_10] : memref<128x128xbf16, #tpu.memory_space<vmem>>, vector<128x128xbf16>
    %11 = arith.truncf %3 : vector<32x128xf32> to vector<32x128xbf16>
    %cst_11 = arith.constant dense<0.000000e+00> : vector<32x128xf32>
    %12 = tpu.matmul %11, %10, %cst_11 {dimension_numbers = #tpu.dot_dimension_numbers<[1], [0], [0], [1], [0, 0, 1, 1], [], []>} : vector<32x128xbf16>, vector<128x128xbf16>, vector<32x128xf32> -> vector<32x128xf32>
    %c0_12 = arith.constant 0 : index
    %c0_13 = arith.constant 0 : index
    %13 = vector.load %arg7[%c0_12, %c0_13] : memref<1x128xf32, #tpu.memory_space<vmem>>, vector<1x128xf32>
    %14 = vector.broadcast %13 : vector<1x128xf32> to vector<32x128xf32>
    %15 = arith.addf %12, %14 : vector<32x128xf32>
    %c0_14 = arith.constant 0 : index
    %c0_15 = arith.constant 0 : index
    %16 = vector.load %arg8[%c0_14, %c0_15] : memref<128x128xbf16, #tpu.memory_space<vmem>>, vector<128x128xbf16>
    %17 = arith.truncf %3 : vector<32x128xf32> to vector<32x128xbf16>
    %cst_16 = arith.constant dense<0.000000e+00> : vector<32x128xf32>
    %18 = tpu.matmul %17, %16, %cst_16 {dimension_numbers = #tpu.dot_dimension_numbers<[1], [0], [0], [1], [0, 0, 1, 1], [], []>} : vector<32x128xbf16>, vector<128x128xbf16>, vector<32x128xf32> -> vector<32x128xf32>
    %c0_17 = arith.constant 0 : index
    %c0_18 = arith.constant 0 : index
    %19 = vector.load %arg9[%c0_17, %c0_18] : memref<1x128xf32, #tpu.memory_space<vmem>>, vector<1x128xf32>
    %20 = vector.broadcast %19 : vector<1x128xf32> to vector<32x128xf32>
    %21 = arith.addf %18, %20 : vector<32x128xf32>
    %22 = vector.shape_cast %9 : vector<16x128xf32> to vector<2x8x128xf32>
    %23 = vector.shape_cast %15 : vector<32x128xf32> to vector<2x16x128xf32>
    %24 = vector.shape_cast %21 : vector<32x128xf32> to vector<2x16x128xf32>
    %cst_19 = arith.constant 0.000000e+00 : f32
    %25 = vector.broadcast %cst_19 : f32 to vector<16x128xf32>
    %26 = vector.extract_strided_slice %22 {offsets = [0, 0, 0], sizes = [2, 8, 32], strides = [1, 1, 1]} : vector<2x8x128xf32> to vector<2x8x32xf32>
    %27 = arith.truncf %26 : vector<2x8x32xf32> to vector<2x8x32xbf16>
    %28 = vector.extract_strided_slice %23 {offsets = [0, 0, 0], sizes = [2, 16, 32], strides = [1, 1, 1]} : vector<2x16x128xf32> to vector<2x16x32xf32>
    %29 = arith.truncf %28 : vector<2x16x32xf32> to vector<2x16x32xbf16>
    %30 = vector.extract_strided_slice %24 {offsets = [0, 0, 0], sizes = [2, 16, 32], strides = [1, 1, 1]} : vector<2x16x128xf32> to vector<2x16x32xf32>
    %31 = arith.truncf %30 : vector<2x16x32xf32> to vector<2x16x32xbf16>
    "tpu.trace_start"() <{level = 10 : i32, message = "bqd,bkd->bqk"}> : () -> ()
    %cst_20 = arith.constant dense<0.000000e+00> : vector<2x8x16xf32>
    %32 = tpu.matmul %27, %29, %cst_20 {dimension_numbers = #tpu.dot_dimension_numbers<[2], [2], [1], [1], [0, 0, 0, 1, 1, 1], [0], [0]>} : vector<2x8x32xbf16>, vector<2x16x32xbf16>, vector<2x8x16xf32> -> vector<2x8x16xf32>
    "tpu.trace_stop"() : () -> ()
    %cst_21 = arith.constant 0.176776692 : f32
    %33 = vector.broadcast %cst_21 : f32 to vector<2x8x16xf32>
    %34 = arith.mulf %32, %33 : vector<2x8x16xf32>
    %cst_22 = arith.constant dense<0xFF800000> : vector<2x8xf32>
    %35 = vector.multi_reduction <maximumf>, %34, %cst_22 [2] : vector<2x8x16xf32> to vector<2x8xf32>
    %36 = vector.shape_cast %35 : vector<2x8xf32> to vector<2x8x1xf32>
    %37 = vector.broadcast %36 : vector<2x8x1xf32> to vector<2x8x16xf32>
    %38 = arith.subf %34, %37 : vector<2x8x16xf32>
    %39 = math.exp %38 : vector<2x8x16xf32>
    %cst_23 = arith.constant dense<0.000000e+00> : vector<2x8xf32>
    %40 = vector.multi_reduction <add>, %39, %cst_23 [2] : vector<2x8x16xf32> to vector<2x8xf32>
    %41 = vector.shape_cast %40 : vector<2x8xf32> to vector<2x8x1xf32>
    %42 = tpu.reciprocal %41 {approx = true} : vector<2x8x1xf32> -> vector<2x8x1xf32>
    %43 = arith.mulf %41, %42 : vector<2x8x1xf32>
    %cst_24 = arith.constant 2.000000e+00 : f32
    %44 = vector.broadcast %cst_24 : f32 to vector<2x8x1xf32>
    %45 = arith.subf %44, %43 : vector<2x8x1xf32>
    %46 = arith.mulf %42, %45 : vector<2x8x1xf32>
    %47 = vector.broadcast %46 : vector<2x8x1xf32> to vector<2x8x16xf32>
    %48 = arith.mulf %39, %47 : vector<2x8x16xf32>
    %49 = vector.extract_strided_slice %48 {offsets = [0, 0, 0], sizes = [1, 8, 16], strides = [1, 1, 1]} : vector<2x8x16xf32> to vector<1x8x16xf32>
    %50 = vector.shape_cast %49 : vector<1x8x16xf32> to vector<8x16xf32>
    %51 = arith.truncf %50 : vector<8x16xf32> to vector<8x16xbf16>
    %c0_25 = arith.constant 0 : index
    %c0_26 = arith.constant 0 : index
    %c0_27 = arith.constant 0 : index
    %c0_28 = arith.constant 0 : index
    %52 = vector.load %arg21[%c0_25, %c0_26, %c0_27, %c0_28] : memref<2x4x8x16xbf16, #tpu.memory_space<vmem>>, vector<1x1x8x16xbf16>
    %53 = vector.shape_cast %52 : vector<1x1x8x16xbf16> to vector<8x16xbf16>
    %54 = vector.shape_cast %51 : vector<8x16xbf16> to vector<1x1x8x16xbf16>
    tpu.vector_store %arg21[%c0_25, %c0_26, %c0_27, %c0_28], %54 {strides = array<i32>} : memref<2x4x8x16xbf16, #tpu.memory_space<vmem>>, vector<1x1x8x16xbf16>,
    %55 = vector.extract_strided_slice %48 {offsets = [1, 0, 0], sizes = [1, 8, 16], strides = [1, 1, 1]} : vector<2x8x16xf32> to vector<1x8x16xf32>
    %56 = vector.shape_cast %55 : vector<1x8x16xf32> to vector<8x16xf32>
    %57 = arith.truncf %56 : vector<8x16xf32> to vector<8x16xbf16>
    %c1 = arith.constant 1 : index
    %c0_29 = arith.constant 0 : index
    %c0_30 = arith.constant 0 : index
    %c0_31 = arith.constant 0 : index
    %58 = vector.load %arg21[%c1, %c0_29, %c0_30, %c0_31] : memref<2x4x8x16xbf16, #tpu.memory_space<vmem>>, vector<1x1x8x16xbf16>
    %59 = vector.shape_cast %58 : vector<1x1x8x16xbf16> to vector<8x16xbf16>
    %60 = vector.shape_cast %57 : vector<8x16xbf16> to vector<1x1x8x16xbf16>
    tpu.vector_store %arg21[%c1, %c0_29, %c0_30, %c0_31], %60 {strides = array<i32>} : memref<2x4x8x16xbf16, #tpu.memory_space<vmem>>, vector<1x1x8x16xbf16>,
    %61 = arith.truncf %48 : vector<2x8x16xf32> to vector<2x8x16xbf16>
    "tpu.trace_start"() <{level = 10 : i32, message = "bqk,bkd->bqd"}> : () -> ()
    %cst_32 = arith.constant dense<0.000000e+00> : vector<2x8x32xf32>
    %62 = tpu.matmul %61, %31, %cst_32 {dimension_numbers = #tpu.dot_dimension_numbers<[2], [1], [1], [2], [0, 0, 0, 1, 1, 2], [0], [0]>} : vector<2x8x16xbf16>, vector<2x16x32xbf16>, vector<2x8x32xf32> -> vector<2x8x32xf32>
    "tpu.trace_stop"() : () -> ()
    %63 = vector.shape_cast %62 : vector<2x8x32xf32> to vector<16x32xf32>
    %c0_33 = arith.constant 0 : index
    %c0_34 = arith.constant 0 : index
    %64 = vector.load %arg10[%c0_33, %c0_34] : memref<128x128xbf16, #tpu.memory_space<vmem>>, vector<32x128xbf16>
    %65 = arith.truncf %63 : vector<16x32xf32> to vector<16x32xbf16>
    %cst_35 = arith.constant dense<0.000000e+00> : vector<16x128xf32>
    %66 = tpu.matmul %65, %64, %cst_35 {dimension_numbers = #tpu.dot_dimension_numbers<[1], [0], [0], [1], [0, 0, 1, 1], [], []>} : vector<16x32xbf16>, vector<32x128xbf16>, vector<16x128xf32> -> vector<16x128xf32>
    %67 = arith.addf %25, %66 : vector<16x128xf32>
    %68 = vector.extract_strided_slice %22 {offsets = [0, 0, 32], sizes = [2, 8, 32], strides = [1, 1, 1]} : vector<2x8x128xf32> to vector<2x8x32xf32>
    %69 = arith.truncf %68 : vector<2x8x32xf32> to vector<2x8x32xbf16>
    %70 = vector.extract_strided_slice %23 {offsets = [0, 0, 32], sizes = [2, 16, 32], strides = [1, 1, 1]} : vector<2x16x128xf32> to vector<2x16x32xf32>
    %71 = arith.truncf %70 : vector<2x16x32xf32> to vector<2x16x32xbf16>
    %72 = vector.extract_strided_slice %24 {offsets = [0, 0, 32], sizes = [2, 16, 32], strides = [1, 1, 1]} : vector<2x16x128xf32> to vector<2x16x32xf32>
    %73 = arith.truncf %72 : vector<2x16x32xf32> to vector<2x16x32xbf16>
    "tpu.trace_start"() <{level = 10 : i32, message = "bqd,bkd->bqk"}> : () -> ()
    %cst_36 = arith.constant dense<0.000000e+00> : vector<2x8x16xf32>
    %74 = tpu.matmul %69, %71, %cst_36 {dimension_numbers = #tpu.dot_dimension_numbers<[2], [2], [1], [1], [0, 0, 0, 1, 1, 1], [0], [0]>} : vector<2x8x32xbf16>, vector<2x16x32xbf16>, vector<2x8x16xf32> -> vector<2x8x16xf32>
    "tpu.trace_stop"() : () -> ()
    %cst_37 = arith.constant 0.176776692 : f32
    %75 = vector.broadcast %cst_37 : f32 to vector<2x8x16xf32>
    %76 = arith.mulf %74, %75 : vector<2x8x16xf32>
    %cst_38 = arith.constant dense<0xFF800000> : vector<2x8xf32>
    %77 = vector.multi_reduction <maximumf>, %76, %cst_38 [2] : vector<2x8x16xf32> to vector<2x8xf32>
    %78 = vector.shape_cast %77 : vector<2x8xf32> to vector<2x8x1xf32>
    %79 = vector.broadcast %78 : vector<2x8x1xf32> to vector<2x8x16xf32>
    %80 = arith.subf %76, %79 : vector<2x8x16xf32>
    %81 = math.exp %80 : vector<2x8x16xf32>
    %cst_39 = arith.constant dense<0.000000e+00> : vector<2x8xf32>
    %82 = vector.multi_reduction <add>, %81, %cst_39 [2] : vector<2x8x16xf32> to vector<2x8xf32>
    %83 = vector.shape_cast %82 : vector<2x8xf32> to vector<2x8x1xf32>
    %84 = tpu.reciprocal %83 {approx = true} : vector<2x8x1xf32> -> vector<2x8x1xf32>
    %85 = arith.mulf %83, %84 : vector<2x8x1xf32>
    %cst_40 = arith.constant 2.000000e+00 : f32
    %86 = vector.broadcast %cst_40 : f32 to vector<2x8x1xf32>
    %87 = arith.subf %86, %85 : vector<2x8x1xf32>
    %88 = arith.mulf %84, %87 : vector<2x8x1xf32>
    %89 = vector.broadcast %88 : vector<2x8x1xf32> to vector<2x8x16xf32>
    %90 = arith.mulf %81, %89 : vector<2x8x16xf32>
    %91 = vector.extract_strided_slice %90 {offsets = [0, 0, 0], sizes = [1, 8, 16], strides = [1, 1, 1]} : vector<2x8x16xf32> to vector<1x8x16xf32>
    %92 = vector.shape_cast %91 : vector<1x8x16xf32> to vector<8x16xf32>
    %93 = arith.truncf %92 : vector<8x16xf32> to vector<8x16xbf16>
    %c0_41 = arith.constant 0 : index
    %c1_42 = arith.constant 1 : index
    %c0_43 = arith.constant 0 : index
    %c0_44 = arith.constant 0 : index
    %94 = vector.load %arg21[%c0_41, %c1_42, %c0_43, %c0_44] : memref<2x4x8x16xbf16, #tpu.memory_space<vmem>>, vector<1x1x8x16xbf16>
    %95 = vector.shape_cast %94 : vector<1x1x8x16xbf16> to vector<8x16xbf16>
    %96 = vector.shape_cast %93 : vector<8x16xbf16> to vector<1x1x8x16xbf16>
    tpu.vector_store %arg21[%c0_41, %c1_42, %c0_43, %c0_44], %96 {strides = array<i32>} : memref<2x4x8x16xbf16, #tpu.memory_space<vmem>>, vector<1x1x8x16xbf16>,
    %97 = vector.extract_strided_slice %90 {offsets = [1, 0, 0], sizes = [1, 8, 16], strides = [1, 1, 1]} : vector<2x8x16xf32> to vector<1x8x16xf32>
    %98 = vector.shape_cast %97 : vector<1x8x16xf32> to vector<8x16xf32>
    %99 = arith.truncf %98 : vector<8x16xf32> to vector<8x16xbf16>
    %c1_45 = arith.constant 1 : index
    %c1_46 = arith.constant 1 : index
    %c0_47 = arith.constant 0 : index
    %c0_48 = arith.constant 0 : index
    %100 = vector.load %arg21[%c1_45, %c1_46, %c0_47, %c0_48] : memref<2x4x8x16xbf16, #tpu.memory_space<vmem>>, vector<1x1x8x16xbf16>
    %101 = vector.shape_cast %100 : vector<1x1x8x16xbf16> to vector<8x16xbf16>
    %102 = vector.shape_cast %99 : vector<8x16xbf16> to vector<1x1x8x16xbf16>
    tpu.vector_store %arg21[%c1_45, %c1_46, %c0_47, %c0_48], %102 {strides = array<i32>} : memref<2x4x8x16xbf16, #tpu.memory_space<vmem>>, vector<1x1x8x16xbf16>,
    %103 = arith.truncf %90 : vector<2x8x16xf32> to vector<2x8x16xbf16>
    "tpu.trace_start"() <{level = 10 : i32, message = "bqk,bkd->bqd"}> : () -> ()
    %cst_49 = arith.constant dense<0.000000e+00> : vector<2x8x32xf32>
    %104 = tpu.matmul %103, %73, %cst_49 {dimension_numbers = #tpu.dot_dimension_numbers<[2], [1], [1], [2], [0, 0, 0, 1, 1, 2], [0], [0]>} : vector<2x8x16xbf16>, vector<2x16x32xbf16>, vector<2x8x32xf32> -> vector<2x8x32xf32>
    "tpu.trace_stop"() : () -> ()
    %105 = vector.shape_cast %104 : vector<2x8x32xf32> to vector<16x32xf32>
    %c32 = arith.constant 32 : index
    %c0_50 = arith.constant 0 : index
    %106 = vector.load %arg10[%c32, %c0_50] : memref<128x128xbf16, #tpu.memory_space<vmem>>, vector<32x128xbf16>
    %107 = arith.truncf %105 : vector<16x32xf32> to vector<16x32xbf16>
    %cst_51 = arith.constant dense<0.000000e+00> : vector<16x128xf32>
    %108 = tpu.matmul %107, %106, %cst_51 {dimension_numbers = #tpu.dot_dimension_numbers<[1], [0], [0], [1], [0, 0, 1, 1], [], []>} : vector<16x32xbf16>, vector<32x128xbf16>, vector<16x128xf32> -> vector<16x128xf32>
    %109 = arith.addf %67, %108 : vector<16x128xf32>
    %110 = vector.extract_strided_slice %22 {offsets = [0, 0, 64], sizes = [2, 8, 32], strides = [1, 1, 1]} : vector<2x8x128xf32> to vector<2x8x32xf32>
    %111 = arith.truncf %110 : vector<2x8x32xf32> to vector<2x8x32xbf16>
    %112 = vector.extract_strided_slice %23 {offsets = [0, 0, 64], sizes = [2, 16, 32], strides = [1, 1, 1]} : vector<2x16x128xf32> to vector<2x16x32xf32>
    %113 = arith.truncf %112 : vector<2x16x32xf32> to vector<2x16x32xbf16>
    %114 = vector.extract_strided_slice %24 {offsets = [0, 0, 64], sizes = [2, 16, 32], strides = [1, 1, 1]} : vector<2x16x128xf32> to vector<2x16x32xf32>
    %115 = arith.truncf %114 : vector<2x16x32xf32> to vector<2x16x32xbf16>
    "tpu.trace_start"() <{level = 10 : i32, message = "bqd,bkd->bqk"}> : () -> ()
    %cst_52 = arith.constant dense<0.000000e+00> : vector<2x8x16xf32>
    %116 = tpu.matmul %111, %113, %cst_52 {dimension_numbers = #tpu.dot_dimension_numbers<[2], [2], [1], [1], [0, 0, 0, 1, 1, 1], [0], [0]>} : vector<2x8x32xbf16>, vector<2x16x32xbf16>, vector<2x8x16xf32> -> vector<2x8x16xf32>
    "tpu.trace_stop"() : () -> ()
    %cst_53 = arith.constant 0.176776692 : f32
    %117 = vector.broadcast %cst_53 : f32 to vector<2x8x16xf32>
    %118 = arith.mulf %116, %117 : vector<2x8x16xf32>
    %cst_54 = arith.constant dense<0xFF800000> : vector<2x8xf32>
    %119 = vector.multi_reduction <maximumf>, %118, %cst_54 [2] : vector<2x8x16xf32> to vector<2x8xf32>
    %120 = vector.shape_cast %119 : vector<2x8xf32> to vector<2x8x1xf32>
    %121 = vector.broadcast %120 : vector<2x8x1xf32> to vector<2x8x16xf32>
    %122 = arith.subf %118, %121 : vector<2x8x16xf32>
    %123 = math.exp %122 : vector<2x8x16xf32>
    %cst_55 = arith.constant dense<0.000000e+00> : vector<2x8xf32>
    %124 = vector.multi_reduction <add>, %123, %cst_55 [2] : vector<2x8x16xf32> to vector<2x8xf32>
    %125 = vector.shape_cast %124 : vector<2x8xf32> to vector<2x8x1xf32>
    %126 = tpu.reciprocal %125 {approx = true} : vector<2x8x1xf32> -> vector<2x8x1xf32>
    %127 = arith.mulf %125, %126 : vector<2x8x1xf32>
    %cst_56 = arith.constant 2.000000e+00 : f32
    %128 = vector.broadcast %cst_56 : f32 to vector<2x8x1xf32>
    %129 = arith.subf %128, %127 : vector<2x8x1xf32>
    %130 = arith.mulf %126, %129 : vector<2x8x1xf32>
    %131 = vector.broadcast %130 : vector<2x8x1xf32> to vector<2x8x16xf32>
    %132 = arith.mulf %123, %131 : vector<2x8x16xf32>
    %133 = vector.extract_strided_slice %132 {offsets = [0, 0, 0], sizes = [1, 8, 16], strides = [1, 1, 1]} : vector<2x8x16xf32> to vector<1x8x16xf32>
    %134 = vector.shape_cast %133 : vector<1x8x16xf32> to vector<8x16xf32>
    %135 = arith.truncf %134 : vector<8x16xf32> to vector<8x16xbf16>
    %c0_57 = arith.constant 0 : index
    %c2 = arith.constant 2 : index
    %c0_58 = arith.constant 0 : index
    %c0_59 = arith.constant 0 : index
    %136 = vector.load %arg21[%c0_57, %c2, %c0_58, %c0_59] : memref<2x4x8x16xbf16, #tpu.memory_space<vmem>>, vector<1x1x8x16xbf16>
    %137 = vector.shape_cast %136 : vector<1x1x8x16xbf16> to vector<8x16xbf16>
    %138 = vector.shape_cast %135 : vector<8x16xbf16> to vector<1x1x8x16xbf16>
    tpu.vector_store %arg21[%c0_57, %c2, %c0_58, %c0_59], %138 {strides = array<i32>} : memref<2x4x8x16xbf16, #tpu.memory_space<vmem>>, vector<1x1x8x16xbf16>,
    %139 = vector.extract_strided_slice %132 {offsets = [1, 0, 0], sizes = [1, 8, 16], strides = [1, 1, 1]} : vector<2x8x16xf32> to vector<1x8x16xf32>
    %140 = vector.shape_cast %139 : vector<1x8x16xf32> to vector<8x16xf32>
    %141 = arith.truncf %140 : vector<8x16xf32> to vector<8x16xbf16>
    %c1_60 = arith.constant 1 : index
    %c2_61 = arith.constant 2 : index
    %c0_62 = arith.constant 0 : index
    %c0_63 = arith.constant 0 : index
    %142 = vector.load %arg21[%c1_60, %c2_61, %c0_62, %c0_63] : memref<2x4x8x16xbf16, #tpu.memory_space<vmem>>, vector<1x1x8x16xbf16>
    %143 = vector.shape_cast %142 : vector<1x1x8x16xbf16> to vector<8x16xbf16>
    %144 = vector.shape_cast %141 : vector<8x16xbf16> to vector<1x1x8x16xbf16>
    tpu.vector_store %arg21[%c1_60, %c2_61, %c0_62, %c0_63], %144 {strides = array<i32>} : memref<2x4x8x16xbf16, #tpu.memory_space<vmem>>, vector<1x1x8x16xbf16>,
    %145 = arith.truncf %132 : vector<2x8x16xf32> to vector<2x8x16xbf16>
    "tpu.trace_start"() <{level = 10 : i32, message = "bqk,bkd->bqd"}> : () -> ()
    %cst_64 = arith.constant dense<0.000000e+00> : vector<2x8x32xf32>
    %146 = tpu.matmul %145, %115, %cst_64 {dimension_numbers = #tpu.dot_dimension_numbers<[2], [1], [1], [2], [0, 0, 0, 1, 1, 2], [0], [0]>} : vector<2x8x16xbf16>, vector<2x16x32xbf16>, vector<2x8x32xf32> -> vector<2x8x32xf32>
    "tpu.trace_stop"() : () -> ()
    %147 = vector.shape_cast %146 : vector<2x8x32xf32> to vector<16x32xf32>
    %c64 = arith.constant 64 : index
    %c0_65 = arith.constant 0 : index
    %148 = vector.load %arg10[%c64, %c0_65] : memref<128x128xbf16, #tpu.memory_space<vmem>>, vector<32x128xbf16>
    %149 = arith.truncf %147 : vector<16x32xf32> to vector<16x32xbf16>
    %cst_66 = arith.constant dense<0.000000e+00> : vector<16x128xf32>
    %150 = tpu.matmul %149, %148, %cst_66 {dimension_numbers = #tpu.dot_dimension_numbers<[1], [0], [0], [1], [0, 0, 1, 1], [], []>} : vector<16x32xbf16>, vector<32x128xbf16>, vector<16x128xf32> -> vector<16x128xf32>
    %151 = arith.addf %109, %150 : vector<16x128xf32>
    %152 = vector.extract_strided_slice %22 {offsets = [0, 0, 96], sizes = [2, 8, 32], strides = [1, 1, 1]} : vector<2x8x128xf32> to vector<2x8x32xf32>
    %153 = arith.truncf %152 : vector<2x8x32xf32> to vector<2x8x32xbf16>
    %154 = vector.extract_strided_slice %23 {offsets = [0, 0, 96], sizes = [2, 16, 32], strides = [1, 1, 1]} : vector<2x16x128xf32> to vector<2x16x32xf32>
    %155 = arith.truncf %154 : vector<2x16x32xf32> to vector<2x16x32xbf16>
    %156 = vector.extract_strided_slice %24 {offsets = [0, 0, 96], sizes = [2, 16, 32], strides = [1, 1, 1]} : vector<2x16x128xf32> to vector<2x16x32xf32>
    %157 = arith.truncf %156 : vector<2x16x32xf32> to vector<2x16x32xbf16>
    "tpu.trace_start"() <{level = 10 : i32, message = "bqd,bkd->bqk"}> : () -> ()
    %cst_67 = arith.constant dense<0.000000e+00> : vector<2x8x16xf32>
    %158 = tpu.matmul %153, %155, %cst_67 {dimension_numbers = #tpu.dot_dimension_numbers<[2], [2], [1], [1], [0, 0, 0, 1, 1, 1], [0], [0]>} : vector<2x8x32xbf16>, vector<2x16x32xbf16>, vector<2x8x16xf32> -> vector<2x8x16xf32>
    "tpu.trace_stop"() : () -> ()
    %cst_68 = arith.constant 0.176776692 : f32
    %159 = vector.broadcast %cst_68 : f32 to vector<2x8x16xf32>
    %160 = arith.mulf %158, %159 : vector<2x8x16xf32>
    %cst_69 = arith.constant dense<0xFF800000> : vector<2x8xf32>
    %161 = vector.multi_reduction <maximumf>, %160, %cst_69 [2] : vector<2x8x16xf32> to vector<2x8xf32>
    %162 = vector.shape_cast %161 : vector<2x8xf32> to vector<2x8x1xf32>
    %163 = vector.broadcast %162 : vector<2x8x1xf32> to vector<2x8x16xf32>
    %164 = arith.subf %160, %163 : vector<2x8x16xf32>
    %165 = math.exp %164 : vector<2x8x16xf32>
    %cst_70 = arith.constant dense<0.000000e+00> : vector<2x8xf32>
    %166 = vector.multi_reduction <add>, %165, %cst_70 [2] : vector<2x8x16xf32> to vector<2x8xf32>
    %167 = vector.shape_cast %166 : vector<2x8xf32> to vector<2x8x1xf32>
    %168 = tpu.reciprocal %167 {approx = true} : vector<2x8x1xf32> -> vector<2x8x1xf32>
    %169 = arith.mulf %167, %168 : vector<2x8x1xf32>
    %cst_71 = arith.constant 2.000000e+00 : f32
    %170 = vector.broadcast %cst_71 : f32 to vector<2x8x1xf32>
    %171 = arith.subf %170, %169 : vector<2x8x1xf32>
    %172 = arith.mulf %168, %171 : vector<2x8x1xf32>
    %173 = vector.broadcast %172 : vector<2x8x1xf32> to vector<2x8x16xf32>
    %174 = arith.mulf %165, %173 : vector<2x8x16xf32>
    %175 = vector.extract_strided_slice %174 {offsets = [0, 0, 0], sizes = [1, 8, 16], strides = [1, 1, 1]} : vector<2x8x16xf32> to vector<1x8x16xf32>
    %176 = vector.shape_cast %175 : vector<1x8x16xf32> to vector<8x16xf32>
    %177 = arith.truncf %176 : vector<8x16xf32> to vector<8x16xbf16>
    %c0_72 = arith.constant 0 : index
    %c3 = arith.constant 3 : index
    %c0_73 = arith.constant 0 : index
    %c0_74 = arith.constant 0 : index
    %178 = vector.load %arg21[%c0_72, %c3, %c0_73, %c0_74] : memref<2x4x8x16xbf16, #tpu.memory_space<vmem>>, vector<1x1x8x16xbf16>
    %179 = vector.shape_cast %178 : vector<1x1x8x16xbf16> to vector<8x16xbf16>
    %180 = vector.shape_cast %177 : vector<8x16xbf16> to vector<1x1x8x16xbf16>
    tpu.vector_store %arg21[%c0_72, %c3, %c0_73, %c0_74], %180 {strides = array<i32>} : memref<2x4x8x16xbf16, #tpu.memory_space<vmem>>, vector<1x1x8x16xbf16>,
    %181 = vector.extract_strided_slice %174 {offsets = [1, 0, 0], sizes = [1, 8, 16], strides = [1, 1, 1]} : vector<2x8x16xf32> to vector<1x8x16xf32>
    %182 = vector.shape_cast %181 : vector<1x8x16xf32> to vector<8x16xf32>
    %183 = arith.truncf %182 : vector<8x16xf32> to vector<8x16xbf16>
    %c1_75 = arith.constant 1 : index
    %c3_76 = arith.constant 3 : index
    %c0_77 = arith.constant 0 : index
    %c0_78 = arith.constant 0 : index
    %184 = vector.load %arg21[%c1_75, %c3_76, %c0_77, %c0_78] : memref<2x4x8x16xbf16, #tpu.memory_space<vmem>>, vector<1x1x8x16xbf16>
    %185 = vector.shape_cast %184 : vector<1x1x8x16xbf16> to vector<8x16xbf16>
    %186 = vector.shape_cast %183 : vector<8x16xbf16> to vector<1x1x8x16xbf16>
    tpu.vector_store %arg21[%c1_75, %c3_76, %c0_77, %c0_78], %186 {strides = array<i32>} : memref<2x4x8x16xbf16, #tpu.memory_space<vmem>>, vector<1x1x8x16xbf16>,
    %187 = arith.truncf %174 : vector<2x8x16xf32> to vector<2x8x16xbf16>
    "tpu.trace_start"() <{level = 10 : i32, message = "bqk,bkd->bqd"}> : () -> ()
    %cst_79 = arith.constant dense<0.000000e+00> : vector<2x8x32xf32>
    %188 = tpu.matmul %187, %157, %cst_79 {dimension_numbers = #tpu.dot_dimension_numbers<[2], [1], [1], [2], [0, 0, 0, 1, 1, 2], [0], [0]>} : vector<2x8x16xbf16>, vector<2x16x32xbf16>, vector<2x8x32xf32> -> vector<2x8x32xf32>
    "tpu.trace_stop"() : () -> ()
    %189 = vector.shape_cast %188 : vector<2x8x32xf32> to vector<16x32xf32>
    %c96 = arith.constant 96 : index
    %c0_80 = arith.constant 0 : index
    %190 = vector.load %arg10[%c96, %c0_80] : memref<128x128xbf16, #tpu.memory_space<vmem>>, vector<32x128xbf16>
    %191 = arith.truncf %189 : vector<16x32xf32> to vector<16x32xbf16>
    %cst_81 = arith.constant dense<0.000000e+00> : vector<16x128xf32>
    %192 = tpu.matmul %191, %190, %cst_81 {dimension_numbers = #tpu.dot_dimension_numbers<[1], [0], [0], [1], [0, 0, 1, 1], [], []>} : vector<16x32xbf16>, vector<32x128xbf16>, vector<16x128xf32> -> vector<16x128xf32>
    %193 = arith.addf %151, %192 : vector<16x128xf32>
    %c0_82 = arith.constant 0 : index
    %c0_83 = arith.constant 0 : index
    %194 = vector.load %arg11[%c0_82, %c0_83] : memref<1x128xf32, #tpu.memory_space<vmem>>, vector<1x128xf32>
    %195 = vector.broadcast %194 : vector<1x128xf32> to vector<16x128xf32>
    %196 = arith.addf %193, %195 : vector<16x128xf32>
    %197 = arith.addf %1, %196 : vector<16x128xf32>
    %cst_84 = arith.constant dense<0.000000e+00> : vector<16xf32>
    %198 = vector.multi_reduction <add>, %197, %cst_84 [1] : vector<16x128xf32> to vector<16xf32>
    %199 = vector.shape_cast %198 : vector<16xf32> to vector<16x1xf32>
    %cst_85 = arith.constant 1.280000e+02 : f32
    %200 = vector.broadcast %cst_85 : f32 to vector<16x1xf32>
    %201 = arith.divf %199, %200 : vector<16x1xf32>
    %202 = vector.broadcast %201 : vector<16x1xf32> to vector<16x128xf32>
    %203 = arith.subf %197, %202 : vector<16x128xf32>
    %204 = arith.mulf %203, %203 : vector<16x128xf32>
    %cst_86 = arith.constant dense<0.000000e+00> : vector<16xf32>
    %205 = vector.multi_reduction <add>, %204, %cst_86 [1] : vector<16x128xf32> to vector<16xf32>
    %206 = vector.shape_cast %205 : vector<16xf32> to vector<16x1xf32>
    %cst_87 = arith.constant 1.280000e+02 : f32
    %207 = vector.broadcast %cst_87 : f32 to vector<16x1xf32>
    %208 = arith.divf %206, %207 : vector<16x1xf32>
    %209 = vector.broadcast %201 : vector<16x1xf32> to vector<16x128xf32>
    %210 = arith.subf %197, %209 : vector<16x128xf32>
    %cst_88 = arith.constant 9.99999974E-6 : f32
    %211 = vector.broadcast %cst_88 : f32 to vector<16x1xf32>
    %212 = arith.addf %208, %211 : vector<16x1xf32>
    %213 = math.rsqrt %212 : vector<16x1xf32>
    %214 = vector.broadcast %213 : vector<16x1xf32> to vector<16x128xf32>
    %215 = arith.mulf %210, %214 : vector<16x128xf32>
    %c0_89 = arith.constant 0 : index
    %c0_90 = arith.constant 0 : index
    %216 = vector.load %arg12[%c0_89, %c0_90] : memref<1x128xf32, #tpu.memory_space<vmem>>, vector<1x128xf32>
    %217 = vector.broadcast %216 : vector<1x128xf32> to vector<16x128xf32>
    %218 = arith.mulf %215, %217 : vector<16x128xf32>
    %c0_91 = arith.constant 0 : index
    %c0_92 = arith.constant 0 : index
    %219 = vector.load %arg13[%c0_91, %c0_92] : memref<1x128xf32, #tpu.memory_space<vmem>>, vector<1x128xf32>
    %220 = vector.broadcast %219 : vector<1x128xf32> to vector<16x128xf32>
    %221 = arith.addf %218, %220 : vector<16x128xf32>
    %c0_93 = arith.constant 0 : index
    %c0_94 = arith.constant 0 : index
    %222 = vector.load %arg14[%c0_93, %c0_94] : memref<128x512xbf16, #tpu.memory_space<vmem>>, vector<128x512xbf16>
    %223 = arith.truncf %221 : vector<16x128xf32> to vector<16x128xbf16>
    %cst_95 = arith.constant dense<0.000000e+00> : vector<16x512xf32>
    %224 = tpu.matmul %223, %222, %cst_95 {dimension_numbers = #tpu.dot_dimension_numbers<[1], [0], [0], [1], [0, 0, 1, 1], [], []>} : vector<16x128xbf16>, vector<128x512xbf16>, vector<16x512xf32> -> vector<16x512xf32>
    %c0_96 = arith.constant 0 : index
    %c0_97 = arith.constant 0 : index
    %225 = vector.load %arg15[%c0_96, %c0_97] : memref<1x512xf32, #tpu.memory_space<vmem>>, vector<1x512xf32>
    %226 = vector.broadcast %225 : vector<1x512xf32> to vector<16x512xf32>
    %227 = arith.addf %224, %226 : vector<16x512xf32>
    %cst_98 = arith.constant 0.000000e+00 : f32
    %228 = vector.broadcast %cst_98 : f32 to vector<16x512xf32>
    %229 = arith.maximumf %227, %228 : vector<16x512xf32>
    %c0_99 = arith.constant 0 : index
    %c0_100 = arith.constant 0 : index
    %230 = vector.load %arg16[%c0_99, %c0_100] : memref<512x128xbf16, #tpu.memory_space<vmem>>, vector<512x128xbf16>
    %231 = arith.truncf %229 : vector<16x512xf32> to vector<16x512xbf16>
    %cst_101 = arith.constant dense<0.000000e+00> : vector<16x128xf32>
    %232 = tpu.matmul %231, %230, %cst_101 {dimension_numbers = #tpu.dot_dimension_numbers<[1], [0], [0], [1], [0, 0, 1, 1], [], []>} : vector<16x512xbf16>, vector<512x128xbf16>, vector<16x128xf32> -> vector<16x128xf32>
    %c0_102 = arith.constant 0 : index
    %c0_103 = arith.constant 0 : index
    %233 = vector.load %arg17[%c0_102, %c0_103] : memref<1x128xf32, #tpu.memory_space<vmem>>, vector<1x128xf32>
    %234 = vector.broadcast %233 : vector<1x128xf32> to vector<16x128xf32>
    %235 = arith.addf %232, %234 : vector<16x128xf32>
    %236 = arith.addf %221, %235 : vector<16x128xf32>
    %cst_104 = arith.constant dense<0.000000e+00> : vector<16xf32>
    %237 = vector.multi_reduction <add>, %236, %cst_104 [1] : vector<16x128xf32> to vector<16xf32>
    %238 = vector.shape_cast %237 : vector<16xf32> to vector<16x1xf32>
    %cst_105 = arith.constant 1.280000e+02 : f32
    %239 = vector.broadcast %cst_105 : f32 to vector<16x1xf32>
    %240 = arith.divf %238, %239 : vector<16x1xf32>
    %241 = vector.broadcast %240 : vector<16x1xf32> to vector<16x128xf32>
    %242 = arith.subf %236, %241 : vector<16x128xf32>
    %243 = arith.mulf %242, %242 : vector<16x128xf32>
    %cst_106 = arith.constant dense<0.000000e+00> : vector<16xf32>
    %244 = vector.multi_reduction <add>, %243, %cst_106 [1] : vector<16x128xf32> to vector<16xf32>
    %245 = vector.shape_cast %244 : vector<16xf32> to vector<16x1xf32>
    %cst_107 = arith.constant 1.280000e+02 : f32
    %246 = vector.broadcast %cst_107 : f32 to vector<16x1xf32>
    %247 = arith.divf %245, %246 : vector<16x1xf32>
    %248 = vector.broadcast %240 : vector<16x1xf32> to vector<16x128xf32>
    %249 = arith.subf %236, %248 : vector<16x128xf32>
    %cst_108 = arith.constant 9.99999974E-6 : f32
    %250 = vector.broadcast %cst_108 : f32 to vector<16x1xf32>
    %251 = arith.addf %247, %250 : vector<16x1xf32>
    %252 = math.rsqrt %251 : vector<16x1xf32>
    %253 = vector.broadcast %252 : vector<16x1xf32> to vector<16x128xf32>
    %254 = arith.mulf %249, %253 : vector<16x128xf32>
    %c0_109 = arith.constant 0 : index
    %c0_110 = arith.constant 0 : index
    %255 = vector.load %arg18[%c0_109, %c0_110] : memref<1x128xf32, #tpu.memory_space<vmem>>, vector<1x128xf32>
    %256 = vector.broadcast %255 : vector<1x128xf32> to vector<16x128xf32>
    %257 = arith.mulf %254, %256 : vector<16x128xf32>
    %c0_111 = arith.constant 0 : index
    %c0_112 = arith.constant 0 : index
    %258 = vector.load %arg19[%c0_111, %c0_112] : memref<1x128xf32, #tpu.memory_space<vmem>>, vector<1x128xf32>
    %259 = vector.broadcast %258 : vector<1x128xf32> to vector<16x128xf32>
    %260 = arith.addf %257, %259 : vector<16x128xf32>
    %261 = vector.shape_cast %260 : vector<16x128xf32> to vector<2x8x128xf32>
    %c0_113 = arith.constant 0 : index
    %c0_114 = arith.constant 0 : index
    %c0_115 = arith.constant 0 : index
    %262 = vector.load %arg20[%c0_113, %c0_114, %c0_115] : memref<2x8x128xf32, #tpu.memory_space<vmem>>, vector<2x8x128xf32>
    tpu.vector_store %arg20[%c0_113, %c0_114, %c0_115], %261 {strides = array<i32>} : memref<2x8x128xf32, #tpu.memory_space<vmem>>, vector<2x8x128xf32>,
    return
  }
  func.func @transform_0(%arg0: i32, %arg1: i32) -> (i32, i32, i32) {
    %c0_i32 = arith.constant 0 : i32
    %c0_i32_0 = arith.constant 0 : i32
    return %arg0, %arg1, %c0_i32 : i32, i32, i32
  }
  func.func @transform_1(%arg0: i32, %arg1: i32) -> (i32, i32, i32) {
    %c0_i32 = arith.constant 0 : i32
    %c0_i32_0 = arith.constant 0 : i32
    %c0_i32_1 = arith.constant 0 : i32
    return %arg0, %c0_i32, %c0_i32_0 : i32, i32, i32
  }
  func.func @transform_2(%arg0: i32, %arg1: i32) -> (i32, i32) {
    %c0_i32 = arith.constant 0 : i32
    %c0_i32_0 = arith.constant 0 : i32
    %c0_i32_1 = arith.constant 0 : i32
    return %c0_i32, %c0_i32_0 : i32, i32
  }
  func.func @transform_3(%arg0: i32, %arg1: i32) -> (i32, i32) {
    %c0_i32 = arith.constant 0 : i32
    %c0_i32_0 = arith.constant 0 : i32
    %c0_i32_1 = arith.constant 0 : i32
    return %c0_i32, %c0_i32_0 : i32, i32
  }
  func.func @transform_4(%arg0: i32, %arg1: i32) -> (i32, i32) {
    %c0_i32 = arith.constant 0 : i32
    %c0_i32_0 = arith.constant 0 : i32
    %c0_i32_1 = arith.constant 0 : i32
    return %c0_i32, %c0_i32_0 : i32, i32
  }
  func.func @transform_5(%arg0: i32, %arg1: i32) -> (i32, i32) {
    %c0_i32 = arith.constant 0 : i32
    %c0_i32_0 = arith.constant 0 : i32
    %c0_i32_1 = arith.constant 0 : i32
    return %c0_i32, %c0_i32_0 : i32, i32
  }
  func.func @transform_6(%arg0: i32, %arg1: i32) -> (i32, i32) {
    %c0_i32 = arith.constant 0 : i32
    %c0_i32_0 = arith.constant 0 : i32
    %c0_i32_1 = arith.constant 0 : i32
    return %c0_i32, %c0_i32_0 : i32, i32
  }
  func.func @transform_7(%arg0: i32, %arg1: i32) -> (i32, i32) {
    %c0_i32 = arith.constant 0 : i32
    %c0_i32_0 = arith.constant 0 : i32
    %c0_i32_1 = arith.constant 0 : i32
    return %c0_i32, %c0_i32_0 : i32, i32
  }
  func.func @transform_8(%arg0: i32, %arg1: i32) -> (i32, i32) {
    %c0_i32 = arith.constant 0 : i32
    %c0_i32_0 = arith.constant 0 : i32
    %c0_i32_1 = arith.constant 0 : i32
    return %c0_i32, %c0_i32_0 : i32, i32
  }
  func.func @transform_9(%arg0: i32, %arg1: i32) -> (i32, i32) {
    %c0_i32 = arith.constant 0 : i32
    %c0_i32_0 = arith.constant 0 : i32
    %c0_i32_1 = arith.constant 0 : i32
    return %c0_i32, %c0_i32_0 : i32, i32
  }
  func.func @transform_10(%arg0: i32, %arg1: i32) -> (i32, i32) {
    %c0_i32 = arith.constant 0 : i32
    %c0_i32_0 = arith.constant 0 : i32
    %c0_i32_1 = arith.constant 0 : i32
    return %c0_i32, %c0_i32_0 : i32, i32
  }
  func.func @transform_11(%arg0: i32, %arg1: i32) -> (i32, i32) {
    %c0_i32 = arith.constant 0 : i32
    %c0_i32_0 = arith.constant 0 : i32
    %c0_i32_1 = arith.constant 0 : i32
    return %c0_i32, %c0_i32_0 : i32, i32
  }
  func.func @transform_12(%arg0: i32, %arg1: i32) -> (i32, i32) {
    %c0_i32 = arith.constant 0 : i32
    %c0_i32_0 = arith.constant 0 : i32
    %c0_i32_1 = arith.constant 0 : i32
    return %c0_i32, %c0_i32_0 : i32, i32
  }
  func.func @transform_13(%arg0: i32, %arg1: i32) -> (i32, i32) {
    %c0_i32 = arith.constant 0 : i32
    %c0_i32_0 = arith.constant 0 : i32
    %c0_i32_1 = arith.constant 0 : i32
    return %c0_i32, %c0_i32_0 : i32, i32
  }
  func.func @transform_14(%arg0: i32, %arg1: i32) -> (i32, i32) {
    %c0_i32 = arith.constant 0 : i32
    %c0_i32_0 = arith.constant 0 : i32
    %c0_i32_1 = arith.constant 0 : i32
    return %c0_i32, %c0_i32_0 : i32, i32
  }
  func.func @transform_15(%arg0: i32, %arg1: i32) -> (i32, i32) {
    %c0_i32 = arith.constant 0 : i32
    %c0_i32_0 = arith.constant 0 : i32
    %c0_i32_1 = arith.constant 0 : i32
    return %c0_i32, %c0_i32_0 : i32, i32
  }
  func.func @transform_16(%arg0: i32, %arg1: i32) -> (i32, i32) {
    %c0_i32 = arith.constant 0 : i32
    %c0_i32_0 = arith.constant 0 : i32
    %c0_i32_1 = arith.constant 0 : i32
    return %c0_i32, %c0_i32_0 : i32, i32
  }
  func.func @transform_17(%arg0: i32, %arg1: i32) -> (i32, i32) {
    %c0_i32 = arith.constant 0 : i32
    %c0_i32_0 = arith.constant 0 : i32
    %c0_i32_1 = arith.constant 0 : i32
    return %c0_i32, %c0_i32_0 : i32, i32
  }
  func.func @transform_18(%arg0: i32, %arg1: i32) -> (i32, i32, i32) {
    %c0_i32 = arith.constant 0 : i32
    %c0_i32_0 = arith.constant 0 : i32
    return %arg0, %arg1, %c0_i32 : i32, i32, i32
  }
  func.func @transform_19(%arg0: i32, %arg1: i32) -> (i32, i32, i32, i32) {
    %c0_i32 = arith.constant 0 : i32
    %c0_i32_0 = arith.constant 0 : i32
    %c0_i32_1 = arith.constant 0 : i32
    return %arg0, %c0_i32, %arg1, %c0_i32_0 : i32, i32, i32, i32
  }
}

</mosaic_0001>

<llo_original>
// kernel: tpu_custom_call.1
$region0: #{tpu_custom_call.1}
  #allocation0 [shape = 'u32[]', space=smem, size = 0x4, offset = 0x4, fixed_abs, tag = 'smem constant byte address 0x4 - core index']
  #allocation1 [shape = 'u32[144,128]{1,0:T(1,128)}', space=vmem, size = 0x12000, scoped, tag = 'internal scratch']
  %s0 = inlined_call_operand.hbm [shape: f32[2,16,128], index: 0, kind: input, shape index: {}]
  %s1 = inlined_call_operand.hbm [shape: f32[2,16,128], index: 1, kind: input, shape index: {}]
  %s2 = inlined_call_operand.hbm [shape: bf16[128,128], index: 2, kind: input, shape index: {}]
  %s3 = inlined_call_operand.vmem [shape: f32[1,128], index: 3, kind: input, shape index: {}]
  %s4 = inlined_call_operand.hbm [shape: bf16[128,128], index: 4, kind: input, shape index: {}]
  %s5 = inlined_call_operand.vmem [shape: f32[1,128], index: 5, kind: input, shape index: {}]
  %s6 = inlined_call_operand.hbm [shape: bf16[128,128], index: 6, kind: input, shape index: {}]
  %s7 = inlined_call_operand.vmem [shape: f32[1,128], index: 7, kind: input, shape index: {}]
  %s8 = inlined_call_operand.hbm [shape: bf16[128,128], index: 8, kind: input, shape index: {}]
  %s9 = inlined_call_operand.vmem [shape: f32[1,128], index: 9, kind: input, shape index: {}]
  %s10 = inlined_call_operand.vmem [shape: f32[1,128], index: 10, kind: input, shape index: {}]
  %s11 = inlined_call_operand.vmem [shape: f32[1,128], index: 11, kind: input, shape index: {}]
  %s12 = inlined_call_operand.hbm [shape: bf16[128,512], index: 12, kind: input, shape index: {}]
  %s13 = inlined_call_operand.vmem [shape: f32[1,512], index: 13, kind: input, shape index: {}]
  %s14 = inlined_call_operand.hbm [shape: bf16[512,128], index: 14, kind: input, shape index: {}]
  %s15 = inlined_call_operand.vmem [shape: f32[1,128], index: 15, kind: input, shape index: {}]
  %s16 = inlined_call_operand.vmem [shape: f32[1,128], index: 16, kind: input, shape index: {}]
  %s17 = inlined_call_operand.vmem [shape: f32[1,128], index: 17, kind: input, shape index: {}]
  %s18 = inlined_call_operand.hbm [shape: f32[2,16,128], index: 18, kind: output, shape index: {0}]
  %s19 = inlined_call_operand.hbm [shape: bf16[2,4,16,16], index: 19, kind: output, shape index: {1}]
  %20 = xla_tuple %s18, %s19
  %s21 = sld [smem:[#allocation0]]
  $region145: #{tpu_custom_call.1} parent=0
    _
  %s23 = ssub.s32 1, %s21
  %s24 = scalar_select 0, %s23, %s21
  $region1: #{tpu_custom_call.1} parent=0
    #allocation2 [shape = 'u8[16384]{0}', space=vmem, size = 0x4000, scoped, tag = 'input window, operand 0']
    #allocation3 [shape = 's32[2]{0}', space=sflag, size = 0x8, scoped, tag = 'scoped memory for tpu_custom_call.1']
    #allocation4 [shape = 's32[2]{0}', space=sflag, size = 0x8, scoped, tag = 'scoped memory for tpu_custom_call.1']
    #allocation5 [shape = 'u8[16384]{0}', space=vmem, size = 0x4000, scoped, tag = 'input window, operand 1, single buffered']
    #allocation6 [shape = 's32[1]{0}', space=sflag, size = 0x4, scoped, tag = 'scoped memory for tpu_custom_call.1']
    #allocation7 [shape = 'u8[32768]{0}', space=vmem, size = 0x8000, scoped, tag = 'input window, operand 2, single buffered']
    #allocation8 [shape = 'u8[32768]{0}', space=vmem, size = 0x8000, scoped, tag = 'input window, operand 4, single buffered']
    #allocation9 [shape = 's32[1]{0}', space=sflag, size = 0x4, scoped, tag = 'scoped memory for tpu_custom_call.1']
    #allocation10 [shape = 'u8[32768]{0}', space=vmem, size = 0x8000, scoped, tag = 'input window, operand 6, single buffered']
    #allocation11 [shape = 'u8[32768]{0}', space=vmem, size = 0x8000, scoped, tag = 'input window, operand 8, single buffered']
    #allocation12 [shape = 's32[1]{0}', space=sflag, size = 0x4, scoped, tag = 'scoped memory for tpu_custom_call.1']
    #allocation13 [shape = 'u8[131072]{0}', space=vmem, size = 0x20000, scoped, tag = 'input window, operand 12, single buffered']
    #allocation14 [shape = 'u8[131072]{0}', space=vmem, size = 0x20000, scoped, tag = 'input window, operand 14, single buffered']
    #allocation15 [shape = 's32[1]{0}', space=sflag, size = 0x4, scoped, tag = 'scoped memory for tpu_custom_call.1']
    #allocation16 [shape = 'u8[16384]{0}', space=vmem, size = 0x4000, scoped, tag = 'output window, operand 0']
    #allocation17 [shape = 'u8[32768]{0}', space=vmem, size = 0x8000, scoped, tag = 'output window, operand 1']
    #allocation18 [shape = 's32[2]{0}', space=sflag, size = 0x8, scoped, tag = 'scoped memory for tpu_custom_call.1']
    %25 = vsyncpa [#allocation3], 0
    %s26 = scalar_lea.sflag [#allocation3], 1
    %27 = vsyncpa %s26, 0
    %28 = vsyncpa [#allocation6], 0
    %29 = vsyncpa [#allocation9], 0
    %30 = vsyncpa [#allocation12], 0
    %31 = vsyncpa [#allocation15], 0
    %32 = vsyncpa [#allocation4], 0
    %s33 = scalar_lea.sflag [#allocation4], 1
    %34 = vsyncpa %s33, 0
    %35 = vsyncpa [#allocation18], 0
    %s36 = scalar_lea.sflag [#allocation18], 1
    %37 = vsyncpa %s36, 0
    loop: start=0, step=1, limit=4
    $region2: #{tpu_custom_call.1} parent=1 // loop_pre_header
      _
    $region3: #{tpu_custom_call.1} parent=1 // loop_header
      %s39 = sphi 0, %s43
      %p40 = scmp.ge.s32.totalorder %s39, 4
      %s46 = sphi 0, %s58
      %s47 = sphi 0, %s54
      %s48 = sphi 0, %s46
      %s49 = sphi 0, %s47
      %s50 = sphi 0, %s48
      %s51 = sphi 0, %s49
      %s63 = sphi 0, %s65
      %s66 = sphi 0, %s63
      %s67 = sphi 0, %s66
      %s83 = sphi 0, %s67
      %s89 = sphi 0, %s91
      %s92 = sphi 0, %s89
      %s93 = sphi 0, %s92
      %s109 = sphi 0, %s93
      %s113 = sphi 0, %s113
      %s115 = sphi 0, %s113
      %s116 = sphi 0, %s115
      %s130 = sphi 0, %s116
      %s134 = sphi 0, %s134
      %s136 = sphi 0, %s134
      %s137 = sphi 0, %s136
      %s151 = sphi 0, %s137
      %s155 = sphi 0, %s155
      %s157 = sphi 0, %s155
      %s158 = sphi 0, %s157
      %s172 = sphi 0, %s158
      %s176 = sphi 0, %s176
      %s178 = sphi 0, %s176
      %s179 = sphi 0, %s178
      %s193 = sphi 0, %s179
      %s197 = sphi 0, %s197
      %s199 = sphi 0, %s197
      %s200 = sphi 0, %s199
      %s214 = sphi 0, %s200
      %s218 = sphi 0, %s218
      %s220 = sphi 0, %s218
      %s221 = sphi 0, %s220
      %s235 = sphi 0, %s221
      %s239 = sphi 0, %s239
      %s241 = sphi 0, %s239
      %s242 = sphi 0, %s241
      %s256 = sphi 0, %s242
      %s260 = sphi 0, %s260
      %s262 = sphi 0, %s260
      %s263 = sphi 0, %s262
      %s277 = sphi 0, %s263
      %s281 = sphi 0, %s281
      %s283 = sphi 0, %s281
      %s284 = sphi 0, %s283
      %s298 = sphi 0, %s284
      %s302 = sphi 0, %s302
      %s304 = sphi 0, %s302
      %s305 = sphi 0, %s304
      %s319 = sphi 0, %s305
      %s323 = sphi 0, %s323
      %s325 = sphi 0, %s323
      %s326 = sphi 0, %s325
      %s340 = sphi 0, %s326
      %s344 = sphi 0, %s344
      %s346 = sphi 0, %s344
      %s347 = sphi 0, %s346
      %s361 = sphi 0, %s347
      %s365 = sphi 0, %s365
      %s367 = sphi 0, %s365
      %s368 = sphi 0, %s367
      %s382 = sphi 0, %s368
      %s386 = sphi 0, %s386
      %s388 = sphi 0, %s386
      %s389 = sphi 0, %s388
      %s403 = sphi 0, %s389
      %s407 = sphi 0, %s407
      %s409 = sphi 0, %s407
      %s410 = sphi 0, %s409
      %s424 = sphi 0, %s410
      %s428 = sphi 0, %s428
      %s430 = sphi 0, %s428
      %s431 = sphi 0, %s430
      %s445 = sphi 0, %s431
      %s453 = sphi 0, %s455
      %s456 = sphi 0, %s453
      %s457 = sphi 0, %s456
      %s473 = sphi 0, %s457
      %s481 = sphi 0, %s483
      %s484 = sphi 0, %s481
      %s485 = sphi 0, %s484
      %s501 = sphi 0, %s485
    $region4: #{tpu_custom_call.1} parent=1 // loop_header_branch
      %42 = sbr.rel (%p40) target = $region8
    $region5: #{tpu_custom_call.1} parent=1 // loop_body
      %s44 = ssub.s32 %s39, 1
      %s45 = ssub.s32 %s39, 2
      %s52 = sadd.s32 1, %s47
      %p53 = scmp.ge.s32.totalorder %s52, 2
      %s54 = scalar_select %p53, 0, %s52
      %s55 = sadd.s32 1, %s46
      %s56 = scalar_select %p53, %s55, %s46
      %p57 = scmp.ge.s32.totalorder %s56, 1
      %s58 = scalar_select %p57, 0, %s56
      %s59 = ssub.s32 %s46, %s58
      %s60 = ssub.s32 %s47, %s54
      %s61 = sor.u32 %s59, %s60
      %p62 = scmp.eq.s32.totalorder %s61, 0
      %s64 = sadd.s32 %s63, 1
      %s65 = scalar_select %p62, %s63, %s64
      %p68 = pneg %p62
      %p69 = scmp.eq.s32.totalorder %s39, 1
      %p70 = por %p68, %p69
      %p71 = scmp.ne.s32.totalorder %s63, %s66
      %p72 = scmp.eq.s32.totalorder %s39, 0
      %p73 = por %p71, %p72
      %p74 = scmp.ne.s32.totalorder %s63, %s66
      %p75 = scmp.eq.s32.totalorder %s44, 1
      %p76 = por %p74, %p75
      %p77 = scmp.ne.s32.totalorder %s66, %s67
      %p78 = scmp.eq.s32.totalorder %s44, 0
      %p79 = por %p77, %p78
      %p80 = scmp.ne.s32.totalorder %s66, %s67
      %p81 = scmp.eq.s32.totalorder %s45, 1
      %p82 = por %p80, %p81
      %p84 = scmp.ne.s32.totalorder %s67, %s83
      %p85 = scmp.eq.s32.totalorder %s45, 0
      %p86 = por %p84, %p85
      %s87 = ssub.s32 %s46, %s58
      %p88 = scmp.eq.s32.totalorder %s87, 0
      %s90 = sadd.s32 %s89, 1
      %s91 = scalar_select %p88, %s89, %s90
      %p94 = pneg %p88
      %p95 = scmp.eq.s32.totalorder %s39, 1
      %p96 = por %p94, %p95
      %p97 = scmp.ne.s32.totalorder %s89, %s92
      %p98 = scmp.eq.s32.totalorder %s39, 0
      %p99 = por %p97, %p98
      %p100 = scmp.ne.s32.totalorder %s89, %s92
      %p101 = scmp.eq.s32.totalorder %s44, 1
      %p102 = por %p100, %p101
      %p103 = scmp.ne.s32.totalorder %s92, %s93
      %p104 = scmp.eq.s32.totalorder %s44, 0
      %p105 = por %p103, %p104
      %p106 = scmp.ne.s32.totalorder %s92, %s93
      %p107 = scmp.eq.s32.totalorder %s45, 1
      %p108 = por %p106, %p107
      %p110 = scmp.ne.s32.totalorder %s93, %s109
      %p111 = scmp.eq.s32.totalorder %s45, 0
      %p112 = por %p110, %p111
      %s114 = sadd.s32 %s113, 1
      %p117 = scmp.eq.s32.totalorder %s39, 1
      %p118 = scmp.ne.s32.totalorder %s113, %s115
      %p119 = scmp.eq.s32.totalorder %s39, 0
      %p120 = por %p118, %p119
      %p121 = scmp.ne.s32.totalorder %s113, %s115
      %p122 = scmp.eq.s32.totalorder %s44, 1
      %p123 = por %p121, %p122
      %p124 = scmp.ne.s32.totalorder %s115, %s116
      %p125 = scmp.eq.s32.totalorder %s44, 0
      %p126 = por %p124, %p125
      %p127 = scmp.ne.s32.totalorder %s115, %s116
      %p128 = scmp.eq.s32.totalorder %s45, 1
      %p129 = por %p127, %p128
      %p131 = scmp.ne.s32.totalorder %s116, %s130
      %p132 = scmp.eq.s32.totalorder %s45, 0
      %p133 = por %p131, %p132
      %s135 = sadd.s32 %s134, 1
      %p138 = scmp.eq.s32.totalorder %s39, 1
      %p139 = scmp.ne.s32.totalorder %s134, %s136
      %p140 = scmp.eq.s32.totalorder %s39, 0
      %p141 = por %p139, %p140
      %p142 = scmp.ne.s32.totalorder %s134, %s136
      %p143 = scmp.eq.s32.totalorder %s44, 1
      %p144 = por %p142, %p143
      %p145 = scmp.ne.s32.totalorder %s136, %s137
      %p146 = scmp.eq.s32.totalorder %s44, 0
      %p147 = por %p145, %p146
      %p148 = scmp.ne.s32.totalorder %s136, %s137
      %p149 = scmp.eq.s32.totalorder %s45, 1
      %p150 = por %p148, %p149
      %p152 = scmp.ne.s32.totalorder %s137, %s151
      %p153 = scmp.eq.s32.totalorder %s45, 0
      %p154 = por %p152, %p153
      %s156 = sadd.s32 %s155, 1
      %p159 = scmp.eq.s32.totalorder %s39, 1
      %p160 = scmp.ne.s32.totalorder %s155, %s157
      %p161 = scmp.eq.s32.totalorder %s39, 0
      %p162 = por %p160, %p161
      %p163 = scmp.ne.s32.totalorder %s155, %s157
      %p164 = scmp.eq.s32.totalorder %s44, 1
      %p165 = por %p163, %p164
      %p166 = scmp.ne.s32.totalorder %s157, %s158
      %p167 = scmp.eq.s32.totalorder %s44, 0
      %p168 = por %p166, %p167
      %p169 = scmp.ne.s32.totalorder %s157, %s158
      %p170 = scmp.eq.s32.totalorder %s45, 1
      %p171 = por %p169, %p170
      %p173 = scmp.ne.s32.totalorder %s158, %s172
      %p174 = scmp.eq.s32.totalorder %s45, 0
      %p175 = por %p173, %p174
      %s177 = sadd.s32 %s176, 1
      %p180 = scmp.eq.s32.totalorder %s39, 1
      %p181 = scmp.ne.s32.totalorder %s176, %s178
      %p182 = scmp.eq.s32.totalorder %s39, 0
      %p183 = por %p181, %p182
      %p184 = scmp.ne.s32.totalorder %s176, %s178
      %p185 = scmp.eq.s32.totalorder %s44, 1
      %p186 = por %p184, %p185
      %p187 = scmp.ne.s32.totalorder %s178, %s179
      %p188 = scmp.eq.s32.totalorder %s44, 0
      %p189 = por %p187, %p188
      %p190 = scmp.ne.s32.totalorder %s178, %s179
      %p191 = scmp.eq.s32.totalorder %s45, 1
      %p192 = por %p190, %p191
      %p194 = scmp.ne.s32.totalorder %s179, %s193
      %p195 = scmp.eq.s32.totalorder %s45, 0
      %p196 = por %p194, %p195
      %s198 = sadd.s32 %s197, 1
      %p201 = scmp.eq.s32.totalorder %s39, 1
      %p202 = scmp.ne.s32.totalorder %s197, %s199
      %p203 = scmp.eq.s32.totalorder %s39, 0
      %p204 = por %p202, %p203
      %p205 = scmp.ne.s32.totalorder %s197, %s199
      %p206 = scmp.eq.s32.totalorder %s44, 1
      %p207 = por %p205, %p206
      %p208 = scmp.ne.s32.totalorder %s199, %s200
      %p209 = scmp.eq.s32.totalorder %s44, 0
      %p210 = por %p208, %p209
      %p211 = scmp.ne.s32.totalorder %s199, %s200
      %p212 = scmp.eq.s32.totalorder %s45, 1
      %p213 = por %p211, %p212
      %p215 = scmp.ne.s32.totalorder %s200, %s214
      %p216 = scmp.eq.s32.totalorder %s45, 0
      %p217 = por %p215, %p216
      %s219 = sadd.s32 %s218, 1
      %p222 = scmp.eq.s32.totalorder %s39, 1
      %p223 = scmp.ne.s32.totalorder %s218, %s220
      %p224 = scmp.eq.s32.totalorder %s39, 0
      %p225 = por %p223, %p224
      %p226 = scmp.ne.s32.totalorder %s218, %s220
      %p227 = scmp.eq.s32.totalorder %s44, 1
      %p228 = por %p226, %p227
      %p229 = scmp.ne.s32.totalorder %s220, %s221
      %p230 = scmp.eq.s32.totalorder %s44, 0
      %p231 = por %p229, %p230
      %p232 = scmp.ne.s32.totalorder %s220, %s221
      %p233 = scmp.eq.s32.totalorder %s45, 1
      %p234 = por %p232, %p233
      %p236 = scmp.ne.s32.totalorder %s221, %s235
      %p237 = scmp.eq.s32.totalorder %s45, 0
      %p238 = por %p236, %p237
      %s240 = sadd.s32 %s239, 1
      %p243 = scmp.eq.s32.totalorder %s39, 1
      %p244 = scmp.ne.s32.totalorder %s239, %s241
      %p245 = scmp.eq.s32.totalorder %s39, 0
      %p246 = por %p244, %p245
      %p247 = scmp.ne.s32.totalorder %s239, %s241
      %p248 = scmp.eq.s32.totalorder %s44, 1
      %p249 = por %p247, %p248
      %p250 = scmp.ne.s32.totalorder %s241, %s242
      %p251 = scmp.eq.s32.totalorder %s44, 0
      %p252 = por %p250, %p251
      %p253 = scmp.ne.s32.totalorder %s241, %s242
      %p254 = scmp.eq.s32.totalorder %s45, 1
      %p255 = por %p253, %p254
      %p257 = scmp.ne.s32.totalorder %s242, %s256
      %p258 = scmp.eq.s32.totalorder %s45, 0
      %p259 = por %p257, %p258
      %s261 = sadd.s32 %s260, 1
      %p264 = scmp.eq.s32.totalorder %s39, 1
      %p265 = scmp.ne.s32.totalorder %s260, %s262
      %p266 = scmp.eq.s32.totalorder %s39, 0
      %p267 = por %p265, %p266
      %p268 = scmp.ne.s32.totalorder %s260, %s262
      %p269 = scmp.eq.s32.totalorder %s44, 1
      %p270 = por %p268, %p269
      %p271 = scmp.ne.s32.totalorder %s262, %s263
      %p272 = scmp.eq.s32.totalorder %s44, 0
      %p273 = por %p271, %p272
      %p274 = scmp.ne.s32.totalorder %s262, %s263
      %p275 = scmp.eq.s32.totalorder %s45, 1
      %p276 = por %p274, %p275
      %p278 = scmp.ne.s32.totalorder %s263, %s277
      %p279 = scmp.eq.s32.totalorder %s45, 0
      %p280 = por %p278, %p279
      %s282 = sadd.s32 %s281, 1
      %p285 = scmp.eq.s32.totalorder %s39, 1
      %p286 = scmp.ne.s32.totalorder %s281, %s283
      %p287 = scmp.eq.s32.totalorder %s39, 0
      %p288 = por %p286, %p287
      %p289 = scmp.ne.s32.totalorder %s281, %s283
      %p290 = scmp.eq.s32.totalorder %s44, 1
      %p291 = por %p289, %p290
      %p292 = scmp.ne.s32.totalorder %s283, %s284
      %p293 = scmp.eq.s32.totalorder %s44, 0
      %p294 = por %p292, %p293
      %p295 = scmp.ne.s32.totalorder %s283, %s284
      %p296 = scmp.eq.s32.totalorder %s45, 1
      %p297 = por %p295, %p296
      %p299 = scmp.ne.s32.totalorder %s284, %s298
      %p300 = scmp.eq.s32.totalorder %s45, 0
      %p301 = por %p299, %p300
      %s303 = sadd.s32 %s302, 1
      %p306 = scmp.eq.s32.totalorder %s39, 1
      %p307 = scmp.ne.s32.totalorder %s302, %s304
      %p308 = scmp.eq.s32.totalorder %s39, 0
      %p309 = por %p307, %p308
      %p310 = scmp.ne.s32.totalorder %s302, %s304
      %p311 = scmp.eq.s32.totalorder %s44, 1
      %p312 = por %p310, %p311
      %p313 = scmp.ne.s32.totalorder %s304, %s305
      %p314 = scmp.eq.s32.totalorder %s44, 0
      %p315 = por %p313, %p314
      %p316 = scmp.ne.s32.totalorder %s304, %s305
      %p317 = scmp.eq.s32.totalorder %s45, 1
      %p318 = por %p316, %p317
      %p320 = scmp.ne.s32.totalorder %s305, %s319
      %p321 = scmp.eq.s32.totalorder %s45, 0
      %p322 = por %p320, %p321
      %s324 = sadd.s32 %s323, 1
      %p327 = scmp.eq.s32.totalorder %s39, 1
      %p328 = scmp.ne.s32.totalorder %s323, %s325
      %p329 = scmp.eq.s32.totalorder %s39, 0
      %p330 = por %p328, %p329
      %p331 = scmp.ne.s32.totalorder %s323, %s325
      %p332 = scmp.eq.s32.totalorder %s44, 1
      %p333 = por %p331, %p332
      %p334 = scmp.ne.s32.totalorder %s325, %s326
      %p335 = scmp.eq.s32.totalorder %s44, 0
      %p336 = por %p334, %p335
      %p337 = scmp.ne.s32.totalorder %s325, %s326
      %p338 = scmp.eq.s32.totalorder %s45, 1
      %p339 = por %p337, %p338
      %p341 = scmp.ne.s32.totalorder %s326, %s340
      %p342 = scmp.eq.s32.totalorder %s45, 0
      %p343 = por %p341, %p342
      %s345 = sadd.s32 %s344, 1
      %p348 = scmp.eq.s32.totalorder %s39, 1
      %p349 = scmp.ne.s32.totalorder %s344, %s346
      %p350 = scmp.eq.s32.totalorder %s39, 0
      %p351 = por %p349, %p350
      %p352 = scmp.ne.s32.totalorder %s344, %s346
      %p353 = scmp.eq.s32.totalorder %s44, 1
      %p354 = por %p352, %p353
      %p355 = scmp.ne.s32.totalorder %s346, %s347
      %p356 = scmp.eq.s32.totalorder %s44, 0
      %p357 = por %p355, %p356
      %p358 = scmp.ne.s32.totalorder %s346, %s347
      %p359 = scmp.eq.s32.totalorder %s45, 1
      %p360 = por %p358, %p359
      %p362 = scmp.ne.s32.totalorder %s347, %s361
      %p363 = scmp.eq.s32.totalorder %s45, 0
      %p364 = por %p362, %p363
      %s366 = sadd.s32 %s365, 1
      %p369 = scmp.eq.s32.totalorder %s39, 1
      %p370 = scmp.ne.s32.totalorder %s365, %s367
      %p371 = scmp.eq.s32.totalorder %s39, 0
      %p372 = por %p370, %p371
      %p373 = scmp.ne.s32.totalorder %s365, %s367
      %p374 = scmp.eq.s32.totalorder %s44, 1
      %p375 = por %p373, %p374
      %p376 = scmp.ne.s32.totalorder %s367, %s368
      %p377 = scmp.eq.s32.totalorder %s44, 0
      %p378 = por %p376, %p377
      %p379 = scmp.ne.s32.totalorder %s367, %s368
      %p380 = scmp.eq.s32.totalorder %s45, 1
      %p381 = por %p379, %p380
      %p383 = scmp.ne.s32.totalorder %s368, %s382
      %p384 = scmp.eq.s32.totalorder %s45, 0
      %p385 = por %p383, %p384
      %s387 = sadd.s32 %s386, 1
      %p390 = scmp.eq.s32.totalorder %s39, 1
      %p391 = scmp.ne.s32.totalorder %s386, %s388
      %p392 = scmp.eq.s32.totalorder %s39, 0
      %p393 = por %p391, %p392
      %p394 = scmp.ne.s32.totalorder %s386, %s388
      %p395 = scmp.eq.s32.totalorder %s44, 1
      %p396 = por %p394, %p395
      %p397 = scmp.ne.s32.totalorder %s388, %s389
      %p398 = scmp.eq.s32.totalorder %s44, 0
      %p399 = por %p397, %p398
      %p400 = scmp.ne.s32.totalorder %s388, %s389
      %p401 = scmp.eq.s32.totalorder %s45, 1
      %p402 = por %p400, %p401
      %p404 = scmp.ne.s32.totalorder %s389, %s403
      %p405 = scmp.eq.s32.totalorder %s45, 0
      %p406 = por %p404, %p405
      %s408 = sadd.s32 %s407, 1
      %p411 = scmp.eq.s32.totalorder %s39, 1
      %p412 = scmp.ne.s32.totalorder %s407, %s409
      %p413 = scmp.eq.s32.totalorder %s39, 0
      %p414 = por %p412, %p413
      %p415 = scmp.ne.s32.totalorder %s407, %s409
      %p416 = scmp.eq.s32.totalorder %s44, 1
      %p417 = por %p415, %p416
      %p418 = scmp.ne.s32.totalorder %s409, %s410
      %p419 = scmp.eq.s32.totalorder %s44, 0
      %p420 = por %p418, %p419
      %p421 = scmp.ne.s32.totalorder %s409, %s410
      %p422 = scmp.eq.s32.totalorder %s45, 1
      %p423 = por %p421, %p422
      %p425 = scmp.ne.s32.totalorder %s410, %s424
      %p426 = scmp.eq.s32.totalorder %s45, 0
      %p427 = por %p425, %p426
      %s429 = sadd.s32 %s428, 1
      %p432 = scmp.eq.s32.totalorder %s39, 1
      %p433 = scmp.ne.s32.totalorder %s428, %s430
      %p434 = scmp.eq.s32.totalorder %s39, 0
      %p435 = por %p433, %p434
      %p436 = scmp.ne.s32.totalorder %s428, %s430
      %p437 = scmp.eq.s32.totalorder %s44, 1
      %p438 = por %p436, %p437
      %p439 = scmp.ne.s32.totalorder %s430, %s431
      %p440 = scmp.eq.s32.totalorder %s44, 0
      %p441 = por %p439, %p440
      %p442 = scmp.ne.s32.totalorder %s430, %s431
      %p443 = scmp.eq.s32.totalorder %s45, 1
      %p444 = por %p442, %p443
      %p446 = scmp.ne.s32.totalorder %s431, %s445
      %p447 = scmp.eq.s32.totalorder %s45, 0
      %p448 = por %p446, %p447
      %s449 = ssub.s32 %s46, %s58
      %s450 = ssub.s32 %s47, %s54
      %s451 = sor.u32 %s449, %s450
      %p452 = scmp.eq.s32.totalorder %s451, 0
      %s454 = sadd.s32 %s453, 1
      %s455 = scalar_select %p452, %s453, %s454
      %p458 = pneg %p452
      %p459 = scmp.eq.s32.totalorder %s39, 1
      %p460 = por %p458, %p459
      %p461 = scmp.ne.s32.totalorder %s453, %s456
      %p462 = scmp.eq.s32.totalorder %s39, 0
      %p463 = por %p461, %p462
      %p464 = scmp.ne.s32.totalorder %s453, %s456
      %p465 = scmp.eq.s32.totalorder %s44, 1
      %p466 = por %p464, %p465
      %p467 = scmp.ne.s32.totalorder %s456, %s457
      %p468 = scmp.eq.s32.totalorder %s44, 0
      %p469 = por %p467, %p468
      %p470 = scmp.ne.s32.totalorder %s456, %s457
      %p471 = scmp.eq.s32.totalorder %s45, 1
      %p472 = por %p470, %p471
      %p474 = scmp.ne.s32.totalorder %s457, %s473
      %p475 = scmp.eq.s32.totalorder %s45, 0
      %p476 = por %p474, %p475
      %s477 = ssub.s32 %s46, %s58
      %s478 = ssub.s32 %s47, %s54
      %s479 = sor.u32 %s477, %s478
      %p480 = scmp.eq.s32.totalorder %s479, 0
      %s482 = sadd.s32 %s481, 1
      %s483 = scalar_select %p480, %s481, %s482
      %p486 = pneg %p480
      %p487 = scmp.eq.s32.totalorder %s39, 1
      %p488 = por %p486, %p487
      %p489 = scmp.ne.s32.totalorder %s481, %s484
      %p490 = scmp.eq.s32.totalorder %s39, 0
      %p491 = por %p489, %p490
      %p492 = scmp.ne.s32.totalorder %s481, %s484
      %p493 = scmp.eq.s32.totalorder %s44, 1
      %p494 = por %p492, %p493
      %p495 = scmp.ne.s32.totalorder %s484, %s485
      %p496 = scmp.eq.s32.totalorder %s44, 0
      %p497 = por %p495, %p496
      %p498 = scmp.ne.s32.totalorder %s484, %s485
      %p499 = scmp.eq.s32.totalorder %s45, 1
      %p500 = por %p498, %p499
      %p502 = scmp.ne.s32.totalorder %s485, %s501
      %p503 = scmp.eq.s32.totalorder %s45, 0
      %p504 = por %p502, %p503
      %p505 = scmp.le.s32.totalorder 1, %s39
      %p506 = scmp.lt.s32.totalorder %s39, 3
      %p507 = pnand %p505, %p506
      %p508 = pneg %p507
      // Predicated region
      $region9: #{tpu_custom_call.1} parent=5 // pred_check
        _
      $region10: #{tpu_custom_call.1} parent=5 // pred_check_branch
        %510 = sbr.rel (%p507) target = $region12
      $region11: #{tpu_custom_call.1} parent=5 // pred_region
        %s511 = ssub.s32 %s39, 1
        // Predicated region
        $region13: #{tpu_custom_call.1} parent=11 // pred_check
          %p512 = pneg %p105
        $region14: #{tpu_custom_call.1} parent=11 // pred_check_branch
          %514 = sbr.rel (%p512) target = $region16
        $region15: #{tpu_custom_call.1} parent=11 // pred_region
          %s515 = smul.u32 2, %s48
          %s517 = ssub.s32 512, 512
          %518 = vsyncadd [#allocation6], %s517
          %s519 = smul.addr %s515, 2
          %s520 = smul.addr %s519, 128
          %s521 = scalar_lea.hbm %s1, %s520
          %s522 = sshll.u32 [#allocation5], 4
          %s523 = int_to_ptr.vmem [resolvable:$true] %s522
          %528 = dma.hbm_to_vmem [thread:$0]  %s521, 512, %s523, [#allocation6], 128, 128, 8
        $region16: #{tpu_custom_call.1} parent=11 // pred_fallthru
          _
        // Predicated region
        $region17: #{tpu_custom_call.1} parent=11 // pred_check
          %p529 = pneg %p126
        $region18: #{tpu_custom_call.1} parent=11 // pred_check_branch
          %531 = sbr.rel (%p529) target = $region20
        $region19: #{tpu_custom_call.1} parent=11 // pred_region
          %s533 = ssub.s32 1024, 1024
          %534 = vsyncadd [#allocation6], %s533
          %s535 = sshll.u32 [#allocation7], 4
          %s536 = int_to_ptr.vmem [resolvable:$true] %s535
          %541 = dma.hbm_to_vmem [thread:$0]  %s2, 1024, %s536, [#allocation6], 64, 64, 4
        $region20: #{tpu_custom_call.1} parent=11 // pred_fallthru
          _
        // Predicated region
        $region21: #{tpu_custom_call.1} parent=11 // pred_check
          %p542 = pneg %p147
        $region22: #{tpu_custom_call.1} parent=11 // pred_check_branch
          %544 = sbr.rel (%p542) target = $region24
        $region23: #{tpu_custom_call.1} parent=11 // pred_region
          _
        $region24: #{tpu_custom_call.1} parent=11 // pred_fallthru
          _
        // Predicated region
        $region25: #{tpu_custom_call.1} parent=11 // pred_check
          %p545 = pneg %p168
        $region26: #{tpu_custom_call.1} parent=11 // pred_check_branch
          %547 = sbr.rel (%p545) target = $region28
        $region27: #{tpu_custom_call.1} parent=11 // pred_region
          %s549 = ssub.s32 1024, 1024
          %550 = vsyncadd [#allocation9], %s549
          %s551 = sshll.u32 [#allocation8], 4
          %s552 = int_to_ptr.vmem [resolvable:$true] %s551
          %557 = dma.hbm_to_vmem [thread:$0]  %s4, 1024, %s552, [#allocation9], 64, 64, 4
        $region28: #{tpu_custom_call.1} parent=11 // pred_fallthru
          _
        // Predicated region
        $region29: #{tpu_custom_call.1} parent=11 // pred_check
          %p558 = pneg %p189
        $region30: #{tpu_custom_call.1} parent=11 // pred_check_branch
          %560 = sbr.rel (%p558) target = $region32
        $region31: #{tpu_custom_call.1} parent=11 // pred_region
          _
        $region32: #{tpu_custom_call.1} parent=11 // pred_fallthru
          _
        // Predicated region
        $region33: #{tpu_custom_call.1} parent=11 // pred_check
          %p561 = pneg %p210
        $region34: #{tpu_custom_call.1} parent=11 // pred_check_branch
          %563 = sbr.rel (%p561) target = $region36
        $region35: #{tpu_custom_call.1} parent=11 // pred_region
          %s565 = ssub.s32 1024, 1024
          %566 = vsyncadd [#allocation9], %s565
          %s567 = sshll.u32 [#allocation10], 4
          %s568 = int_to_ptr.vmem [resolvable:$true] %s567
          %573 = dma.hbm_to_vmem [thread:$0]  %s6, 1024, %s568, [#allocation9], 64, 64, 4
        $region36: #{tpu_custom_call.1} parent=11 // pred_fallthru
          _
        // Predicated region
        $region37: #{tpu_custom_call.1} parent=11 // pred_check
          %p574 = pneg %p231
        $region38: #{tpu_custom_call.1} parent=11 // pred_check_branch
          %576 = sbr.rel (%p574) target = $region40
        $region39: #{tpu_custom_call.1} parent=11 // pred_region
          _
        $region40: #{tpu_custom_call.1} parent=11 // pred_fallthru
          _
        // Predicated region
        $region41: #{tpu_custom_call.1} parent=11 // pred_check
          %p577 = pneg %p252
        $region42: #{tpu_custom_call.1} parent=11 // pred_check_branch
          %579 = sbr.rel (%p577) target = $region44
        $region43: #{tpu_custom_call.1} parent=11 // pred_region
          %s581 = ssub.s32 1024, 1024
          %582 = vsyncadd [#allocation12], %s581
          %s583 = sshll.u32 [#allocation11], 4
          %s584 = int_to_ptr.vmem [resolvable:$true] %s583
          %589 = dma.hbm_to_vmem [thread:$0]  %s8, 1024, %s584, [#allocation12], 64, 64, 4
        $region44: #{tpu_custom_call.1} parent=11 // pred_fallthru
          _
        // Predicated region
        $region45: #{tpu_custom_call.1} parent=11 // pred_check
          %p590 = pneg %p273
        $region46: #{tpu_custom_call.1} parent=11 // pred_check_branch
          %592 = sbr.rel (%p590) target = $region48
        $region47: #{tpu_custom_call.1} parent=11 // pred_region
          _
        $region48: #{tpu_custom_call.1} parent=11 // pred_fallthru
          _
        // Predicated region
        $region49: #{tpu_custom_call.1} parent=11 // pred_check
          %p593 = pneg %p294
        $region50: #{tpu_custom_call.1} parent=11 // pred_check_branch
          %595 = sbr.rel (%p593) target = $region52
        $region51: #{tpu_custom_call.1} parent=11 // pred_region
          _
        $region52: #{tpu_custom_call.1} parent=11 // pred_fallthru
          _
        // Predicated region
        $region53: #{tpu_custom_call.1} parent=11 // pred_check
          %p596 = pneg %p315
        $region54: #{tpu_custom_call.1} parent=11 // pred_check_branch
          %598 = sbr.rel (%p596) target = $region56
        $region55: #{tpu_custom_call.1} parent=11 // pred_region
          _
        $region56: #{tpu_custom_call.1} parent=11 // pred_fallthru
          _
        // Predicated region
        $region57: #{tpu_custom_call.1} parent=11 // pred_check
          %p599 = pneg %p336
        $region58: #{tpu_custom_call.1} parent=11 // pred_check_branch
          %601 = sbr.rel (%p599) target = $region60
        $region59: #{tpu_custom_call.1} parent=11 // pred_region
          %s603 = ssub.s32 4096, 4096
          %604 = vsyncadd [#allocation12], %s603
          %s605 = sshll.u32 [#allocation13], 4
          %s606 = int_to_ptr.vmem [resolvable:$true] %s605
          %611 = dma.hbm_to_vmem [thread:$0]  %s12, 4096, %s606, [#allocation12], 256, 256, 16
        $region60: #{tpu_custom_call.1} parent=11 // pred_fallthru
          _
        // Predicated region
        $region61: #{tpu_custom_call.1} parent=11 // pred_check
          %p612 = pneg %p357
        $region62: #{tpu_custom_call.1} parent=11 // pred_check_branch
          %614 = sbr.rel (%p612) target = $region64
        $region63: #{tpu_custom_call.1} parent=11 // pred_region
          _
        $region64: #{tpu_custom_call.1} parent=11 // pred_fallthru
          _
        // Predicated region
        $region65: #{tpu_custom_call.1} parent=11 // pred_check
          %p615 = pneg %p378
        $region66: #{tpu_custom_call.1} parent=11 // pred_check_branch
          %617 = sbr.rel (%p615) target = $region68
        $region67: #{tpu_custom_call.1} parent=11 // pred_region
          %s619 = ssub.s32 4096, 4096
          %620 = vsyncadd [#allocation15], %s619
          %s621 = sshll.u32 [#allocation14], 4
          %s622 = int_to_ptr.vmem [resolvable:$true] %s621
          %627 = dma.hbm_to_vmem [thread:$0]  %s14, 4096, %s622, [#allocation15], 64, 64, 4
        $region68: #{tpu_custom_call.1} parent=11 // pred_fallthru
          _
        // Predicated region
        $region69: #{tpu_custom_call.1} parent=11 // pred_check
          %p628 = pneg %p399
        $region70: #{tpu_custom_call.1} parent=11 // pred_check_branch
          %630 = sbr.rel (%p628) target = $region72
        $region71: #{tpu_custom_call.1} parent=11 // pred_region
          _
        $region72: #{tpu_custom_call.1} parent=11 // pred_fallthru
          _
        // Predicated region
        $region73: #{tpu_custom_call.1} parent=11 // pred_check
          %p631 = pneg %p420
        $region74: #{tpu_custom_call.1} parent=11 // pred_check_branch
          %633 = sbr.rel (%p631) target = $region76
        $region75: #{tpu_custom_call.1} parent=11 // pred_region
          _
        $region76: #{tpu_custom_call.1} parent=11 // pred_fallthru
          _
        // Predicated region
        $region77: #{tpu_custom_call.1} parent=11 // pred_check
          %p634 = pneg %p441
        $region78: #{tpu_custom_call.1} parent=11 // pred_check_branch
          %636 = sbr.rel (%p634) target = $region80
        $region79: #{tpu_custom_call.1} parent=11 // pred_region
          _
        $region80: #{tpu_custom_call.1} parent=11 // pred_fallthru
          _
      $region12: #{tpu_custom_call.1} parent=5 // pred_fallthru
        _
      %p637 = scmp.lt.s32.totalorder %s39, 2
      // Predicated region
      $region81: #{tpu_custom_call.1} parent=5 // pred_check
        %p638 = pneg %p637
      $region82: #{tpu_custom_call.1} parent=5 // pred_check_branch
        %640 = sbr.rel (%p638) target = $region84
      $region83: #{tpu_custom_call.1} parent=5 // pred_region
        // Predicated region
        $region85: #{tpu_custom_call.1} parent=83 // pred_check
          %p641 = pneg %p73
        $region86: #{tpu_custom_call.1} parent=83 // pred_check_branch
          %643 = sbr.rel (%p641) target = $region88
        $region87: #{tpu_custom_call.1} parent=83 // pred_region
          %s644 = sand.u32 %s63, 1
          %s645 = scalar_lea.sflag [#allocation3], %s644
          %s646 = sand.u32 %s63, 1
          %s647 = smul.addr %s646, 16
          %s648 = scalar_lea.vmem [#allocation2], %s647
          %s649 = smul.u32 2, %s46
          %s651 = ssub.s32 256, 256
          %652 = vsyncadd %s645, %s651
          %s653 = smul.addr %s649, 2
          %s654 = sadd.s32 %s47, %s653
          %s655 = smul.addr %s654, 128
          %s656 = scalar_lea.hbm %s0, %s655
          %s657 = sshll.u32 %s648, 4
          %s658 = int_to_ptr.vmem [resolvable:$true] %s657
          %663 = dma.hbm_to_vmem [thread:$0]  %s656, 256, %s658, %s645, 256, 128, 8
        $region88: #{tpu_custom_call.1} parent=83 // pred_fallthru
          _
      $region84: #{tpu_custom_call.1} parent=5 // pred_fallthru
        _
      %p664 = scmp.le.s32.totalorder 1, %s39
      %p665 = scmp.lt.s32.totalorder %s39, 3
      %p666 = pnand %p664, %p665
      %p667 = pneg %p666
      // Predicated region
      $region89: #{tpu_custom_call.1} parent=5 // pred_check
        _
      $region90: #{tpu_custom_call.1} parent=5 // pred_check_branch
        %669 = sbr.rel (%p666) target = $region92
      $region91: #{tpu_custom_call.1} parent=5 // pred_region
        %s670 = ssub.s32 %s39, 1
        %s671 = sand.u32 %s66, 1
        %s672 = scalar_lea.sflag [#allocation3], %s671
        %s673 = sand.u32 %s66, 1
        %s674 = smul.addr %s673, 16
        %s675 = scalar_lea.vmem [#allocation2], %s674
        // Predicated region
        $region93: #{tpu_custom_call.1} parent=91 // pred_check
          %p676 = pneg %p79
        $region94: #{tpu_custom_call.1} parent=91 // pred_check_branch
          %678 = sbr.rel (%p676) target = $region96
        $region95: #{tpu_custom_call.1} parent=91 // pred_region
          %679 = dma.done %s672, 256
        $region96: #{tpu_custom_call.1} parent=91 // pred_fallthru
          _
        // Predicated region
        $region97: #{tpu_custom_call.1} parent=91 // pred_check
          %p680 = pneg %p105
        $region98: #{tpu_custom_call.1} parent=91 // pred_check_branch
          %682 = sbr.rel (%p680) target = $region100
        $region99: #{tpu_custom_call.1} parent=91 // pred_region
          %683 = dma.done [#allocation6], 512
        $region100: #{tpu_custom_call.1} parent=91 // pred_fallthru
          _
        // Predicated region
        $region101: #{tpu_custom_call.1} parent=91 // pred_check
          %p684 = pneg %p126
        $region102: #{tpu_custom_call.1} parent=91 // pred_check_branch
          %686 = sbr.rel (%p684) target = $region104
        $region103: #{tpu_custom_call.1} parent=91 // pred_region
          %687 = dma.done [#allocation6], 1024
        $region104: #{tpu_custom_call.1} parent=91 // pred_fallthru
          _
        // Predicated region
        $region105: #{tpu_custom_call.1} parent=91 // pred_check
          %p688 = pneg %p168
        $region106: #{tpu_custom_call.1} parent=91 // pred_check_branch
          %690 = sbr.rel (%p688) target = $region108
        $region107: #{tpu_custom_call.1} parent=91 // pred_region
          %691 = dma.done [#allocation9], 1024
        $region108: #{tpu_custom_call.1} parent=91 // pred_fallthru
          _
        // Predicated region
        $region109: #{tpu_custom_call.1} parent=91 // pred_check
          %p692 = pneg %p210
        $region110: #{tpu_custom_call.1} parent=91 // pred_check_branch
          %694 = sbr.rel (%p692) target = $region112
        $region111: #{tpu_custom_call.1} parent=91 // pred_region
          %695 = dma.done [#allocation9], 1024
        $region112: #{tpu_custom_call.1} parent=91 // pred_fallthru
          _
        // Predicated region
        $region113: #{tpu_custom_call.1} parent=91 // pred_check
          %p696 = pneg %p252
        $region114: #{tpu_custom_call.1} parent=91 // pred_check_branch
          %698 = sbr.rel (%p696) target = $region116
        $region115: #{tpu_custom_call.1} parent=91 // pred_region
          %699 = dma.done [#allocation12], 1024
        $region116: #{tpu_custom_call.1} parent=91 // pred_fallthru
          _
        // Predicated region
        $region117: #{tpu_custom_call.1} parent=91 // pred_check
          %p700 = pneg %p336
        $region118: #{tpu_custom_call.1} parent=91 // pred_check_branch
          %702 = sbr.rel (%p700) target = $region120
        $region119: #{tpu_custom_call.1} parent=91 // pred_region
          %703 = dma.done [#allocation12], 4096
        $region120: #{tpu_custom_call.1} parent=91 // pred_fallthru
          _
        // Predicated region
        $region121: #{tpu_custom_call.1} parent=91 // pred_check
          %p704 = pneg %p378
        $region122: #{tpu_custom_call.1} parent=91 // pred_check_branch
          %706 = sbr.rel (%p704) target = $region124
        $region123: #{tpu_custom_call.1} parent=91 // pred_region
          %707 = dma.done [#allocation15], 4096
        $region124: #{tpu_custom_call.1} parent=91 // pred_fallthru
          _
        %s708 = sand.u32 %s66, 1
        %s709 = scalar_lea.sflag [#allocation3], %s708
        %s710 = sand.u32 %s66, 1
        %s711 = smul.addr %s710, 16
        %s712 = scalar_lea.vmem [#allocation2], %s711
        %p713 = pneg %p79
        %p714 = pneg %p76
        %p715 = pneg %p105
        %p716 = pneg %p102
        %p717 = pneg %p126
        %p718 = pneg %p123
        %p719 = pneg %p147
        %p720 = pneg %p144
        %p721 = pneg %p168
        %p722 = pneg %p165
        %p723 = pneg %p189
        %p724 = pneg %p186
        %p725 = pneg %p210
        %p726 = pneg %p207
        %p727 = pneg %p231
        %p728 = pneg %p228
        %p729 = pneg %p252
        %p730 = pneg %p249
        %p731 = pneg %p273
        %p732 = pneg %p270
        %p733 = pneg %p294
        %p734 = pneg %p291
        %p735 = pneg %p315
        %p736 = pneg %p312
        %p737 = pneg %p336
        %p738 = pneg %p333
        %p739 = pneg %p357
        %p740 = pneg %p354
        %p741 = pneg %p378
        %p742 = pneg %p375
        %p743 = pneg %p399
        %p744 = pneg %p396
        %p745 = pneg %p420
        %p746 = pneg %p417
        %p747 = pneg %p441
        %p748 = pneg %p438
        %p749 = pneg %p469
        %p750 = pneg %p466
        %s751 = sand.u32 %s456, 1
        %s752 = scalar_lea.sflag [#allocation4], %s751
        %s753 = sand.u32 %s456, 1
        %s754 = smul.addr %s753, 16
        %s755 = scalar_lea.vmem [#allocation16], %s754
        %p756 = pneg %p497
        %p757 = pneg %p494
        %s758 = sand.u32 %s484, 1
        %s759 = scalar_lea.sflag [#allocation18], %s758
        %s760 = sand.u32 %s484, 1
        %s761 = smul.addr %s760, 32
        %s762 = scalar_lea.vmem [#allocation17], %s761
        %s763 = smul.u32 2, %s48
        %s764 = smul.u32 2, %s48
        %s765 = smul.u32 2, %s48
        %s766 = smul.u32 2, %s48
        %v768 = vld [vmem:[%s675] sm:$0xff]
        %v769 = vld [vmem:[%s675 + $0x8] sm:$0xff]
        %v770 = vld [vmem:[#allocation5] sm:$0xff]
        %v771 = vld [vmem:[#allocation5 + $0x8] sm:$0xff]
        %v772 = vld [vmem:[#allocation5 + $0x10] sm:$0xff]
        %v773 = vld [vmem:[#allocation5 + $0x18] sm:$0xff]
        %v774 = vld [vmem:[#allocation7] sm:$0xf]
        %v775 = vld [vmem:[#allocation7 + $0x4] sm:$0xf]
        %v776 = vld [vmem:[#allocation7 + $0x8] sm:$0xf]
        %v777 = vld [vmem:[#allocation7 + $0xc] sm:$0xf]
        %v778 = vld [vmem:[#allocation7 + $0x10] sm:$0xf]
        %v779 = vld [vmem:[#allocation7 + $0x14] sm:$0xf]
        %v780 = vld [vmem:[#allocation7 + $0x18] sm:$0xf]
        %v781 = vld [vmem:[#allocation7 + $0x1c] sm:$0xf]
        %v782 = vld [vmem:[#allocation7 + $0x20] sm:$0xf]
        %v783 = vld [vmem:[#allocation7 + $0x24] sm:$0xf]
        %v784 = vld [vmem:[#allocation7 + $0x28] sm:$0xf]
        %v785 = vld [vmem:[#allocation7 + $0x2c] sm:$0xf]
        %v786 = vld [vmem:[#allocation7 + $0x30] sm:$0xf]
        %v787 = vld [vmem:[#allocation7 + $0x34] sm:$0xf]
        %v788 = vld [vmem:[#allocation7 + $0x38] sm:$0xf]
        %v789 = vld [vmem:[#allocation7 + $0x3c] sm:$0xf]
        %v790 = vpack.c.bf16 %v769, %v768
        %v791 = vld [vmem:[%s3] sm:$0x1]
        %v793 = vlaneseq
        %v794 = vshrl.u32 %v793, 7
        %v795 = vsub.s32 0, %v794
        %v796 = vrot.slane %v791, %v795
        %v814 = vunpack.c.l.b16 %v774
        %v815 = vunpack.c.l.b16 %v775
        %v816 = vunpack.c.l.b16 %v776
        %v817 = vunpack.c.l.b16 %v777
        %v818 = vunpack.c.l.b16 %v778
        %v819 = vunpack.c.l.b16 %v779
        %v820 = vunpack.c.l.b16 %v780
        %v821 = vunpack.c.l.b16 %v781
        %v822 = vunpack.c.l.b16 %v782
        %v823 = vunpack.c.l.b16 %v783
        %v824 = vunpack.c.l.b16 %v784
        %v825 = vunpack.c.l.b16 %v785
        %v826 = vunpack.c.l.b16 %v786
        %v827 = vunpack.c.l.b16 %v787
        %v828 = vunpack.c.l.b16 %v788
        %v829 = vunpack.c.l.b16 %v789
        %v830 = vpack.c.b16 %v815, %v814
        %v831 = vpack.c.b16 %v817, %v816
        %v832 = vpack.c.b16 %v819, %v818
        %v833 = vpack.c.b16 %v821, %v820
        %v834 = vpack.c.b16 %v823, %v822
        %v835 = vpack.c.b16 %v825, %v824
        %v836 = vpack.c.b16 %v827, %v826
        %v837 = vpack.c.b16 %v829, %v828
        %846 = vmatprep.subr.bf16.mxu0 0
        %847 = vmatpush1.bf16.msra.mxu0 %v830
        %848 = vmatprep.subr.bf16.mxu0 0
        %849 = vmatpush1.bf16.msra.mxu0 %v831
        %850 = vmatprep.subr.bf16.mxu0 0
        %851 = vmatpush1.bf16.msra.mxu0 %v832
        %852 = vmatprep.subr.bf16.mxu0 0
        %853 = vmatpush1.bf16.msra.mxu0 %v833
        %854 = vmatprep.subr.bf16.mxu0 0
        %855 = vmatpush1.bf16.msra.mxu0 %v834
        %856 = vmatprep.subr.bf16.mxu0 0
        %857 = vmatpush1.bf16.msra.mxu0 %v835
        %858 = vmatprep.subr.bf16.mxu0 0
        %859 = vmatpush1.bf16.msra.mxu0 %v836
        %860 = vmatprep.subr.bf16.mxu0 0
        %861 = vmatpush1.bf16.msra.mxu0 %v837
        %862 = vmatprep.subr.bf16.mxu0 0
        %863 = vmatpush1.bf16.msra.mxu0 0
        %864 = vmatprep.subr.bf16.mxu0 0
        %865 = vmatpush1.bf16.msra.mxu0 0
        %866 = vmatprep.subr.bf16.mxu0 0
        %867 = vmatpush1.bf16.msra.mxu0 0
        %868 = vmatprep.subr.bf16.mxu0 0
        %869 = vmatpush1.bf16.msra.mxu0 0
        %870 = vmatprep.subr.bf16.mxu0 0
        %871 = vmatpush1.bf16.msra.mxu0 0
        %872 = vmatprep.subr.bf16.mxu0 0
        %873 = vmatpush1.bf16.msra.mxu0 0
        %874 = vmatprep.subr.bf16.mxu0 0
        %875 = vmatpush1.bf16.msra.mxu0 0
        %876 = vmatprep.subr.bf16.mxu0 0
        %877 = vmatpush1.bf16.msra.mxu0 0
        %878 = vmatprep.mubr.bf16.mxu0 0
        %879 = vmatmul.mubr.bf16.gmra.mrb[0].mxu0 %v790
        %v880 = vpop.f32.mrb[0].mxu0
        %v881 = vadd.f32 %v796, %v880
        %v882 = vpop.f32.mrb[0].mxu0
        %v883 = vpop.f32.mrb[0].mxu0
        %v884 = vadd.f32 %v796, %v883
        %v885 = vpop.f32.mrb[0].mxu0
        %886 = vdwg.mxu0
        %v887 = vld [vmem:[#allocation8] sm:$0xf]
        %v888 = vld [vmem:[#allocation8 + $0x4] sm:$0xf]
        %v889 = vld [vmem:[#allocation8 + $0x8] sm:$0xf]
        %v890 = vld [vmem:[#allocation8 + $0xc] sm:$0xf]
        %v891 = vld [vmem:[#allocation8 + $0x10] sm:$0xf]
        %v892 = vld [vmem:[#allocation8 + $0x14] sm:$0xf]
        %v893 = vld [vmem:[#allocation8 + $0x18] sm:$0xf]
        %v894 = vld [vmem:[#allocation8 + $0x1c] sm:$0xf]
        %v895 = vld [vmem:[#allocation8 + $0x20] sm:$0xf]
        %v896 = vld [vmem:[#allocation8 + $0x24] sm:$0xf]
        %v897 = vld [vmem:[#allocation8 + $0x28] sm:$0xf]
        %v898 = vld [vmem:[#allocation8 + $0x2c] sm:$0xf]
        %v899 = vld [vmem:[#allocation8 + $0x30] sm:$0xf]
        %v900 = vld [vmem:[#allocation8 + $0x34] sm:$0xf]
        %v901 = vld [vmem:[#allocation8 + $0x38] sm:$0xf]
        %v902 = vld [vmem:[#allocation8 + $0x3c] sm:$0xf]
        %v903 = vpack.c.bf16 %v771, %v770
        %v904 = vpack.c.bf16 %v773, %v772
        %v905 = vld [vmem:[%s5] sm:$0x1]
        %v907 = vlaneseq
        %v908 = vshrl.u32 %v907, 7
        %v909 = vsub.s32 0, %v908
        %v910 = vrot.slane %v905, %v909
        %v928 = vunpack.c.l.b16 %v887
        %v929 = vunpack.c.l.b16 %v888
        %v930 = vunpack.c.l.b16 %v889
        %v931 = vunpack.c.l.b16 %v890
        %v932 = vunpack.c.l.b16 %v891
        %v933 = vunpack.c.l.b16 %v892
        %v934 = vunpack.c.l.b16 %v893
        %v935 = vunpack.c.l.b16 %v894
        %v936 = vunpack.c.l.b16 %v895
        %v937 = vunpack.c.l.b16 %v896
        %v938 = vunpack.c.l.b16 %v897
        %v939 = vunpack.c.l.b16 %v898
        %v940 = vunpack.c.l.b16 %v899
        %v941 = vunpack.c.l.b16 %v900
        %v942 = vunpack.c.l.b16 %v901
        %v943 = vunpack.c.l.b16 %v902
        %v944 = vpack.c.b16 %v929, %v928
        %v945 = vpack.c.b16 %v931, %v930
        %v946 = vpack.c.b16 %v933, %v932
        %v947 = vpack.c.b16 %v935, %v934
        %v948 = vpack.c.b16 %v937, %v936
        %v949 = vpack.c.b16 %v939, %v938
        %v950 = vpack.c.b16 %v941, %v940
        %v951 = vpack.c.b16 %v943, %v942
        %960 = vmatprep.subr.bf16.mxu0 0
        %961 = vmatpush1.bf16.msra.mxu0 %v944
        %962 = vmatprep.subr.bf16.mxu0 0
        %963 = vmatpush1.bf16.msra.mxu0 %v945
        %964 = vmatprep.subr.bf16.mxu0 0
        %965 = vmatpush1.bf16.msra.mxu0 %v946
        %966 = vmatprep.subr.bf16.mxu0 0
        %967 = vmatpush1.bf16.msra.mxu0 %v947
        %968 = vmatprep.subr.bf16.mxu0 0
        %969 = vmatpush1.bf16.msra.mxu0 %v948
        %970 = vmatprep.subr.bf16.mxu0 0
        %971 = vmatpush1.bf16.msra.mxu0 %v949
        %972 = vmatprep.subr.bf16.mxu0 0
        %973 = vmatpush1.bf16.msra.mxu0 %v950
        %974 = vmatprep.subr.bf16.mxu0 0
        %975 = vmatpush1.bf16.msra.mxu0 %v951
        %976 = vmatprep.subr.bf16.mxu0 0
        %977 = vmatpush1.bf16.msra.mxu0 0
        %978 = vmatprep.subr.bf16.mxu0 0
        %979 = vmatpush1.bf16.msra.mxu0 0
        %980 = vmatprep.subr.bf16.mxu0 0
        %981 = vmatpush1.bf16.msra.mxu0 0
        %982 = vmatprep.subr.bf16.mxu0 0
        %983 = vmatpush1.bf16.msra.mxu0 0
        %984 = vmatprep.subr.bf16.mxu0 0
        %985 = vmatpush1.bf16.msra.mxu0 0
        %986 = vmatprep.subr.bf16.mxu0 0
        %987 = vmatpush1.bf16.msra.mxu0 0
        %988 = vmatprep.subr.bf16.mxu0 0
        %989 = vmatpush1.bf16.msra.mxu0 0
        %990 = vmatprep.subr.bf16.mxu0 0
        %991 = vmatpush1.bf16.msra.mxu0 0
        %992 = vmatprep.mubr.bf16.mxu0 0
        %993 = vmatmul.mubr.bf16.gmra.mrb[0].mxu0 %v903
        %v994 = vpop.f32.mrb[0].mxu0
        %v995 = vadd.f32 %v910, %v994
        %v996 = vpop.f32.mrb[0].mxu0
        %v997 = vpop.f32.mrb[0].mxu0
        %v998 = vadd.f32 %v910, %v997
        %v999 = vpop.f32.mrb[0].mxu0
        %1000 = vmatprep.mubr.bf16.mxu0 0
        %1001 = vmatmul.mubr.bf16.gmra.mrb[0].mxu0 %v904
        %v1002 = vpop.f32.mrb[0].mxu0
        %v1003 = vadd.f32 %v910, %v1002
        %v1004 = vpop.f32.mrb[0].mxu0
        %v1005 = vpop.f32.mrb[0].mxu0
        %v1006 = vadd.f32 %v910, %v1005
        %v1007 = vpop.f32.mrb[0].mxu0
        %1008 = vdwg.mxu0
        %v1009 = vld [vmem:[#allocation10] sm:$0xf]
        %v1010 = vld [vmem:[#allocation10 + $0x4] sm:$0xf]
        %v1011 = vld [vmem:[#allocation10 + $0x8] sm:$0xf]
        %v1012 = vld [vmem:[#allocation10 + $0xc] sm:$0xf]
        %v1013 = vld [vmem:[#allocation10 + $0x10] sm:$0xf]
        %v1014 = vld [vmem:[#allocation10 + $0x14] sm:$0xf]
        %v1015 = vld [vmem:[#allocation10 + $0x18] sm:$0xf]
        %v1016 = vld [vmem:[#allocation10 + $0x1c] sm:$0xf]
        %v1017 = vld [vmem:[#allocation10 + $0x20] sm:$0xf]
        %v1018 = vld [vmem:[#allocation10 + $0x24] sm:$0xf]
        %v1019 = vld [vmem:[#allocation10 + $0x28] sm:$0xf]
        %v1020 = vld [vmem:[#allocation10 + $0x2c] sm:$0xf]
        %v1021 = vld [vmem:[#allocation10 + $0x30] sm:$0xf]
        %v1022 = vld [vmem:[#allocation10 + $0x34] sm:$0xf]
        %v1023 = vld [vmem:[#allocation10 + $0x38] sm:$0xf]
        %v1024 = vld [vmem:[#allocation10 + $0x3c] sm:$0xf]
        %v1025 = vld [vmem:[%s7] sm:$0x1]
        %v1027 = vlaneseq
        %v1028 = vshrl.u32 %v1027, 7
        %v1029 = vsub.s32 0, %v1028
        %v1030 = vrot.slane %v1025, %v1029
        %v1048 = vunpack.c.l.b16 %v1009
        %v1049 = vunpack.c.l.b16 %v1010
        %v1050 = vunpack.c.l.b16 %v1011
        %v1051 = vunpack.c.l.b16 %v1012
        %v1052 = vunpack.c.l.b16 %v1013
        %v1053 = vunpack.c.l.b16 %v1014
        %v1054 = vunpack.c.l.b16 %v1015
        %v1055 = vunpack.c.l.b16 %v1016
        %v1056 = vunpack.c.l.b16 %v1017
        %v1057 = vunpack.c.l.b16 %v1018
        %v1058 = vunpack.c.l.b16 %v1019
        %v1059 = vunpack.c.l.b16 %v1020
        %v1060 = vunpack.c.l.b16 %v1021
        %v1061 = vunpack.c.l.b16 %v1022
        %v1062 = vunpack.c.l.b16 %v1023
        %v1063 = vunpack.c.l.b16 %v1024
        %v1064 = vpack.c.b16 %v1049, %v1048
        %v1065 = vpack.c.b16 %v1051, %v1050
        %v1066 = vpack.c.b16 %v1053, %v1052
        %v1067 = vpack.c.b16 %v1055, %v1054
        %v1068 = vpack.c.b16 %v1057, %v1056
        %v1069 = vpack.c.b16 %v1059, %v1058
        %v1070 = vpack.c.b16 %v1061, %v1060
        %v1071 = vpack.c.b16 %v1063, %v1062
        %1080 = vmatprep.subr.bf16.mxu0 0
        %1081 = vmatpush1.bf16.msra.mxu0 %v1064
        %1082 = vmatprep.subr.bf16.mxu0 0
        %1083 = vmatpush1.bf16.msra.mxu0 %v1065
        %1084 = vmatprep.subr.bf16.mxu0 0
        %1085 = vmatpush1.bf16.msra.mxu0 %v1066
        %1086 = vmatprep.subr.bf16.mxu0 0
        %1087 = vmatpush1.bf16.msra.mxu0 %v1067
        %1088 = vmatprep.subr.bf16.mxu0 0
        %1089 = vmatpush1.bf16.msra.mxu0 %v1068
        %1090 = vmatprep.subr.bf16.mxu0 0
        %1091 = vmatpush1.bf16.msra.mxu0 %v1069
        %1092 = vmatprep.subr.bf16.mxu0 0
        %1093 = vmatpush1.bf16.msra.mxu0 %v1070
        %1094 = vmatprep.subr.bf16.mxu0 0
        %1095 = vmatpush1.bf16.msra.mxu0 %v1071
        %1096 = vmatprep.subr.bf16.mxu0 0
        %1097 = vmatpush1.bf16.msra.mxu0 0
        %1098 = vmatprep.subr.bf16.mxu0 0
        %1099 = vmatpush1.bf16.msra.mxu0 0
        %1100 = vmatprep.subr.bf16.mxu0 0
        %1101 = vmatpush1.bf16.msra.mxu0 0
        %1102 = vmatprep.subr.bf16.mxu0 0
        %1103 = vmatpush1.bf16.msra.mxu0 0
        %1104 = vmatprep.subr.bf16.mxu0 0
        %1105 = vmatpush1.bf16.msra.mxu0 0
        %1106 = vmatprep.subr.bf16.mxu0 0
        %1107 = vmatpush1.bf16.msra.mxu0 0
        %1108 = vmatprep.subr.bf16.mxu0 0
        %1109 = vmatpush1.bf16.msra.mxu0 0
        %1110 = vmatprep.subr.bf16.mxu0 0
        %1111 = vmatpush1.bf16.msra.mxu0 0
        %1112 = vmatprep.mubr.bf16.mxu0 0
        %1113 = vmatmul.mubr.bf16.gmra.mrb[0].mxu0 %v903
        %v1114 = vpop.f32.mrb[0].mxu0
        %v1115 = vadd.f32 %v1030, %v1114
        %v1116 = vpop.f32.mrb[0].mxu0
        %v1117 = vpop.f32.mrb[0].mxu0
        %v1118 = vadd.f32 %v1030, %v1117
        %v1119 = vpop.f32.mrb[0].mxu0
        %1120 = vmatprep.mubr.bf16.mxu0 0
        %1121 = vmatmul.mubr.bf16.gmra.mrb[0].mxu0 %v904
        %v1122 = vpop.f32.mrb[0].mxu0
        %v1123 = vadd.f32 %v1030, %v1122
        %v1124 = vpop.f32.mrb[0].mxu0
        %v1125 = vpop.f32.mrb[0].mxu0
        %v1126 = vadd.f32 %v1030, %v1125
        %v1127 = vpop.f32.mrb[0].mxu0
        %1128 = vdwg.mxu0
        %v1129 = vpack.c.bf16 %v881, %v881
        %v1130 = vpack.c.bf16 %v884, %v884
        %v1131 = vpack.c.bf16 %v998, %v995
        %v1132 = vpack.c.bf16 %v1006, %v1003
        %v1133 = vpack.c.bf16 %v1118, %v1115
        %v1134 = vpack.c.bf16 %v1126, %v1123
        %vm1135 = vcmask 261120
        %v1137 = vsel %vm1135, %v1129, 0
        %v1140 = vsel %vm1135, %v1131, 0
        %1142 = vmatprep.subr.bf16.mxu0 0
        %1143 = vmatpush1.bf16.xpose.msra.mxu0 %v1140
        %1144 = vmatprep.subr.bf16.mxu0 0
        %1145 = vmatpush1.bf16.xpose.msra.mxu0 0
        %1146 = vmatprep.subr.bf16.mxu0 0
        %1147 = vmatpush1.bf16.xpose.msra.mxu0 0
        %1148 = vmatprep.subr.bf16.mxu0 0
        %1149 = vmatpush1.bf16.xpose.msra.mxu0 0
        %1150 = vmatprep.subr.bf16.mxu0 0
        %1151 = vmatpush1.bf16.xpose.msra.mxu0 0
        %1152 = vmatprep.subr.bf16.mxu0 0
        %1153 = vmatpush1.bf16.xpose.msra.mxu0 0
        %1154 = vmatprep.subr.bf16.mxu0 0
        %1155 = vmatpush1.bf16.xpose.msra.mxu0 0
        %1156 = vmatprep.subr.bf16.mxu0 0
        %1157 = vmatpush1.bf16.xpose.msra.mxu0 0
        %1158 = vmatprep.subr.bf16.mxu0 0
        %1159 = vmatpush1.bf16.xpose.msra.mxu0 0
        %1160 = vmatprep.subr.bf16.mxu0 0
        %1161 = vmatpush1.bf16.xpose.msra.mxu0 0
        %1162 = vmatprep.subr.bf16.mxu0 0
        %1163 = vmatpush1.bf16.xpose.msra.mxu0 0
        %1164 = vmatprep.subr.bf16.mxu0 0
        %1165 = vmatpush1.bf16.xpose.msra.mxu0 0
        %1166 = vmatprep.subr.bf16.mxu0 0
        %1167 = vmatpush1.bf16.xpose.msra.mxu0 0
        %1168 = vmatprep.subr.bf16.mxu0 0
        %1169 = vmatpush1.bf16.xpose.msra.mxu0 0
        %1170 = vmatprep.subr.bf16.mxu0 0
        %1171 = vmatpush1.bf16.xpose.msra.mxu0 0
        %1172 = vmatprep.subr.bf16.mxu0 0
        %1173 = vmatpush1.bf16.xpose.msra.mxu0 0
        %1174 = vmatprep.mubr.bf16.mxu0 0
        %1175 = vmatmul.mubr.bf16.gmra.mrb[0].mxu0 %v1137
        %v1176 = vpop.f32.mrb[0].mxu0
        %v1177 = vadd.f32 0.0, %v1176
        %v1178 = vpop.f32.mrb[0].mxu0
        %v1179 = vpop.f32.mrb[0].mxu0
        %v1180 = vpop.f32.mrb[0].mxu0
        %1181 = vdwg.mxu0
        %v1183 = vsel %vm1135, %v1130, 0
        %v1186 = vsel %vm1135, %v1132, 0
        %1188 = vmatprep.subr.bf16.mxu0 0
        %1189 = vmatpush1.bf16.xpose.msra.mxu0 %v1186
        %1190 = vmatprep.subr.bf16.mxu0 0
        %1191 = vmatpush1.bf16.xpose.msra.mxu0 0
        %1192 = vmatprep.subr.bf16.mxu0 0
        %1193 = vmatpush1.bf16.xpose.msra.mxu0 0
        %1194 = vmatprep.subr.bf16.mxu0 0
        %1195 = vmatpush1.bf16.xpose.msra.mxu0 0
        %1196 = vmatprep.subr.bf16.mxu0 0
        %1197 = vmatpush1.bf16.xpose.msra.mxu0 0
        %1198 = vmatprep.subr.bf16.mxu0 0
        %1199 = vmatpush1.bf16.xpose.msra.mxu0 0
        %1200 = vmatprep.subr.bf16.mxu0 0
        %1201 = vmatpush1.bf16.xpose.msra.mxu0 0
        %1202 = vmatprep.subr.bf16.mxu0 0
        %1203 = vmatpush1.bf16.xpose.msra.mxu0 0
        %1204 = vmatprep.subr.bf16.mxu0 0
        %1205 = vmatpush1.bf16.xpose.msra.mxu0 0
        %1206 = vmatprep.subr.bf16.mxu0 0
        %1207 = vmatpush1.bf16.xpose.msra.mxu0 0
        %1208 = vmatprep.subr.bf16.mxu0 0
        %1209 = vmatpush1.bf16.xpose.msra.mxu0 0
        %1210 = vmatprep.subr.bf16.mxu0 0
        %1211 = vmatpush1.bf16.xpose.msra.mxu0 0
        %1212 = vmatprep.subr.bf16.mxu0 0
        %1213 = vmatpush1.bf16.xpose.msra.mxu0 0
        %1214 = vmatprep.subr.bf16.mxu0 0
        %1215 = vmatpush1.bf16.xpose.msra.mxu0 0
        %1216 = vmatprep.subr.bf16.mxu0 0
        %1217 = vmatpush1.bf16.xpose.msra.mxu0 0
        %1218 = vmatprep.subr.bf16.mxu0 0
        %1219 = vmatpush1.bf16.xpose.msra.mxu0 0
        %1220 = vmatprep.mubr.bf16.mxu0 0
        %1221 = vmatmul.mubr.bf16.gmra.mrb[0].mxu0 %v1183
        %v1222 = vpop.f32.mrb[0].mxu0
        %v1223 = vadd.f32 0.0, %v1222
        %v1224 = vpop.f32.mrb[0].mxu0
        %v1225 = vpop.f32.mrb[0].mxu0
        %v1226 = vpop.f32.mrb[0].mxu0
        %1227 = vdwg.mxu0
        %v1228 = vmul.f32 %v1177, 0.17677669
        %v1229 = vmul.f32 %v1223, 0.17677669
        %vm1230 = vcmask 130048
        %v1231 = vsel %vm1230, %v1228, -inf
        %1232 = vmax.xlane.f32.xlu0 %v1231
        %v1233 = vpop.xlane.xlu0 %1232
        %v1234 = vsel %vm1230, %v1229, -inf
        %1235 = vmax.xlane.f32.xlu0 %v1234
        %v1236 = vpop.xlane.xlu0 %1235
        %v1237 = vsub.f32 %v1228, %v1233
        %v1238 = vsub.f32 %v1229, %v1236
        %v1239 = vmul.f32 %v1237, 1.442695
        %v1240 = vpow.pop %v1239
        %v1241 = vmul.f32 %v1238, 1.442695
        %v1242 = vpow.pop %v1241
        %v1243 = vsel %vm1230, %v1240, 0.0
        %1244 = vadd.xlane.f32.xlu0 %v1243
        %v1245 = vpop.xlane.xlu0 %1244
        %v1246 = vsel %vm1230, %v1242, 0.0
        %1247 = vadd.xlane.f32.xlu0 %v1246
        %v1248 = vpop.xlane.xlu0 %1247
        %v1249 = vrcp.pop %v1245
        %v1250 = vrcp.pop %v1248
        %v1251 = vmul.f32 %v1245, %v1249
        %v1252 = vmul.f32 %v1248, %v1250
        %v1253 = vsub.f32 2.0, %v1251
        %v1254 = vsub.f32 2.0, %v1252
        %v1255 = vmul.f32 %v1249, %v1253
        %v1256 = vmul.f32 %v1250, %v1254
        %v1257 = vmul.f32 %v1240, %v1255
        %v1258 = vmul.f32 %v1242, %v1256
        %v1259 = vpack.c.bf16 %v1257, %v1257
        %vm1260 = vcmask 125952
        %1261 = vst.msk [vmem:[%s762] sm:$0xf] %vm1260, %v1259
        %v1262 = vpack.c.bf16 %v1258, %v1258
        %s1263 = scalar_lea.vmem %s762, 16 [#allocation17]
        %1264 = vst.msk [vmem:[%s1263] sm:$0xf] %vm1260, %v1262
        %v1266 = vsel %vm1230, %v1259, 0
        %1268 = vmatprep.subr.bf16.mxu0 0
        %1269 = vmatpush1.bf16.msra.mxu0 %v1133
        %1270 = vmatprep.subr.bf16.mxu0 0
        %1271 = vmatpush1.bf16.msra.mxu0 0
        %1272 = vmatprep.subr.bf16.mxu0 0
        %1273 = vmatpush1.bf16.msra.mxu0 0
        %1274 = vmatprep.subr.bf16.mxu0 0
        %1275 = vmatpush1.bf16.msra.mxu0 0
        %1276 = vmatprep.subr.bf16.mxu0 0
        %1277 = vmatpush1.bf16.msra.mxu0 0
        %1278 = vmatprep.subr.bf16.mxu0 0
        %1279 = vmatpush1.bf16.msra.mxu0 0
        %1280 = vmatprep.subr.bf16.mxu0 0
        %1281 = vmatpush1.bf16.msra.mxu0 0
        %1282 = vmatprep.subr.bf16.mxu0 0
        %1283 = vmatpush1.bf16.msra.mxu0 0
        %1284 = vmatprep.subr.bf16.mxu0 0
        %1285 = vmatpush1.bf16.msra.mxu0 0
        %1286 = vmatprep.subr.bf16.mxu0 0
        %1287 = vmatpush1.bf16.msra.mxu0 0
        %1288 = vmatprep.subr.bf16.mxu0 0
        %1289 = vmatpush1.bf16.msra.mxu0 0
        %1290 = vmatprep.subr.bf16.mxu0 0
        %1291 = vmatpush1.bf16.msra.mxu0 0
        %1292 = vmatprep.subr.bf16.mxu0 0
        %1293 = vmatpush1.bf16.msra.mxu0 0
        %1294 = vmatprep.subr.bf16.mxu0 0
        %1295 = vmatpush1.bf16.msra.mxu0 0
        %1296 = vmatprep.subr.bf16.mxu0 0
        %1297 = vmatpush1.bf16.msra.mxu0 0
        %1298 = vmatprep.subr.bf16.mxu0 0
        %1299 = vmatpush1.bf16.msra.mxu0 0
        %1300 = vmatprep.mubr.bf16.mxu0 0
        %1301 = vmatmul.mubr.bf16.gmra.mrb[0].mxu0 %v1266
        %v1302 = vpop.f32.mrb[0].mxu0
        %v1303 = vadd.f32 0.0, %v1302
        %v1304 = vpop.f32.mrb[0].mxu0
        %v1305 = vpop.f32.mrb[0].mxu0
        %v1306 = vpop.f32.mrb[0].mxu0
        %1307 = vdwg.mxu0
        %v1309 = vsel %vm1230, %v1262, 0
        %1311 = vmatprep.subr.bf16.mxu0 0
        %1312 = vmatpush1.bf16.msra.mxu0 %v1134
        %1313 = vmatprep.subr.bf16.mxu0 0
        %1314 = vmatpush1.bf16.msra.mxu0 0
        %1315 = vmatprep.subr.bf16.mxu0 0
        %1316 = vmatpush1.bf16.msra.mxu0 0
        %1317 = vmatprep.subr.bf16.mxu0 0
        %1318 = vmatpush1.bf16.msra.mxu0 0
        %1319 = vmatprep.subr.bf16.mxu0 0
        %1320 = vmatpush1.bf16.msra.mxu0 0
        %1321 = vmatprep.subr.bf16.mxu0 0
        %1322 = vmatpush1.bf16.msra.mxu0 0
        %1323 = vmatprep.subr.bf16.mxu0 0
        %1324 = vmatpush1.bf16.msra.mxu0 0
        %1325 = vmatprep.subr.bf16.mxu0 0
        %1326 = vmatpush1.bf16.msra.mxu0 0
        %1327 = vmatprep.subr.bf16.mxu0 0
        %1328 = vmatpush1.bf16.msra.mxu0 0
        %1329 = vmatprep.subr.bf16.mxu0 0
        %1330 = vmatpush1.bf16.msra.mxu0 0
        %1331 = vmatprep.subr.bf16.mxu0 0
        %1332 = vmatpush1.bf16.msra.mxu0 0
        %1333 = vmatprep.subr.bf16.mxu0 0
        %1334 = vmatpush1.bf16.msra.mxu0 0
        %1335 = vmatprep.subr.bf16.mxu0 0
        %1336 = vmatpush1.bf16.msra.mxu0 0
        %1337 = vmatprep.subr.bf16.mxu0 0
        %1338 = vmatpush1.bf16.msra.mxu0 0
        %1339 = vmatprep.subr.bf16.mxu0 0
        %1340 = vmatpush1.bf16.msra.mxu0 0
        %1341 = vmatprep.subr.bf16.mxu0 0
        %1342 = vmatpush1.bf16.msra.mxu0 0
        %1343 = vmatprep.mubr.bf16.mxu0 0
        %1344 = vmatmul.mubr.bf16.gmra.mrb[0].mxu0 %v1309
        %v1345 = vpop.f32.mrb[0].mxu0
        %v1346 = vadd.f32 0.0, %v1345
        %v1347 = vpop.f32.mrb[0].mxu0
        %v1348 = vpop.f32.mrb[0].mxu0
        %v1349 = vpop.f32.mrb[0].mxu0
        %1350 = vdwg.mxu0
        %v1351 = vld [vmem:[#allocation11] sm:$0xf]
        %v1352 = vld [vmem:[#allocation11 + $0x4] sm:$0xf]
        %v1353 = vld [vmem:[#allocation11 + $0x8] sm:$0xf]
        %v1354 = vld [vmem:[#allocation11 + $0xc] sm:$0xf]
        %v1355 = vpack.c.bf16 %v1346, %v1303
        %1357 = vrot.lane.b32.xlu0 %v1129, 96
        %v1358 = vpop.permute.xlu0 %1357
        %1360 = vrot.lane.b32.xlu0 %v1131, 96
        %v1361 = vpop.permute.xlu0 %1360
        %v1363 = vsel %vm1135, %v1358, 0
        %v1366 = vsel %vm1135, %v1361, 0
        %1368 = vmatprep.subr.bf16.mxu0 0
        %1369 = vmatpush1.bf16.xpose.msra.mxu0 %v1366
        %1370 = vmatprep.subr.bf16.mxu0 0
        %1371 = vmatpush1.bf16.xpose.msra.mxu0 0
        %1372 = vmatprep.subr.bf16.mxu0 0
        %1373 = vmatpush1.bf16.xpose.msra.mxu0 0
        %1374 = vmatprep.subr.bf16.mxu0 0
        %1375 = vmatpush1.bf16.xpose.msra.mxu0 0
        %1376 = vmatprep.subr.bf16.mxu0 0
        %1377 = vmatpush1.bf16.xpose.msra.mxu0 0
        %1378 = vmatprep.subr.bf16.mxu0 0
        %1379 = vmatpush1.bf16.xpose.msra.mxu0 0
        %1380 = vmatprep.subr.bf16.mxu0 0
        %1381 = vmatpush1.bf16.xpose.msra.mxu0 0
        %1382 = vmatprep.subr.bf16.mxu0 0
        %1383 = vmatpush1.bf16.xpose.msra.mxu0 0
        %1384 = vmatprep.subr.bf16.mxu0 0
        %1385 = vmatpush1.bf16.xpose.msra.mxu0 0
        %1386 = vmatprep.subr.bf16.mxu0 0
        %1387 = vmatpush1.bf16.xpose.msra.mxu0 0
        %1388 = vmatprep.subr.bf16.mxu0 0
        %1389 = vmatpush1.bf16.xpose.msra.mxu0 0
        %1390 = vmatprep.subr.bf16.mxu0 0
        %1391 = vmatpush1.bf16.xpose.msra.mxu0 0
        %1392 = vmatprep.subr.bf16.mxu0 0
        %1393 = vmatpush1.bf16.xpose.msra.mxu0 0
        %1394 = vmatprep.subr.bf16.mxu0 0
        %1395 = vmatpush1.bf16.xpose.msra.mxu0 0
        %1396 = vmatprep.subr.bf16.mxu0 0
        %1397 = vmatpush1.bf16.xpose.msra.mxu0 0
        %1398 = vmatprep.subr.bf16.mxu0 0
        %1399 = vmatpush1.bf16.xpose.msra.mxu0 0
        %1400 = vmatprep.mubr.bf16.mxu0 0
        %1401 = vmatmul.mubr.bf16.gmra.mrb[0].mxu0 %v1363
        %v1402 = vpop.f32.mrb[0].mxu0
        %v1403 = vadd.f32 0.0, %v1402
        %v1404 = vpop.f32.mrb[0].mxu0
        %v1405 = vpop.f32.mrb[0].mxu0
        %v1406 = vpop.f32.mrb[0].mxu0
        %1407 = vdwg.mxu0
        %1409 = vrot.lane.b32.xlu0 %v1130, 96
        %v1410 = vpop.permute.xlu0 %1409
        %1412 = vrot.lane.b32.xlu0 %v1132, 96
        %v1413 = vpop.permute.xlu0 %1412
        %v1415 = vsel %vm1135, %v1410, 0
        %v1418 = vsel %vm1135, %v1413, 0
        %1420 = vmatprep.subr.bf16.mxu0 0
        %1421 = vmatpush1.bf16.xpose.msra.mxu0 %v1418
        %1422 = vmatprep.subr.bf16.mxu0 0
        %1423 = vmatpush1.bf16.xpose.msra.mxu0 0
        %1424 = vmatprep.subr.bf16.mxu0 0
        %1425 = vmatpush1.bf16.xpose.msra.mxu0 0
        %1426 = vmatprep.subr.bf16.mxu0 0
        %1427 = vmatpush1.bf16.xpose.msra.mxu0 0
        %1428 = vmatprep.subr.bf16.mxu0 0
        %1429 = vmatpush1.bf16.xpose.msra.mxu0 0
        %1430 = vmatprep.subr.bf16.mxu0 0
        %1431 = vmatpush1.bf16.xpose.msra.mxu0 0
        %1432 = vmatprep.subr.bf16.mxu0 0
        %1433 = vmatpush1.bf16.xpose.msra.mxu0 0
        %1434 = vmatprep.subr.bf16.mxu0 0
        %1435 = vmatpush1.bf16.xpose.msra.mxu0 0
        %1436 = vmatprep.subr.bf16.mxu0 0
        %1437 = vmatpush1.bf16.xpose.msra.mxu0 0
        %1438 = vmatprep.subr.bf16.mxu0 0
        %1439 = vmatpush1.bf16.xpose.msra.mxu0 0
        %1440 = vmatprep.subr.bf16.mxu0 0
        %1441 = vmatpush1.bf16.xpose.msra.mxu0 0
        %1442 = vmatprep.subr.bf16.mxu0 0
        %1443 = vmatpush1.bf16.xpose.msra.mxu0 0
        %1444 = vmatprep.subr.bf16.mxu0 0
        %1445 = vmatpush1.bf16.xpose.msra.mxu0 0
        %1446 = vmatprep.subr.bf16.mxu0 0
        %1447 = vmatpush1.bf16.xpose.msra.mxu0 0
        %1448 = vmatprep.subr.bf16.mxu0 0
        %1449 = vmatpush1.bf16.xpose.msra.mxu0 0
        %1450 = vmatprep.subr.bf16.mxu0 0
        %1451 = vmatpush1.bf16.xpose.msra.mxu0 0
        %1452 = vmatprep.mubr.bf16.mxu0 0
        %1453 = vmatmul.mubr.bf16.gmra.mrb[0].mxu0 %v1415
        %v1454 = vpop.f32.mrb[0].mxu0
        %v1455 = vadd.f32 0.0, %v1454
        %v1456 = vpop.f32.mrb[0].mxu0
        %v1457 = vpop.f32.mrb[0].mxu0
        %v1458 = vpop.f32.mrb[0].mxu0
        %1459 = vdwg.mxu0
        %v1460 = vmul.f32 %v1403, 0.17677669
        %v1461 = vmul.f32 %v1455, 0.17677669
        %v1462 = vsel %vm1230, %v1460, -inf
        %1463 = vmax.xlane.f32.xlu0 %v1462
        %v1464 = vpop.xlane.xlu0 %1463
        %v1465 = vsel %vm1230, %v1461, -inf
        %1466 = vmax.xlane.f32.xlu0 %v1465
        %v1467 = vpop.xlane.xlu0 %1466
        %v1468 = vsub.f32 %v1460, %v1464
        %v1469 = vsub.f32 %v1461, %v1467
        %v1470 = vmul.f32 %v1468, 1.442695
        %v1471 = vpow.pop %v1470
        %v1472 = vmul.f32 %v1469, 1.442695
        %v1473 = vpow.pop %v1472
        %v1474 = vsel %vm1230, %v1471, 0.0
        %1475 = vadd.xlane.f32.xlu0 %v1474
        %v1476 = vpop.xlane.xlu0 %1475
        %v1477 = vsel %vm1230, %v1473, 0.0
        %1478 = vadd.xlane.f32.xlu0 %v1477
        %v1479 = vpop.xlane.xlu0 %1478
        %v1480 = vrcp.pop %v1476
        %v1481 = vrcp.pop %v1479
        %v1482 = vmul.f32 %v1476, %v1480
        %v1483 = vmul.f32 %v1479, %v1481
        %v1484 = vsub.f32 2.0, %v1482
        %v1485 = vsub.f32 2.0, %v1483
        %v1486 = vmul.f32 %v1480, %v1484
        %v1487 = vmul.f32 %v1481, %v1485
        %v1488 = vmul.f32 %v1471, %v1486
        %v1489 = vmul.f32 %v1473, %v1487
        %v1490 = vpack.c.bf16 %v1488, %v1488
        %s1491 = scalar_lea.vmem %s762, 4 [#allocation17]
        %1492 = vst.msk [vmem:[%s1491] sm:$0xf] %vm1260, %v1490
        %v1493 = vpack.c.bf16 %v1489, %v1489
        %s1494 = scalar_lea.vmem %s762, 20 [#allocation17]
        %1495 = vst.msk [vmem:[%s1494] sm:$0xf] %vm1260, %v1493
        %1497 = vrot.lane.b32.xlu0 %v1133, 96
        %v1498 = vpop.permute.xlu0 %1497
        %v1501 = vsel %vm1230, %v1490, 0
        %1503 = vmatprep.subr.bf16.mxu0 0
        %1504 = vmatpush1.bf16.msra.mxu0 %v1498
        %1505 = vmatprep.subr.bf16.mxu0 0
        %1506 = vmatpush1.bf16.msra.mxu0 0
        %1507 = vmatprep.subr.bf16.mxu0 0
        %1508 = vmatpush1.bf16.msra.mxu0 0
        %1509 = vmatprep.subr.bf16.mxu0 0
        %1510 = vmatpush1.bf16.msra.mxu0 0
        %1511 = vmatprep.subr.bf16.mxu0 0
        %1512 = vmatpush1.bf16.msra.mxu0 0
        %1513 = vmatprep.subr.bf16.mxu0 0
        %1514 = vmatpush1.bf16.msra.mxu0 0
        %1515 = vmatprep.subr.bf16.mxu0 0
        %1516 = vmatpush1.bf16.msra.mxu0 0
        %1517 = vmatprep.subr.bf16.mxu0 0
        %1518 = vmatpush1.bf16.msra.mxu0 0
        %1519 = vmatprep.subr.bf16.mxu0 0
        %1520 = vmatpush1.bf16.msra.mxu0 0
        %1521 = vmatprep.subr.bf16.mxu0 0
        %1522 = vmatpush1.bf16.msra.mxu0 0
        %1523 = vmatprep.subr.bf16.mxu0 0
        %1524 = vmatpush1.bf16.msra.mxu0 0
        %1525 = vmatprep.subr.bf16.mxu0 0
        %1526 = vmatpush1.bf16.msra.mxu0 0
        %1527 = vmatprep.subr.bf16.mxu0 0
        %1528 = vmatpush1.bf16.msra.mxu0 0
        %1529 = vmatprep.subr.bf16.mxu0 0
        %1530 = vmatpush1.bf16.msra.mxu0 0
        %1531 = vmatprep.subr.bf16.mxu0 0
        %1532 = vmatpush1.bf16.msra.mxu0 0
        %1533 = vmatprep.subr.bf16.mxu0 0
        %1534 = vmatpush1.bf16.msra.mxu0 0
        %1535 = vmatprep.mubr.bf16.mxu0 0
        %1536 = vmatmul.mubr.bf16.gmra.mrb[0].mxu0 %v1501
        %v1537 = vpop.f32.mrb[0].mxu0
        %v1538 = vadd.f32 0.0, %v1537
        %v1539 = vpop.f32.mrb[0].mxu0
        %v1540 = vpop.f32.mrb[0].mxu0
        %v1541 = vpop.f32.mrb[0].mxu0
        %1542 = vdwg.mxu0
        %1544 = vrot.lane.b32.xlu0 %v1134, 96
        %v1545 = vpop.permute.xlu0 %1544
        %v1548 = vsel %vm1230, %v1493, 0
        %1550 = vmatprep.subr.bf16.mxu0 0
        %1551 = vmatpush1.bf16.msra.mxu0 %v1545
        %1552 = vmatprep.subr.bf16.mxu0 0
        %1553 = vmatpush1.bf16.msra.mxu0 0
        %1554 = vmatprep.subr.bf16.mxu0 0
        %1555 = vmatpush1.bf16.msra.mxu0 0
        %1556 = vmatprep.subr.bf16.mxu0 0
        %1557 = vmatpush1.bf16.msra.mxu0 0
        %1558 = vmatprep.subr.bf16.mxu0 0
        %1559 = vmatpush1.bf16.msra.mxu0 0
        %1560 = vmatprep.subr.bf16.mxu0 0
        %1561 = vmatpush1.bf16.msra.mxu0 0
        %1562 = vmatprep.subr.bf16.mxu0 0
        %1563 = vmatpush1.bf16.msra.mxu0 0
        %1564 = vmatprep.subr.bf16.mxu0 0
        %1565 = vmatpush1.bf16.msra.mxu0 0
        %1566 = vmatprep.subr.bf16.mxu0 0
        %1567 = vmatpush1.bf16.msra.mxu0 0
        %1568 = vmatprep.subr.bf16.mxu0 0
        %1569 = vmatpush1.bf16.msra.mxu0 0
        %1570 = vmatprep.subr.bf16.mxu0 0
        %1571 = vmatpush1.bf16.msra.mxu0 0
        %1572 = vmatprep.subr.bf16.mxu0 0
        %1573 = vmatpush1.bf16.msra.mxu0 0
        %1574 = vmatprep.subr.bf16.mxu0 0
        %1575 = vmatpush1.bf16.msra.mxu0 0
        %1576 = vmatprep.subr.bf16.mxu0 0
        %1577 = vmatpush1.bf16.msra.mxu0 0
        %1578 = vmatprep.subr.bf16.mxu0 0
        %1579 = vmatpush1.bf16.msra.mxu0 0
        %1580 = vmatprep.subr.bf16.mxu0 0
        %1581 = vmatpush1.bf16.msra.mxu0 0
        %1582 = vmatprep.mubr.bf16.mxu0 0
        %1583 = vmatmul.mubr.bf16.gmra.mrb[0].mxu0 %v1548
        %v1584 = vpop.f32.mrb[0].mxu0
        %v1585 = vadd.f32 0.0, %v1584
        %v1586 = vpop.f32.mrb[0].mxu0
        %v1587 = vpop.f32.mrb[0].mxu0
        %v1588 = vpop.f32.mrb[0].mxu0
        %1589 = vdwg.mxu0
        %v1590 = vld [vmem:[#allocation11 + $0x10] sm:$0xf]
        %v1591 = vld [vmem:[#allocation11 + $0x14] sm:$0xf]
        %v1592 = vld [vmem:[#allocation11 + $0x18] sm:$0xf]
        %v1593 = vld [vmem:[#allocation11 + $0x1c] sm:$0xf]
        %v1594 = vpack.c.bf16 %v1585, %v1538
        %v1599 = vunpack.c.l.b16 %v1590
        %v1600 = vunpack.c.l.b16 %v1591
        %v1601 = vunpack.c.l.b16 %v1592
        %v1602 = vunpack.c.l.b16 %v1593
        %v1603 = vpack.c.b16 %v1600, %v1599
        %v1604 = vpack.c.b16 %v1602, %v1601
        %v1608 = vsel %vm1135, %v1594, 0
        %1610 = vmatprep.subr.bf16.mxu0 0
        %1611 = vmatpush1.bf16.msra.mxu0 %v1603
        %1612 = vmatprep.subr.bf16.mxu0 0
        %1613 = vmatpush1.bf16.msra.mxu0 %v1604
        %1614 = vmatprep.subr.bf16.mxu0 0
        %1615 = vmatpush1.bf16.msra.mxu0 0
        %1616 = vmatprep.subr.bf16.mxu0 0
        %1617 = vmatpush1.bf16.msra.mxu0 0
        %1618 = vmatprep.subr.bf16.mxu0 0
        %1619 = vmatpush1.bf16.msra.mxu0 0
        %1620 = vmatprep.subr.bf16.mxu0 0
        %1621 = vmatpush1.bf16.msra.mxu0 0
        %1622 = vmatprep.subr.bf16.mxu0 0
        %1623 = vmatpush1.bf16.msra.mxu0 0
        %1624 = vmatprep.subr.bf16.mxu0 0
        %1625 = vmatpush1.bf16.msra.mxu0 0
        %1626 = vmatprep.subr.bf16.mxu0 0
        %1627 = vmatpush1.bf16.msra.mxu0 0
        %1628 = vmatprep.subr.bf16.mxu0 0
        %1629 = vmatpush1.bf16.msra.mxu0 0
        %1630 = vmatprep.subr.bf16.mxu0 0
        %1631 = vmatpush1.bf16.msra.mxu0 0
        %1632 = vmatprep.subr.bf16.mxu0 0
        %1633 = vmatpush1.bf16.msra.mxu0 0
        %1634 = vmatprep.subr.bf16.mxu0 0
        %1635 = vmatpush1.bf16.msra.mxu0 0
        %1636 = vmatprep.subr.bf16.mxu0 0
        %1637 = vmatpush1.bf16.msra.mxu0 0
        %1638 = vmatprep.subr.bf16.mxu0 0
        %1639 = vmatpush1.bf16.msra.mxu0 0
        %1640 = vmatprep.subr.bf16.mxu0 0
        %1641 = vmatpush1.bf16.msra.mxu0 0
        %1642 = vmatprep.mubr.bf16.mxu0 0
        %1643 = vmatmul.mubr.bf16.gmra.mrb[0].mxu0 %v1608
        %v1644 = vpop.f32.mrb[0].mxu0
        %v1645 = vadd.f32 0.0, %v1644
        %v1646 = vpop.f32.mrb[0].mxu0
        %v1647 = vpop.f32.mrb[0].mxu0
        %v1648 = vadd.f32 0.0, %v1647
        %v1649 = vpop.f32.mrb[0].mxu0
        %1650 = vdwg.mxu0
        %v1655 = vunpack.c.l.b16 %v1351
        %v1656 = vunpack.c.l.b16 %v1352
        %v1657 = vunpack.c.l.b16 %v1353
        %v1658 = vunpack.c.l.b16 %v1354
        %v1659 = vpack.c.b16 %v1656, %v1655
        %v1660 = vpack.c.b16 %v1658, %v1657
        %v1664 = vsel %vm1135, %v1355, 0
        %1666 = vmatprep.subr.bf16.mxu0 0
        %1667 = vmatpush1.bf16.msra.mxu0 %v1659
        %1668 = vmatprep.subr.bf16.mxu0 0
        %1669 = vmatpush1.bf16.msra.mxu0 %v1660
        %1670 = vmatprep.subr.bf16.mxu0 0
        %1671 = vmatpush1.bf16.msra.mxu0 0
        %1672 = vmatprep.subr.bf16.mxu0 0
        %1673 = vmatpush1.bf16.msra.mxu0 0
        %1674 = vmatprep.subr.bf16.mxu0 0
        %1675 = vmatpush1.bf16.msra.mxu0 0
        %1676 = vmatprep.subr.bf16.mxu0 0
        %1677 = vmatpush1.bf16.msra.mxu0 0
        %1678 = vmatprep.subr.bf16.mxu0 0
        %1679 = vmatpush1.bf16.msra.mxu0 0
        %1680 = vmatprep.subr.bf16.mxu0 0
        %1681 = vmatpush1.bf16.msra.mxu0 0
        %1682 = vmatprep.subr.bf16.mxu0 0
        %1683 = vmatpush1.bf16.msra.mxu0 0
        %1684 = vmatprep.subr.bf16.mxu0 0
        %1685 = vmatpush1.bf16.msra.mxu0 0
        %1686 = vmatprep.subr.bf16.mxu0 0
        %1687 = vmatpush1.bf16.msra.mxu0 0
        %1688 = vmatprep.subr.bf16.mxu0 0
        %1689 = vmatpush1.bf16.msra.mxu0 0
        %1690 = vmatprep.subr.bf16.mxu0 0
        %1691 = vmatpush1.bf16.msra.mxu0 0
        %1692 = vmatprep.subr.bf16.mxu0 0
        %1693 = vmatpush1.bf16.msra.mxu0 0
        %1694 = vmatprep.subr.bf16.mxu0 0
        %1695 = vmatpush1.bf16.msra.mxu0 0
        %1696 = vmatprep.subr.bf16.mxu0 0
        %1697 = vmatpush1.bf16.msra.mxu0 0
        %1698 = vmatprep.mubr.bf16.mxu0 0
        %1699 = vmatmul.mubr.bf16.gmra.mrb[0].mxu0 %v1664
        %v1700 = vpop.f32.mrb[0].mxu0
        %v1701 = vadd.f32 %v1645, %v1700
        %v1702 = vpop.f32.mrb[0].mxu0
        %v1703 = vpop.f32.mrb[0].mxu0
        %v1704 = vadd.f32 %v1648, %v1703
        %v1705 = vpop.f32.mrb[0].mxu0
        %1706 = vdwg.mxu0
        %1707 = vrot.lane.b32.xlu0 %v1129, 64
        %v1708 = vpop.permute.xlu0 %1707
        %1709 = vrot.lane.b32.xlu0 %v1131, 64
        %v1710 = vpop.permute.xlu0 %1709
        %v1712 = vsel %vm1135, %v1708, 0
        %v1715 = vsel %vm1135, %v1710, 0
        %1717 = vmatprep.subr.bf16.mxu0 0
        %1718 = vmatpush1.bf16.xpose.msra.mxu0 %v1715
        %1719 = vmatprep.subr.bf16.mxu0 0
        %1720 = vmatpush1.bf16.xpose.msra.mxu0 0
        %1721 = vmatprep.subr.bf16.mxu0 0
        %1722 = vmatpush1.bf16.xpose.msra.mxu0 0
        %1723 = vmatprep.subr.bf16.mxu0 0
        %1724 = vmatpush1.bf16.xpose.msra.mxu0 0
        %1725 = vmatprep.subr.bf16.mxu0 0
        %1726 = vmatpush1.bf16.xpose.msra.mxu0 0
        %1727 = vmatprep.subr.bf16.mxu0 0
        %1728 = vmatpush1.bf16.xpose.msra.mxu0 0
        %1729 = vmatprep.subr.bf16.mxu0 0
        %1730 = vmatpush1.bf16.xpose.msra.mxu0 0
        %1731 = vmatprep.subr.bf16.mxu0 0
        %1732 = vmatpush1.bf16.xpose.msra.mxu0 0
        %1733 = vmatprep.subr.bf16.mxu0 0
        %1734 = vmatpush1.bf16.xpose.msra.mxu0 0
        %1735 = vmatprep.subr.bf16.mxu0 0
        %1736 = vmatpush1.bf16.xpose.msra.mxu0 0
        %1737 = vmatprep.subr.bf16.mxu0 0
        %1738 = vmatpush1.bf16.xpose.msra.mxu0 0
        %1739 = vmatprep.subr.bf16.mxu0 0
        %1740 = vmatpush1.bf16.xpose.msra.mxu0 0
        %1741 = vmatprep.subr.bf16.mxu0 0
        %1742 = vmatpush1.bf16.xpose.msra.mxu0 0
        %1743 = vmatprep.subr.bf16.mxu0 0
        %1744 = vmatpush1.bf16.xpose.msra.mxu0 0
        %1745 = vmatprep.subr.bf16.mxu0 0
        %1746 = vmatpush1.bf16.xpose.msra.mxu0 0
        %1747 = vmatprep.subr.bf16.mxu0 0
        %1748 = vmatpush1.bf16.xpose.msra.mxu0 0
        %1749 = vmatprep.mubr.bf16.mxu0 0
        %1750 = vmatmul.mubr.bf16.gmra.mrb[0].mxu0 %v1712
        %v1751 = vpop.f32.mrb[0].mxu0
        %v1752 = vadd.f32 0.0, %v1751
        %v1753 = vpop.f32.mrb[0].mxu0
        %v1754 = vpop.f32.mrb[0].mxu0
        %v1755 = vpop.f32.mrb[0].mxu0
        %1756 = vdwg.mxu0
        %1757 = vrot.lane.b32.xlu0 %v1130, 64
        %v1758 = vpop.permute.xlu0 %1757
        %1759 = vrot.lane.b32.xlu0 %v1132, 64
        %v1760 = vpop.permute.xlu0 %1759
        %v1762 = vsel %vm1135, %v1758, 0
        %v1765 = vsel %vm1135, %v1760, 0
        %1767 = vmatprep.subr.bf16.mxu0 0
        %1768 = vmatpush1.bf16.xpose.msra.mxu0 %v1765
        %1769 = vmatprep.subr.bf16.mxu0 0
        %1770 = vmatpush1.bf16.xpose.msra.mxu0 0
        %1771 = vmatprep.subr.bf16.mxu0 0
        %1772 = vmatpush1.bf16.xpose.msra.mxu0 0
        %1773 = vmatprep.subr.bf16.mxu0 0
        %1774 = vmatpush1.bf16.xpose.msra.mxu0 0
        %1775 = vmatprep.subr.bf16.mxu0 0
        %1776 = vmatpush1.bf16.xpose.msra.mxu0 0
        %1777 = vmatprep.subr.bf16.mxu0 0
        %1778 = vmatpush1.bf16.xpose.msra.mxu0 0
        %1779 = vmatprep.subr.bf16.mxu0 0
        %1780 = vmatpush1.bf16.xpose.msra.mxu0 0
        %1781 = vmatprep.subr.bf16.mxu0 0
        %1782 = vmatpush1.bf16.xpose.msra.mxu0 0
        %1783 = vmatprep.subr.bf16.mxu0 0
        %1784 = vmatpush1.bf16.xpose.msra.mxu0 0
        %1785 = vmatprep.subr.bf16.mxu0 0
        %1786 = vmatpush1.bf16.xpose.msra.mxu0 0
        %1787 = vmatprep.subr.bf16.mxu0 0
        %1788 = vmatpush1.bf16.xpose.msra.mxu0 0
        %1789 = vmatprep.subr.bf16.mxu0 0
        %1790 = vmatpush1.bf16.xpose.msra.mxu0 0
        %1791 = vmatprep.subr.bf16.mxu0 0
        %1792 = vmatpush1.bf16.xpose.msra.mxu0 0
        %1793 = vmatprep.subr.bf16.mxu0 0
        %1794 = vmatpush1.bf16.xpose.msra.mxu0 0
        %1795 = vmatprep.subr.bf16.mxu0 0
        %1796 = vmatpush1.bf16.xpose.msra.mxu0 0
        %1797 = vmatprep.subr.bf16.mxu0 0
        %1798 = vmatpush1.bf16.xpose.msra.mxu0 0
        %1799 = vmatprep.mubr.bf16.mxu0 0
        %1800 = vmatmul.mubr.bf16.gmra.mrb[0].mxu0 %v1762
        %v1801 = vpop.f32.mrb[0].mxu0
        %v1802 = vadd.f32 0.0, %v1801
        %v1803 = vpop.f32.mrb[0].mxu0
        %v1804 = vpop.f32.mrb[0].mxu0
        %v1805 = vpop.f32.mrb[0].mxu0
        %1806 = vdwg.mxu0
        %v1807 = vmul.f32 %v1752, 0.17677669
        %v1808 = vmul.f32 %v1802, 0.17677669
        %v1809 = vsel %vm1230, %v1807, -inf
        %1810 = vmax.xlane.f32.xlu0 %v1809
        %v1811 = vpop.xlane.xlu0 %1810
        %v1812 = vsel %vm1230, %v1808, -inf
        %1813 = vmax.xlane.f32.xlu0 %v1812
        %v1814 = vpop.xlane.xlu0 %1813
        %v1815 = vsub.f32 %v1807, %v1811
        %v1816 = vsub.f32 %v1808, %v1814
        %v1817 = vmul.f32 %v1815, 1.442695
        %v1818 = vpow.pop %v1817
        %v1819 = vmul.f32 %v1816, 1.442695
        %v1820 = vpow.pop %v1819
        %v1821 = vsel %vm1230, %v1818, 0.0
        %1822 = vadd.xlane.f32.xlu0 %v1821
        %v1823 = vpop.xlane.xlu0 %1822
        %v1824 = vsel %vm1230, %v1820, 0.0
        %1825 = vadd.xlane.f32.xlu0 %v1824
        %v1826 = vpop.xlane.xlu0 %1825
        %v1827 = vrcp.pop %v1823
        %v1828 = vrcp.pop %v1826
        %v1829 = vmul.f32 %v1823, %v1827
        %v1830 = vmul.f32 %v1826, %v1828
        %v1831 = vsub.f32 2.0, %v1829
        %v1832 = vsub.f32 2.0, %v1830
        %v1833 = vmul.f32 %v1827, %v1831
        %v1834 = vmul.f32 %v1828, %v1832
        %v1835 = vmul.f32 %v1818, %v1833
        %v1836 = vmul.f32 %v1820, %v1834
        %v1837 = vpack.c.bf16 %v1835, %v1835
        %s1838 = scalar_lea.vmem %s762, 8 [#allocation17]
        %1839 = vst.msk [vmem:[%s1838] sm:$0xf] %vm1260, %v1837
        %v1840 = vpack.c.bf16 %v1836, %v1836
        %s1841 = scalar_lea.vmem %s762, 24 [#allocation17]
        %1842 = vst.msk [vmem:[%s1841] sm:$0xf] %vm1260, %v1840
        %1843 = vrot.lane.b32.xlu0 %v1133, 64
        %v1844 = vpop.permute.xlu0 %1843
        %v1847 = vsel %vm1230, %v1837, 0
        %1849 = vmatprep.subr.bf16.mxu0 0
        %1850 = vmatpush1.bf16.msra.mxu0 %v1844
        %1851 = vmatprep.subr.bf16.mxu0 0
        %1852 = vmatpush1.bf16.msra.mxu0 0
        %1853 = vmatprep.subr.bf16.mxu0 0
        %1854 = vmatpush1.bf16.msra.mxu0 0
        %1855 = vmatprep.subr.bf16.mxu0 0
        %1856 = vmatpush1.bf16.msra.mxu0 0
        %1857 = vmatprep.subr.bf16.mxu0 0
        %1858 = vmatpush1.bf16.msra.mxu0 0
        %1859 = vmatprep.subr.bf16.mxu0 0
        %1860 = vmatpush1.bf16.msra.mxu0 0
        %1861 = vmatprep.subr.bf16.mxu0 0
        %1862 = vmatpush1.bf16.msra.mxu0 0
        %1863 = vmatprep.subr.bf16.mxu0 0
        %1864 = vmatpush1.bf16.msra.mxu0 0
        %1865 = vmatprep.subr.bf16.mxu0 0
        %1866 = vmatpush1.bf16.msra.mxu0 0
        %1867 = vmatprep.subr.bf16.mxu0 0
        %1868 = vmatpush1.bf16.msra.mxu0 0
        %1869 = vmatprep.subr.bf16.mxu0 0
        %1870 = vmatpush1.bf16.msra.mxu0 0
        %1871 = vmatprep.subr.bf16.mxu0 0
        %1872 = vmatpush1.bf16.msra.mxu0 0
        %1873 = vmatprep.subr.bf16.mxu0 0
        %1874 = vmatpush1.bf16.msra.mxu0 0
        %1875 = vmatprep.subr.bf16.mxu0 0
        %1876 = vmatpush1.bf16.msra.mxu0 0
        %1877 = vmatprep.subr.bf16.mxu0 0
        %1878 = vmatpush1.bf16.msra.mxu0 0
        %1879 = vmatprep.subr.bf16.mxu0 0
        %1880 = vmatpush1.bf16.msra.mxu0 0
        %1881 = vmatprep.mubr.bf16.mxu0 0
        %1882 = vmatmul.mubr.bf16.gmra.mrb[0].mxu0 %v1847
        %v1883 = vpop.f32.mrb[0].mxu0
        %v1884 = vadd.f32 0.0, %v1883
        %v1885 = vpop.f32.mrb[0].mxu0
        %v1886 = vpop.f32.mrb[0].mxu0
        %v1887 = vpop.f32.mrb[0].mxu0
        %1888 = vdwg.mxu0
        %1889 = vrot.lane.b32.xlu0 %v1134, 64
        %v1890 = vpop.permute.xlu0 %1889
        %v1893 = vsel %vm1230, %v1840, 0
        %1895 = vmatprep.subr.bf16.mxu0 0
        %1896 = vmatpush1.bf16.msra.mxu0 %v1890
        %1897 = vmatprep.subr.bf16.mxu0 0
        %1898 = vmatpush1.bf16.msra.mxu0 0
        %1899 = vmatprep.subr.bf16.mxu0 0
        %1900 = vmatpush1.bf16.msra.mxu0 0
        %1901 = vmatprep.subr.bf16.mxu0 0
        %1902 = vmatpush1.bf16.msra.mxu0 0
        %1903 = vmatprep.subr.bf16.mxu0 0
        %1904 = vmatpush1.bf16.msra.mxu0 0
        %1905 = vmatprep.subr.bf16.mxu0 0
        %1906 = vmatpush1.bf16.msra.mxu0 0
        %1907 = vmatprep.subr.bf16.mxu0 0
        %1908 = vmatpush1.bf16.msra.mxu0 0
        %1909 = vmatprep.subr.bf16.mxu0 0
        %1910 = vmatpush1.bf16.msra.mxu0 0
        %1911 = vmatprep.subr.bf16.mxu0 0
        %1912 = vmatpush1.bf16.msra.mxu0 0
        %1913 = vmatprep.subr.bf16.mxu0 0
        %1914 = vmatpush1.bf16.msra.mxu0 0
        %1915 = vmatprep.subr.bf16.mxu0 0
        %1916 = vmatpush1.bf16.msra.mxu0 0
        %1917 = vmatprep.subr.bf16.mxu0 0
        %1918 = vmatpush1.bf16.msra.mxu0 0
        %1919 = vmatprep.subr.bf16.mxu0 0
        %1920 = vmatpush1.bf16.msra.mxu0 0
        %1921 = vmatprep.subr.bf16.mxu0 0
        %1922 = vmatpush1.bf16.msra.mxu0 0
        %1923 = vmatprep.subr.bf16.mxu0 0
        %1924 = vmatpush1.bf16.msra.mxu0 0
        %1925 = vmatprep.subr.bf16.mxu0 0
        %1926 = vmatpush1.bf16.msra.mxu0 0
        %1927 = vmatprep.mubr.bf16.mxu0 0
        %1928 = vmatmul.mubr.bf16.gmra.mrb[0].mxu0 %v1893
        %v1929 = vpop.f32.mrb[0].mxu0
        %v1930 = vadd.f32 0.0, %v1929
        %v1931 = vpop.f32.mrb[0].mxu0
        %v1932 = vpop.f32.mrb[0].mxu0
        %v1933 = vpop.f32.mrb[0].mxu0
        %1934 = vdwg.mxu0
        %v1935 = vld [vmem:[#allocation11 + $0x20] sm:$0xf]
        %v1936 = vld [vmem:[#allocation11 + $0x24] sm:$0xf]
        %v1937 = vld [vmem:[#allocation11 + $0x28] sm:$0xf]
        %v1938 = vld [vmem:[#allocation11 + $0x2c] sm:$0xf]
        %v1939 = vpack.c.bf16 %v1930, %v1884
        %v1944 = vunpack.c.l.b16 %v1935
        %v1945 = vunpack.c.l.b16 %v1936
        %v1946 = vunpack.c.l.b16 %v1937
        %v1947 = vunpack.c.l.b16 %v1938
        %v1948 = vpack.c.b16 %v1945, %v1944
        %v1949 = vpack.c.b16 %v1947, %v1946
        %v1953 = vsel %vm1135, %v1939, 0
        %1955 = vmatprep.subr.bf16.mxu0 0
        %1956 = vmatpush1.bf16.msra.mxu0 %v1948
        %1957 = vmatprep.subr.bf16.mxu0 0
        %1958 = vmatpush1.bf16.msra.mxu0 %v1949
        %1959 = vmatprep.subr.bf16.mxu0 0
        %1960 = vmatpush1.bf16.msra.mxu0 0
        %1961 = vmatprep.subr.bf16.mxu0 0
        %1962 = vmatpush1.bf16.msra.mxu0 0
        %1963 = vmatprep.subr.bf16.mxu0 0
        %1964 = vmatpush1.bf16.msra.mxu0 0
        %1965 = vmatprep.subr.bf16.mxu0 0
        %1966 = vmatpush1.bf16.msra.mxu0 0
        %1967 = vmatprep.subr.bf16.mxu0 0
        %1968 = vmatpush1.bf16.msra.mxu0 0
        %1969 = vmatprep.subr.bf16.mxu0 0
        %1970 = vmatpush1.bf16.msra.mxu0 0
        %1971 = vmatprep.subr.bf16.mxu0 0
        %1972 = vmatpush1.bf16.msra.mxu0 0
        %1973 = vmatprep.subr.bf16.mxu0 0
        %1974 = vmatpush1.bf16.msra.mxu0 0
        %1975 = vmatprep.subr.bf16.mxu0 0
        %1976 = vmatpush1.bf16.msra.mxu0 0
        %1977 = vmatprep.subr.bf16.mxu0 0
        %1978 = vmatpush1.bf16.msra.mxu0 0
        %1979 = vmatprep.subr.bf16.mxu0 0
        %1980 = vmatpush1.bf16.msra.mxu0 0
        %1981 = vmatprep.subr.bf16.mxu0 0
        %1982 = vmatpush1.bf16.msra.mxu0 0
        %1983 = vmatprep.subr.bf16.mxu0 0
        %1984 = vmatpush1.bf16.msra.mxu0 0
        %1985 = vmatprep.subr.bf16.mxu0 0
        %1986 = vmatpush1.bf16.msra.mxu0 0
        %1987 = vmatprep.mubr.bf16.mxu0 0
        %1988 = vmatmul.mubr.bf16.gmra.mrb[0].mxu0 %v1953
        %v1989 = vpop.f32.mrb[0].mxu0
        %v1990 = vadd.f32 0.0, %v1989
        %v1991 = vpop.f32.mrb[0].mxu0
        %v1992 = vpop.f32.mrb[0].mxu0
        %v1993 = vadd.f32 0.0, %v1992
        %v1994 = vpop.f32.mrb[0].mxu0
        %1995 = vdwg.mxu0
        %v1996 = vadd.f32 %v1701, %v1990
        %v1997 = vadd.f32 %v1704, %v1993
        %1998 = vrot.lane.b32.xlu0 %v1129, 32
        %v1999 = vpop.permute.xlu0 %1998
        %2000 = vrot.lane.b32.xlu0 %v1131, 32
        %v2001 = vpop.permute.xlu0 %2000
        %v2003 = vsel %vm1135, %v1999, 0
        %v2006 = vsel %vm1135, %v2001, 0
        %2008 = vmatprep.subr.bf16.mxu0 0
        %2009 = vmatpush1.bf16.xpose.msra.mxu0 %v2006
        %2010 = vmatprep.subr.bf16.mxu0 0
        %2011 = vmatpush1.bf16.xpose.msra.mxu0 0
        %2012 = vmatprep.subr.bf16.mxu0 0
        %2013 = vmatpush1.bf16.xpose.msra.mxu0 0
        %2014 = vmatprep.subr.bf16.mxu0 0
        %2015 = vmatpush1.bf16.xpose.msra.mxu0 0
        %2016 = vmatprep.subr.bf16.mxu0 0
        %2017 = vmatpush1.bf16.xpose.msra.mxu0 0
        %2018 = vmatprep.subr.bf16.mxu0 0
        %2019 = vmatpush1.bf16.xpose.msra.mxu0 0
        %2020 = vmatprep.subr.bf16.mxu0 0
        %2021 = vmatpush1.bf16.xpose.msra.mxu0 0
        %2022 = vmatprep.subr.bf16.mxu0 0
        %2023 = vmatpush1.bf16.xpose.msra.mxu0 0
        %2024 = vmatprep.subr.bf16.mxu0 0
        %2025 = vmatpush1.bf16.xpose.msra.mxu0 0
        %2026 = vmatprep.subr.bf16.mxu0 0
        %2027 = vmatpush1.bf16.xpose.msra.mxu0 0
        %2028 = vmatprep.subr.bf16.mxu0 0
        %2029 = vmatpush1.bf16.xpose.msra.mxu0 0
        %2030 = vmatprep.subr.bf16.mxu0 0
        %2031 = vmatpush1.bf16.xpose.msra.mxu0 0
        %2032 = vmatprep.subr.bf16.mxu0 0
        %2033 = vmatpush1.bf16.xpose.msra.mxu0 0
        %2034 = vmatprep.subr.bf16.mxu0 0
        %2035 = vmatpush1.bf16.xpose.msra.mxu0 0
        %2036 = vmatprep.subr.bf16.mxu0 0
        %2037 = vmatpush1.bf16.xpose.msra.mxu0 0
        %2038 = vmatprep.subr.bf16.mxu0 0
        %2039 = vmatpush1.bf16.xpose.msra.mxu0 0
        %2040 = vmatprep.mubr.bf16.mxu0 0
        %2041 = vmatmul.mubr.bf16.gmra.mrb[0].mxu0 %v2003
        %v2042 = vpop.f32.mrb[0].mxu0
        %v2043 = vadd.f32 0.0, %v2042
        %v2044 = vpop.f32.mrb[0].mxu0
        %v2045 = vpop.f32.mrb[0].mxu0
        %v2046 = vpop.f32.mrb[0].mxu0
        %2047 = vdwg.mxu0
        %2048 = vrot.lane.b32.xlu0 %v1130, 32
        %v2049 = vpop.permute.xlu0 %2048
        %2050 = vrot.lane.b32.xlu0 %v1132, 32
        %v2051 = vpop.permute.xlu0 %2050
        %v2053 = vsel %vm1135, %v2049, 0
        %v2056 = vsel %vm1135, %v2051, 0
        %2058 = vmatprep.subr.bf16.mxu0 0
        %2059 = vmatpush1.bf16.xpose.msra.mxu0 %v2056
        %2060 = vmatprep.subr.bf16.mxu0 0
        %2061 = vmatpush1.bf16.xpose.msra.mxu0 0
        %2062 = vmatprep.subr.bf16.mxu0 0
        %2063 = vmatpush1.bf16.xpose.msra.mxu0 0
        %2064 = vmatprep.subr.bf16.mxu0 0
        %2065 = vmatpush1.bf16.xpose.msra.mxu0 0
        %2066 = vmatprep.subr.bf16.mxu0 0
        %2067 = vmatpush1.bf16.xpose.msra.mxu0 0
        %2068 = vmatprep.subr.bf16.mxu0 0
        %2069 = vmatpush1.bf16.xpose.msra.mxu0 0
        %2070 = vmatprep.subr.bf16.mxu0 0
        %2071 = vmatpush1.bf16.xpose.msra.mxu0 0
        %2072 = vmatprep.subr.bf16.mxu0 0
        %2073 = vmatpush1.bf16.xpose.msra.mxu0 0
        %2074 = vmatprep.subr.bf16.mxu0 0
        %2075 = vmatpush1.bf16.xpose.msra.mxu0 0
        %2076 = vmatprep.subr.bf16.mxu0 0
        %2077 = vmatpush1.bf16.xpose.msra.mxu0 0
        %2078 = vmatprep.subr.bf16.mxu0 0
        %2079 = vmatpush1.bf16.xpose.msra.mxu0 0
        %2080 = vmatprep.subr.bf16.mxu0 0
        %2081 = vmatpush1.bf16.xpose.msra.mxu0 0
        %2082 = vmatprep.subr.bf16.mxu0 0
        %2083 = vmatpush1.bf16.xpose.msra.mxu0 0
        %2084 = vmatprep.subr.bf16.mxu0 0
        %2085 = vmatpush1.bf16.xpose.msra.mxu0 0
        %2086 = vmatprep.subr.bf16.mxu0 0
        %2087 = vmatpush1.bf16.xpose.msra.mxu0 0
        %2088 = vmatprep.subr.bf16.mxu0 0
        %2089 = vmatpush1.bf16.xpose.msra.mxu0 0
        %2090 = vmatprep.mubr.bf16.mxu0 0
        %2091 = vmatmul.mubr.bf16.gmra.mrb[0].mxu0 %v2053
        %v2092 = vpop.f32.mrb[0].mxu0
        %v2093 = vadd.f32 0.0, %v2092
        %v2094 = vpop.f32.mrb[0].mxu0
        %v2095 = vpop.f32.mrb[0].mxu0
        %v2096 = vpop.f32.mrb[0].mxu0
        %2097 = vdwg.mxu0
        %v2098 = vmul.f32 %v2043, 0.17677669
        %v2099 = vmul.f32 %v2093, 0.17677669
        %v2100 = vsel %vm1230, %v2098, -inf
        %2101 = vmax.xlane.f32.xlu0 %v2100
        %v2102 = vpop.xlane.xlu0 %2101
        %v2103 = vsel %vm1230, %v2099, -inf
        %2104 = vmax.xlane.f32.xlu0 %v2103
        %v2105 = vpop.xlane.xlu0 %2104
        %v2106 = vsub.f32 %v2098, %v2102
        %v2107 = vsub.f32 %v2099, %v2105
        %v2108 = vmul.f32 %v2106, 1.442695
        %v2109 = vpow.pop %v2108
        %v2110 = vmul.f32 %v2107, 1.442695
        %v2111 = vpow.pop %v2110
        %v2112 = vsel %vm1230, %v2109, 0.0
        %2113 = vadd.xlane.f32.xlu0 %v2112
        %v2114 = vpop.xlane.xlu0 %2113
        %v2115 = vsel %vm1230, %v2111, 0.0
        %2116 = vadd.xlane.f32.xlu0 %v2115
        %v2117 = vpop.xlane.xlu0 %2116
        %v2118 = vrcp.pop %v2114
        %v2119 = vrcp.pop %v2117
        %v2120 = vmul.f32 %v2114, %v2118
        %v2121 = vmul.f32 %v2117, %v2119
        %v2122 = vsub.f32 2.0, %v2120
        %v2123 = vsub.f32 2.0, %v2121
        %v2124 = vmul.f32 %v2118, %v2122
        %v2125 = vmul.f32 %v2119, %v2123
        %v2126 = vmul.f32 %v2109, %v2124
        %v2127 = vmul.f32 %v2111, %v2125
        %v2128 = vpack.c.bf16 %v2126, %v2126
        %s2129 = scalar_lea.vmem %s762, 12 [#allocation17]
        %2130 = vst.msk [vmem:[%s2129] sm:$0xf] %vm1260, %v2128
        %v2131 = vpack.c.bf16 %v2127, %v2127
        %s2132 = scalar_lea.vmem %s762, 28 [#allocation17]
        %2133 = vst.msk [vmem:[%s2132] sm:$0xf] %vm1260, %v2131
        %2134 = vrot.lane.b32.xlu0 %v1133, 32
        %v2135 = vpop.permute.xlu0 %2134
        %v2138 = vsel %vm1230, %v2128, 0
        %2140 = vmatprep.subr.bf16.mxu0 0
        %2141 = vmatpush1.bf16.msra.mxu0 %v2135
        %2142 = vmatprep.subr.bf16.mxu0 0
        %2143 = vmatpush1.bf16.msra.mxu0 0
        %2144 = vmatprep.subr.bf16.mxu0 0
        %2145 = vmatpush1.bf16.msra.mxu0 0
        %2146 = vmatprep.subr.bf16.mxu0 0
        %2147 = vmatpush1.bf16.msra.mxu0 0
        %2148 = vmatprep.subr.bf16.mxu0 0
        %2149 = vmatpush1.bf16.msra.mxu0 0
        %2150 = vmatprep.subr.bf16.mxu0 0
        %2151 = vmatpush1.bf16.msra.mxu0 0
        %2152 = vmatprep.subr.bf16.mxu0 0
        %2153 = vmatpush1.bf16.msra.mxu0 0
        %2154 = vmatprep.subr.bf16.mxu0 0
        %2155 = vmatpush1.bf16.msra.mxu0 0
        %2156 = vmatprep.subr.bf16.mxu0 0
        %2157 = vmatpush1.bf16.msra.mxu0 0
        %2158 = vmatprep.subr.bf16.mxu0 0
        %2159 = vmatpush1.bf16.msra.mxu0 0
        %2160 = vmatprep.subr.bf16.mxu0 0
        %2161 = vmatpush1.bf16.msra.mxu0 0
        %2162 = vmatprep.subr.bf16.mxu0 0
        %2163 = vmatpush1.bf16.msra.mxu0 0
        %2164 = vmatprep.subr.bf16.mxu0 0
        %2165 = vmatpush1.bf16.msra.mxu0 0
        %2166 = vmatprep.subr.bf16.mxu0 0
        %2167 = vmatpush1.bf16.msra.mxu0 0
        %2168 = vmatprep.subr.bf16.mxu0 0
        %2169 = vmatpush1.bf16.msra.mxu0 0
        %2170 = vmatprep.subr.bf16.mxu0 0
        %2171 = vmatpush1.bf16.msra.mxu0 0
        %2172 = vmatprep.mubr.bf16.mxu0 0
        %2173 = vmatmul.mubr.bf16.gmra.mrb[0].mxu0 %v2138
        %v2174 = vpop.f32.mrb[0].mxu0
        %v2175 = vadd.f32 0.0, %v2174
        %v2176 = vpop.f32.mrb[0].mxu0
        %v2177 = vpop.f32.mrb[0].mxu0
        %v2178 = vpop.f32.mrb[0].mxu0
        %2179 = vdwg.mxu0
        %2180 = vrot.lane.b32.xlu0 %v1134, 32
        %v2181 = vpop.permute.xlu0 %2180
        %v2184 = vsel %vm1230, %v2131, 0
        %2186 = vmatprep.subr.bf16.mxu0 0
        %2187 = vmatpush1.bf16.msra.mxu0 %v2181
        %2188 = vmatprep.subr.bf16.mxu0 0
        %2189 = vmatpush1.bf16.msra.mxu0 0
        %2190 = vmatprep.subr.bf16.mxu0 0
        %2191 = vmatpush1.bf16.msra.mxu0 0
        %2192 = vmatprep.subr.bf16.mxu0 0
        %2193 = vmatpush1.bf16.msra.mxu0 0
        %2194 = vmatprep.subr.bf16.mxu0 0
        %2195 = vmatpush1.bf16.msra.mxu0 0
        %2196 = vmatprep.subr.bf16.mxu0 0
        %2197 = vmatpush1.bf16.msra.mxu0 0
        %2198 = vmatprep.subr.bf16.mxu0 0
        %2199 = vmatpush1.bf16.msra.mxu0 0
        %2200 = vmatprep.subr.bf16.mxu0 0
        %2201 = vmatpush1.bf16.msra.mxu0 0
        %2202 = vmatprep.subr.bf16.mxu0 0
        %2203 = vmatpush1.bf16.msra.mxu0 0
        %2204 = vmatprep.subr.bf16.mxu0 0
        %2205 = vmatpush1.bf16.msra.mxu0 0
        %2206 = vmatprep.subr.bf16.mxu0 0
        %2207 = vmatpush1.bf16.msra.mxu0 0
        %2208 = vmatprep.subr.bf16.mxu0 0
        %2209 = vmatpush1.bf16.msra.mxu0 0
        %2210 = vmatprep.subr.bf16.mxu0 0
        %2211 = vmatpush1.bf16.msra.mxu0 0
        %2212 = vmatprep.subr.bf16.mxu0 0
        %2213 = vmatpush1.bf16.msra.mxu0 0
        %2214 = vmatprep.subr.bf16.mxu0 0
        %2215 = vmatpush1.bf16.msra.mxu0 0
        %2216 = vmatprep.subr.bf16.mxu0 0
        %2217 = vmatpush1.bf16.msra.mxu0 0
        %2218 = vmatprep.mubr.bf16.mxu0 0
        %2219 = vmatmul.mubr.bf16.gmra.mrb[0].mxu0 %v2184
        %v2220 = vpop.f32.mrb[0].mxu0
        %v2221 = vadd.f32 0.0, %v2220
        %v2222 = vpop.f32.mrb[0].mxu0
        %v2223 = vpop.f32.mrb[0].mxu0
        %v2224 = vpop.f32.mrb[0].mxu0
        %2225 = vdwg.mxu0
        %v2226 = vld [vmem:[#allocation11 + $0x30] sm:$0xf]
        %v2227 = vld [vmem:[#allocation11 + $0x34] sm:$0xf]
        %v2228 = vld [vmem:[#allocation11 + $0x38] sm:$0xf]
        %v2229 = vld [vmem:[#allocation11 + $0x3c] sm:$0xf]
        %v2230 = vpack.c.bf16 %v2221, %v2175
        %v2235 = vunpack.c.l.b16 %v2226
        %v2236 = vunpack.c.l.b16 %v2227
        %v2237 = vunpack.c.l.b16 %v2228
        %v2238 = vunpack.c.l.b16 %v2229
        %v2239 = vpack.c.b16 %v2236, %v2235
        %v2240 = vpack.c.b16 %v2238, %v2237
        %v2244 = vsel %vm1135, %v2230, 0
        %2246 = vmatprep.subr.bf16.mxu0 0
        %2247 = vmatpush1.bf16.msra.mxu0 %v2239
        %2248 = vmatprep.subr.bf16.mxu0 0
        %2249 = vmatpush1.bf16.msra.mxu0 %v2240
        %2250 = vmatprep.subr.bf16.mxu0 0
        %2251 = vmatpush1.bf16.msra.mxu0 0
        %2252 = vmatprep.subr.bf16.mxu0 0
        %2253 = vmatpush1.bf16.msra.mxu0 0
        %2254 = vmatprep.subr.bf16.mxu0 0
        %2255 = vmatpush1.bf16.msra.mxu0 0
        %2256 = vmatprep.subr.bf16.mxu0 0
        %2257 = vmatpush1.bf16.msra.mxu0 0
        %2258 = vmatprep.subr.bf16.mxu0 0
        %2259 = vmatpush1.bf16.msra.mxu0 0
        %2260 = vmatprep.subr.bf16.mxu0 0
        %2261 = vmatpush1.bf16.msra.mxu0 0
        %2262 = vmatprep.subr.bf16.mxu0 0
        %2263 = vmatpush1.bf16.msra.mxu0 0
        %2264 = vmatprep.subr.bf16.mxu0 0
        %2265 = vmatpush1.bf16.msra.mxu0 0
        %2266 = vmatprep.subr.bf16.mxu0 0
        %2267 = vmatpush1.bf16.msra.mxu0 0
        %2268 = vmatprep.subr.bf16.mxu0 0
        %2269 = vmatpush1.bf16.msra.mxu0 0
        %2270 = vmatprep.subr.bf16.mxu0 0
        %2271 = vmatpush1.bf16.msra.mxu0 0
        %2272 = vmatprep.subr.bf16.mxu0 0
        %2273 = vmatpush1.bf16.msra.mxu0 0
        %2274 = vmatprep.subr.bf16.mxu0 0
        %2275 = vmatpush1.bf16.msra.mxu0 0
        %2276 = vmatprep.subr.bf16.mxu0 0
        %2277 = vmatpush1.bf16.msra.mxu0 0
        %2278 = vmatprep.mubr.bf16.mxu0 0
        %2279 = vmatmul.mubr.bf16.gmra.mrb[0].mxu0 %v2244
        %v2280 = vpop.f32.mrb[0].mxu0
        %v2281 = vadd.f32 0.0, %v2280
        %v2282 = vpop.f32.mrb[0].mxu0
        %v2283 = vpop.f32.mrb[0].mxu0
        %v2284 = vadd.f32 0.0, %v2283
        %v2285 = vpop.f32.mrb[0].mxu0
        %2286 = vdwg.mxu0
        %v2287 = vadd.f32 %v1996, %v2281
        %v2288 = vadd.f32 %v1997, %v2284
        %v2289 = vld [vmem:[%s9] sm:$0x1]
        %v2291 = vlaneseq
        %v2292 = vshrl.u32 %v2291, 7
        %v2293 = vsub.s32 0, %v2292
        %v2294 = vrot.slane %v2289, %v2293
        %v2296 = vadd.f32 %v2287, %v2294
        %v2297 = vadd.f32 %v2288, %v2294
        %v2298 = vadd.f32 %v768, %v2296
        %v2299 = vadd.f32 %v769, %v2297
        %2300 = vadd.xlane.f32.xlu0 %v2298
        %v2301 = vpop.xlane.xlu0 %2300
        %2302 = vadd.xlane.f32.xlu0 %v2299
        %v2303 = vpop.xlane.xlu0 %2302
        %v2304 = vrcp.pop 128.0
        %v2305 = vmul.f32 %v2301, %v2304
        %v2306 = vmul.f32 %v2303, %v2304
        %v2307 = vsub.f32 %v2298, %v2305
        %v2308 = vsub.f32 %v2299, %v2306
        %v2309 = vmul.f32 %v2307, %v2307
        %v2310 = vmul.f32 %v2308, %v2308
        %2311 = vadd.xlane.f32.xlu0 %v2309
        %v2312 = vpop.xlane.xlu0 %2311
        %2313 = vadd.xlane.f32.xlu0 %v2310
        %v2314 = vpop.xlane.xlu0 %2313
        %v2315 = vmul.f32 %v2312, %v2304
        %v2316 = vmul.f32 %v2314, %v2304
        %v2317 = vadd.f32 %v2315, 1e-05
        %v2318 = vadd.f32 %v2316, 1e-05
        %v2319 = vrsqrt.pop %v2317
        %v2320 = vrsqrt.pop %v2318
        %v2321 = vmul.f32 %v2307, %v2319
        %v2322 = vmul.f32 %v2308, %v2320
        %v2323 = vld [vmem:[%s10] sm:$0x1]
        %v2325 = vlaneseq
        %v2326 = vshrl.u32 %v2325, 7
        %v2327 = vsub.s32 0, %v2326
        %v2328 = vrot.slane %v2323, %v2327
        %v2330 = vmul.f32 %v2321, %v2328
        %v2331 = vmul.f32 %v2322, %v2328
        %v2332 = vld [vmem:[%s11] sm:$0x1]
        %v2334 = vlaneseq
        %v2335 = vshrl.u32 %v2334, 7
        %v2336 = vsub.s32 0, %v2335
        %v2337 = vrot.slane %v2332, %v2336
        %v2339 = vadd.f32 %v2330, %v2337
        %v2340 = vadd.f32 %v2331, %v2337
        %v2341 = vld [vmem:[#allocation13] sm:$0xff]
        %v2342 = vld [vmem:[#allocation13 + $0x8] sm:$0xff]
        %v2343 = vld [vmem:[#allocation13 + $0x10] sm:$0xff]
        %v2344 = vld [vmem:[#allocation13 + $0x18] sm:$0xff]
        %v2345 = vld [vmem:[#allocation13 + $0x20] sm:$0xff]
        %v2346 = vld [vmem:[#allocation13 + $0x28] sm:$0xff]
        %v2347 = vld [vmem:[#allocation13 + $0x30] sm:$0xff]
        %v2348 = vld [vmem:[#allocation13 + $0x38] sm:$0xff]
        %v2349 = vld [vmem:[#allocation13 + $0x40] sm:$0xff]
        %v2350 = vld [vmem:[#allocation13 + $0x48] sm:$0xff]
        %v2351 = vld [vmem:[#allocation13 + $0x50] sm:$0xff]
        %v2352 = vld [vmem:[#allocation13 + $0x58] sm:$0xff]
        %v2353 = vld [vmem:[#allocation13 + $0x60] sm:$0xff]
        %v2354 = vld [vmem:[#allocation13 + $0x68] sm:$0xff]
        %v2355 = vld [vmem:[#allocation13 + $0x70] sm:$0xff]
        %v2356 = vld [vmem:[#allocation13 + $0x78] sm:$0xff]
        %v2357 = vld [vmem:[#allocation13 + $0x80] sm:$0xff]
        %v2358 = vld [vmem:[#allocation13 + $0x88] sm:$0xff]
        %v2359 = vld [vmem:[#allocation13 + $0x90] sm:$0xff]
        %v2360 = vld [vmem:[#allocation13 + $0x98] sm:$0xff]
        %v2361 = vld [vmem:[#allocation13 + $0xa0] sm:$0xff]
        %v2362 = vld [vmem:[#allocation13 + $0xa8] sm:$0xff]
        %v2363 = vld [vmem:[#allocation13 + $0xb0] sm:$0xff]
        %v2364 = vld [vmem:[#allocation13 + $0xb8] sm:$0xff]
        %v2365 = vld [vmem:[#allocation13 + $0xc0] sm:$0xff]
        %v2366 = vld [vmem:[#allocation13 + $0xc8] sm:$0xff]
        %v2367 = vld [vmem:[#allocation13 + $0xd0] sm:$0xff]
        %v2368 = vld [vmem:[#allocation13 + $0xd8] sm:$0xff]
        %v2369 = vld [vmem:[#allocation13 + $0xe0] sm:$0xff]
        %v2370 = vld [vmem:[#allocation13 + $0xe8] sm:$0xff]
        %v2371 = vld [vmem:[#allocation13 + $0xf0] sm:$0xff]
        %v2372 = vld [vmem:[#allocation13 + $0xf8] sm:$0xff]
        %v2373 = vpack.c.bf16 %v2340, %v2339
        %v2374 = vld [vmem:[%s13] sm:$0xf]
        %v2376 = vlaneseq
        %v2377 = vshrl.u32 %v2376, 7
        %v2378 = vsub.s32 0, %v2377
        %v2379 = vrot.slane %v2374, %v2378
        %v2380 = vlaneseq
        %v2381 = vshrl.u32 %v2380, 7
        %v2382 = vsub.s32 1, %v2381
        %v2383 = vrot.slane %v2374, %v2382
        %v2384 = vlaneseq
        %v2385 = vshrl.u32 %v2384, 7
        %v2386 = vsub.s32 2, %v2385
        %v2387 = vrot.slane %v2374, %v2386
        %v2388 = vlaneseq
        %v2389 = vshrl.u32 %v2388, 7
        %v2390 = vsub.s32 3, %v2389
        %v2391 = vrot.slane %v2374, %v2390
        %v2428 = vunpack.c.l.b16 %v2341
        %v2429 = vunpack.c.h.b16 %v2341
        %v2430 = vunpack.c.l.b16 %v2342
        %v2431 = vunpack.c.h.b16 %v2342
        %v2432 = vunpack.c.l.b16 %v2343
        %v2433 = vunpack.c.h.b16 %v2343
        %v2434 = vunpack.c.l.b16 %v2344
        %v2435 = vunpack.c.h.b16 %v2344
        %v2436 = vunpack.c.l.b16 %v2345
        %v2437 = vunpack.c.h.b16 %v2345
        %v2438 = vunpack.c.l.b16 %v2346
        %v2439 = vunpack.c.h.b16 %v2346
        %v2440 = vunpack.c.l.b16 %v2347
        %v2441 = vunpack.c.h.b16 %v2347
        %v2442 = vunpack.c.l.b16 %v2348
        %v2443 = vunpack.c.h.b16 %v2348
        %v2444 = vunpack.c.l.b16 %v2349
        %v2445 = vunpack.c.h.b16 %v2349
        %v2446 = vunpack.c.l.b16 %v2350
        %v2447 = vunpack.c.h.b16 %v2350
        %v2448 = vunpack.c.l.b16 %v2351
        %v2449 = vunpack.c.h.b16 %v2351
        %v2450 = vunpack.c.l.b16 %v2352
        %v2451 = vunpack.c.h.b16 %v2352
        %v2452 = vunpack.c.l.b16 %v2353
        %v2453 = vunpack.c.h.b16 %v2353
        %v2454 = vunpack.c.l.b16 %v2354
        %v2455 = vunpack.c.h.b16 %v2354
        %v2456 = vunpack.c.l.b16 %v2355
        %v2457 = vunpack.c.h.b16 %v2355
        %v2458 = vunpack.c.l.b16 %v2356
        %v2459 = vunpack.c.h.b16 %v2356
        %v2460 = vunpack.c.l.b16 %v2357
        %v2461 = vunpack.c.h.b16 %v2357
        %v2462 = vunpack.c.l.b16 %v2358
        %v2463 = vunpack.c.h.b16 %v2358
        %v2464 = vunpack.c.l.b16 %v2359
        %v2465 = vunpack.c.h.b16 %v2359
        %v2466 = vunpack.c.l.b16 %v2360
        %v2467 = vunpack.c.h.b16 %v2360
        %v2468 = vunpack.c.l.b16 %v2361
        %v2469 = vunpack.c.h.b16 %v2361
        %v2470 = vunpack.c.l.b16 %v2362
        %v2471 = vunpack.c.h.b16 %v2362
        %v2472 = vunpack.c.l.b16 %v2363
        %v2473 = vunpack.c.h.b16 %v2363
        %v2474 = vunpack.c.l.b16 %v2364
        %v2475 = vunpack.c.h.b16 %v2364
        %v2476 = vunpack.c.l.b16 %v2365
        %v2477 = vunpack.c.h.b16 %v2365
        %v2478 = vunpack.c.l.b16 %v2366
        %v2479 = vunpack.c.h.b16 %v2366
        %v2480 = vunpack.c.l.b16 %v2367
        %v2481 = vunpack.c.h.b16 %v2367
        %v2482 = vunpack.c.l.b16 %v2368
        %v2483 = vunpack.c.h.b16 %v2368
        %v2484 = vunpack.c.l.b16 %v2369
        %v2485 = vunpack.c.h.b16 %v2369
        %v2486 = vunpack.c.l.b16 %v2370
        %v2487 = vunpack.c.h.b16 %v2370
        %v2488 = vunpack.c.l.b16 %v2371
        %v2489 = vunpack.c.h.b16 %v2371
        %v2490 = vunpack.c.l.b16 %v2372
        %v2491 = vunpack.c.h.b16 %v2372
        %v2492 = vpack.c.b16 %v2432, %v2428
        %v2493 = vpack.c.b16 %v2433, %v2429
        %v2494 = vpack.c.b16 %v2434, %v2430
        %v2495 = vpack.c.b16 %v2435, %v2431
        %v2496 = vpack.c.b16 %v2440, %v2436
        %v2497 = vpack.c.b16 %v2441, %v2437
        %v2498 = vpack.c.b16 %v2442, %v2438
        %v2499 = vpack.c.b16 %v2443, %v2439
        %v2500 = vpack.c.b16 %v2448, %v2444
        %v2501 = vpack.c.b16 %v2449, %v2445
        %v2502 = vpack.c.b16 %v2450, %v2446
        %v2503 = vpack.c.b16 %v2451, %v2447
        %v2504 = vpack.c.b16 %v2456, %v2452
        %v2505 = vpack.c.b16 %v2457, %v2453
        %v2506 = vpack.c.b16 %v2458, %v2454
        %v2507 = vpack.c.b16 %v2459, %v2455
        %v2508 = vpack.c.b16 %v2464, %v2460
        %v2509 = vpack.c.b16 %v2465, %v2461
        %v2510 = vpack.c.b16 %v2466, %v2462
        %v2511 = vpack.c.b16 %v2467, %v2463
        %v2512 = vpack.c.b16 %v2472, %v2468
        %v2513 = vpack.c.b16 %v2473, %v2469
        %v2514 = vpack.c.b16 %v2474, %v2470
        %v2515 = vpack.c.b16 %v2475, %v2471
        %v2516 = vpack.c.b16 %v2480, %v2476
        %v2517 = vpack.c.b16 %v2481, %v2477
        %v2518 = vpack.c.b16 %v2482, %v2478
        %v2519 = vpack.c.b16 %v2483, %v2479
        %v2520 = vpack.c.b16 %v2488, %v2484
        %v2521 = vpack.c.b16 %v2489, %v2485
        %v2522 = vpack.c.b16 %v2490, %v2486
        %v2523 = vpack.c.b16 %v2491, %v2487
        %2556 = vmatprep.subr.bf16.mxu0 %v2493
        %2557 = vmatpush1.bf16.msra.mxu0 %v2492
        %2558 = vmatprep.subr.bf16.mxu0 %v2497
        %2559 = vmatpush1.bf16.msra.mxu0 %v2496
        %2560 = vmatprep.subr.bf16.mxu0 %v2501
        %2561 = vmatpush1.bf16.msra.mxu0 %v2500
        %2562 = vmatprep.subr.bf16.mxu0 %v2505
        %2563 = vmatpush1.bf16.msra.mxu0 %v2504
        %2564 = vmatprep.subr.bf16.mxu0 %v2509
        %2565 = vmatpush1.bf16.msra.mxu0 %v2508
        %2566 = vmatprep.subr.bf16.mxu0 %v2513
        %2567 = vmatpush1.bf16.msra.mxu0 %v2512
        %2568 = vmatprep.subr.bf16.mxu0 %v2517
        %2569 = vmatpush1.bf16.msra.mxu0 %v2516
        %2570 = vmatprep.subr.bf16.mxu0 %v2521
        %2571 = vmatpush1.bf16.msra.mxu0 %v2520
        %2572 = vmatprep.subr.bf16.mxu0 0
        %2573 = vmatpush1.bf16.msra.mxu0 0
        %2574 = vmatprep.subr.bf16.mxu0 0
        %2575 = vmatpush1.bf16.msra.mxu0 0
        %2576 = vmatprep.subr.bf16.mxu0 0
        %2577 = vmatpush1.bf16.msra.mxu0 0
        %2578 = vmatprep.subr.bf16.mxu0 0
        %2579 = vmatpush1.bf16.msra.mxu0 0
        %2580 = vmatprep.subr.bf16.mxu0 0
        %2581 = vmatpush1.bf16.msra.mxu0 0
        %2582 = vmatprep.subr.bf16.mxu0 0
        %2583 = vmatpush1.bf16.msra.mxu0 0
        %2584 = vmatprep.subr.bf16.mxu0 0
        %2585 = vmatpush1.bf16.msra.mxu0 0
        %2586 = vmatprep.subr.bf16.mxu0 0
        %2587 = vmatpush1.bf16.msra.mxu0 0
        %2588 = vmatprep.mubr.bf16.mxu0 0
        %2589 = vmatmul.mubr.bf16.gmra.mrb[0].mxu0 %v2373
        %v2590 = vpop.f32.mrb[0].mxu0
        %v2591 = vadd.f32 %v2379, %v2590
        %v2592 = vpop.f32.mrb[0].mxu0
        %v2593 = vadd.f32 %v2383, %v2592
        %v2594 = vpop.f32.mrb[0].mxu0
        %v2595 = vadd.f32 %v2379, %v2594
        %v2596 = vpop.f32.mrb[0].mxu0
        %v2597 = vadd.f32 %v2383, %v2596
        %2598 = vdwg.mxu0
        %2599 = vmatprep.subr.bf16.mxu0 %v2495
        %2600 = vmatpush1.bf16.msra.mxu0 %v2494
        %2601 = vmatprep.subr.bf16.mxu0 %v2499
        %2602 = vmatpush1.bf16.msra.mxu0 %v2498
        %2603 = vmatprep.subr.bf16.mxu0 %v2503
        %2604 = vmatpush1.bf16.msra.mxu0 %v2502
        %2605 = vmatprep.subr.bf16.mxu0 %v2507
        %2606 = vmatpush1.bf16.msra.mxu0 %v2506
        %2607 = vmatprep.subr.bf16.mxu0 %v2511
        %2608 = vmatpush1.bf16.msra.mxu0 %v2510
        %2609 = vmatprep.subr.bf16.mxu0 %v2515
        %2610 = vmatpush1.bf16.msra.mxu0 %v2514
        %2611 = vmatprep.subr.bf16.mxu0 %v2519
        %2612 = vmatpush1.bf16.msra.mxu0 %v2518
        %2613 = vmatprep.subr.bf16.mxu0 %v2523
        %2614 = vmatpush1.bf16.msra.mxu0 %v2522
        %2615 = vmatprep.subr.bf16.mxu0 0
        %2616 = vmatpush1.bf16.msra.mxu0 0
        %2617 = vmatprep.subr.bf16.mxu0 0
        %2618 = vmatpush1.bf16.msra.mxu0 0
        %2619 = vmatprep.subr.bf16.mxu0 0
        %2620 = vmatpush1.bf16.msra.mxu0 0
        %2621 = vmatprep.subr.bf16.mxu0 0
        %2622 = vmatpush1.bf16.msra.mxu0 0
        %2623 = vmatprep.subr.bf16.mxu0 0
        %2624 = vmatpush1.bf16.msra.mxu0 0
        %2625 = vmatprep.subr.bf16.mxu0 0
        %2626 = vmatpush1.bf16.msra.mxu0 0
        %2627 = vmatprep.subr.bf16.mxu0 0
        %2628 = vmatpush1.bf16.msra.mxu0 0
        %2629 = vmatprep.subr.bf16.mxu0 0
        %2630 = vmatpush1.bf16.msra.mxu0 0
        %2631 = vmatprep.mubr.bf16.mxu0 0
        %2632 = vmatmul.mubr.bf16.gmra.mrb[0].mxu0 %v2373
        %v2633 = vpop.f32.mrb[0].mxu0
        %v2634 = vadd.f32 %v2387, %v2633
        %v2635 = vpop.f32.mrb[0].mxu0
        %v2636 = vadd.f32 %v2391, %v2635
        %v2637 = vpop.f32.mrb[0].mxu0
        %v2638 = vadd.f32 %v2387, %v2637
        %v2639 = vpop.f32.mrb[0].mxu0
        %v2640 = vadd.f32 %v2391, %v2639
        %2641 = vdwg.mxu0
        %v2642 = vmax.f32 %v2591, 0.0
        %v2643 = vmax.f32 %v2593, 0.0
        %v2644 = vmax.f32 %v2634, 0.0
        %v2645 = vmax.f32 %v2636, 0.0
        %v2646 = vmax.f32 %v2595, 0.0
        %v2647 = vmax.f32 %v2597, 0.0
        %v2648 = vmax.f32 %v2638, 0.0
        %v2649 = vmax.f32 %v2640, 0.0
        %v2650 = vld [vmem:[#allocation14] sm:$0xf]
        %v2651 = vld [vmem:[#allocation14 + $0x4] sm:$0xf]
        %v2652 = vld [vmem:[#allocation14 + $0x8] sm:$0xf]
        %v2653 = vld [vmem:[#allocation14 + $0xc] sm:$0xf]
        %v2654 = vld [vmem:[#allocation14 + $0x10] sm:$0xf]
        %v2655 = vld [vmem:[#allocation14 + $0x14] sm:$0xf]
        %v2656 = vld [vmem:[#allocation14 + $0x18] sm:$0xf]
        %v2657 = vld [vmem:[#allocation14 + $0x1c] sm:$0xf]
        %v2658 = vld [vmem:[#allocation14 + $0x20] sm:$0xf]
        %v2659 = vld [vmem:[#allocation14 + $0x24] sm:$0xf]
        %v2660 = vld [vmem:[#allocation14 + $0x28] sm:$0xf]
        %v2661 = vld [vmem:[#allocation14 + $0x2c] sm:$0xf]
        %v2662 = vld [vmem:[#allocation14 + $0x30] sm:$0xf]
        %v2663 = vld [vmem:[#allocation14 + $0x34] sm:$0xf]
        %v2664 = vld [vmem:[#allocation14 + $0x38] sm:$0xf]
        %v2665 = vld [vmem:[#allocation14 + $0x3c] sm:$0xf]
        %v2666 = vld [vmem:[#allocation14 + $0x40] sm:$0xf]
        %v2667 = vld [vmem:[#allocation14 + $0x44] sm:$0xf]
        %v2668 = vld [vmem:[#allocation14 + $0x48] sm:$0xf]
        %v2669 = vld [vmem:[#allocation14 + $0x4c] sm:$0xf]
        %v2670 = vld [vmem:[#allocation14 + $0x50] sm:$0xf]
        %v2671 = vld [vmem:[#allocation14 + $0x54] sm:$0xf]
        %v2672 = vld [vmem:[#allocation14 + $0x58] sm:$0xf]
        %v2673 = vld [vmem:[#allocation14 + $0x5c] sm:$0xf]
        %v2674 = vld [vmem:[#allocation14 + $0x60] sm:$0xf]
        %v2675 = vld [vmem:[#allocation14 + $0x64] sm:$0xf]
        %v2676 = vld [vmem:[#allocation14 + $0x68] sm:$0xf]
        %v2677 = vld [vmem:[#allocation14 + $0x6c] sm:$0xf]
        %v2678 = vld [vmem:[#allocation14 + $0x70] sm:$0xf]
        %v2679 = vld [vmem:[#allocation14 + $0x74] sm:$0xf]
        %v2680 = vld [vmem:[#allocation14 + $0x78] sm:$0xf]
        %v2681 = vld [vmem:[#allocation14 + $0x7c] sm:$0xf]
        %v2682 = vld [vmem:[#allocation14 + $0x80] sm:$0xf]
        %v2683 = vld [vmem:[#allocation14 + $0x84] sm:$0xf]
        %v2684 = vld [vmem:[#allocation14 + $0x88] sm:$0xf]
        %v2685 = vld [vmem:[#allocation14 + $0x8c] sm:$0xf]
        %v2686 = vld [vmem:[#allocation14 + $0x90] sm:$0xf]
        %v2687 = vld [vmem:[#allocation14 + $0x94] sm:$0xf]
        %v2688 = vld [vmem:[#allocation14 + $0x98] sm:$0xf]
        %v2689 = vld [vmem:[#allocation14 + $0x9c] sm:$0xf]
        %v2690 = vld [vmem:[#allocation14 + $0xa0] sm:$0xf]
        %v2691 = vld [vmem:[#allocation14 + $0xa4] sm:$0xf]
        %v2692 = vld [vmem:[#allocation14 + $0xa8] sm:$0xf]
        %v2693 = vld [vmem:[#allocation14 + $0xac] sm:$0xf]
        %v2694 = vld [vmem:[#allocation14 + $0xb0] sm:$0xf]
        %v2695 = vld [vmem:[#allocation14 + $0xb4] sm:$0xf]
        %v2696 = vld [vmem:[#allocation14 + $0xb8] sm:$0xf]
        %v2697 = vld [vmem:[#allocation14 + $0xbc] sm:$0xf]
        %v2698 = vld [vmem:[#allocation14 + $0xc0] sm:$0xf]
        %v2699 = vld [vmem:[#allocation14 + $0xc4] sm:$0xf]
        %v2700 = vld [vmem:[#allocation14 + $0xc8] sm:$0xf]
        %v2701 = vld [vmem:[#allocation14 + $0xcc] sm:$0xf]
        %v2702 = vld [vmem:[#allocation14 + $0xd0] sm:$0xf]
        %v2703 = vld [vmem:[#allocation14 + $0xd4] sm:$0xf]
        %v2704 = vld [vmem:[#allocation14 + $0xd8] sm:$0xf]
        %v2705 = vld [vmem:[#allocation14 + $0xdc] sm:$0xf]
        %v2706 = vld [vmem:[#allocation14 + $0xe0] sm:$0xf]
        %v2707 = vld [vmem:[#allocation14 + $0xe4] sm:$0xf]
        %v2708 = vld [vmem:[#allocation14 + $0xe8] sm:$0xf]
        %v2709 = vld [vmem:[#allocation14 + $0xec] sm:$0xf]
        %v2710 = vld [vmem:[#allocation14 + $0xf0] sm:$0xf]
        %v2711 = vld [vmem:[#allocation14 + $0xf4] sm:$0xf]
        %v2712 = vld [vmem:[#allocation14 + $0xf8] sm:$0xf]
        %v2713 = vld [vmem:[#allocation14 + $0xfc] sm:$0xf]
        %v2714 = vpack.c.bf16 %v2646, %v2642
        %v2715 = vpack.c.bf16 %v2647, %v2643
        %v2716 = vpack.c.bf16 %v2648, %v2644
        %v2717 = vpack.c.bf16 %v2649, %v2645
        %v2718 = vld [vmem:[%s15] sm:$0x1]
        %v2720 = vlaneseq
        %v2721 = vshrl.u32 %v2720, 7
        %v2722 = vsub.s32 0, %v2721
        %v2723 = vrot.slane %v2718, %v2722
        %v2789 = vunpack.c.l.b16 %v2650
        %v2790 = vunpack.c.l.b16 %v2651
        %v2791 = vunpack.c.l.b16 %v2652
        %v2792 = vunpack.c.l.b16 %v2653
        %v2793 = vunpack.c.l.b16 %v2654
        %v2794 = vunpack.c.l.b16 %v2655
        %v2795 = vunpack.c.l.b16 %v2656
        %v2796 = vunpack.c.l.b16 %v2657
        %v2797 = vunpack.c.l.b16 %v2658
        %v2798 = vunpack.c.l.b16 %v2659
        %v2799 = vunpack.c.l.b16 %v2660
        %v2800 = vunpack.c.l.b16 %v2661
        %v2801 = vunpack.c.l.b16 %v2662
        %v2802 = vunpack.c.l.b16 %v2663
        %v2803 = vunpack.c.l.b16 %v2664
        %v2804 = vunpack.c.l.b16 %v2665
        %v2805 = vunpack.c.l.b16 %v2666
        %v2806 = vunpack.c.l.b16 %v2667
        %v2807 = vunpack.c.l.b16 %v2668
        %v2808 = vunpack.c.l.b16 %v2669
        %v2809 = vunpack.c.l.b16 %v2670
        %v2810 = vunpack.c.l.b16 %v2671
        %v2811 = vunpack.c.l.b16 %v2672
        %v2812 = vunpack.c.l.b16 %v2673
        %v2813 = vunpack.c.l.b16 %v2674
        %v2814 = vunpack.c.l.b16 %v2675
        %v2815 = vunpack.c.l.b16 %v2676
        %v2816 = vunpack.c.l.b16 %v2677
        %v2817 = vunpack.c.l.b16 %v2678
        %v2818 = vunpack.c.l.b16 %v2679
        %v2819 = vunpack.c.l.b16 %v2680
        %v2820 = vunpack.c.l.b16 %v2681
        %v2821 = vunpack.c.l.b16 %v2682
        %v2822 = vunpack.c.l.b16 %v2683
        %v2823 = vunpack.c.l.b16 %v2684
        %v2824 = vunpack.c.l.b16 %v2685
        %v2825 = vunpack.c.l.b16 %v2686
        %v2826 = vunpack.c.l.b16 %v2687
        %v2827 = vunpack.c.l.b16 %v2688
        %v2828 = vunpack.c.l.b16 %v2689
        %v2829 = vunpack.c.l.b16 %v2690
        %v2830 = vunpack.c.l.b16 %v2691
        %v2831 = vunpack.c.l.b16 %v2692
        %v2832 = vunpack.c.l.b16 %v2693
        %v2833 = vunpack.c.l.b16 %v2694
        %v2834 = vunpack.c.l.b16 %v2695
        %v2835 = vunpack.c.l.b16 %v2696
        %v2836 = vunpack.c.l.b16 %v2697
        %v2837 = vunpack.c.l.b16 %v2698
        %v2838 = vunpack.c.l.b16 %v2699
        %v2839 = vunpack.c.l.b16 %v2700
        %v2840 = vunpack.c.l.b16 %v2701
        %v2841 = vunpack.c.l.b16 %v2702
        %v2842 = vunpack.c.l.b16 %v2703
        %v2843 = vunpack.c.l.b16 %v2704
        %v2844 = vunpack.c.l.b16 %v2705
        %v2845 = vunpack.c.l.b16 %v2706
        %v2846 = vunpack.c.l.b16 %v2707
        %v2847 = vunpack.c.l.b16 %v2708
        %v2848 = vunpack.c.l.b16 %v2709
        %v2849 = vunpack.c.l.b16 %v2710
        %v2850 = vunpack.c.l.b16 %v2711
        %v2851 = vunpack.c.l.b16 %v2712
        %v2852 = vunpack.c.l.b16 %v2713
        %v2853 = vpack.c.b16 %v2790, %v2789
        %v2854 = vpack.c.b16 %v2792, %v2791
        %v2855 = vpack.c.b16 %v2794, %v2793
        %v2856 = vpack.c.b16 %v2796, %v2795
        %v2857 = vpack.c.b16 %v2798, %v2797
        %v2858 = vpack.c.b16 %v2800, %v2799
        %v2859 = vpack.c.b16 %v2802, %v2801
        %v2860 = vpack.c.b16 %v2804, %v2803
        %v2861 = vpack.c.b16 %v2806, %v2805
        %v2862 = vpack.c.b16 %v2808, %v2807
        %v2863 = vpack.c.b16 %v2810, %v2809
        %v2864 = vpack.c.b16 %v2812, %v2811
        %v2865 = vpack.c.b16 %v2814, %v2813
        %v2866 = vpack.c.b16 %v2816, %v2815
        %v2867 = vpack.c.b16 %v2818, %v2817
        %v2868 = vpack.c.b16 %v2820, %v2819
        %v2869 = vpack.c.b16 %v2822, %v2821
        %v2870 = vpack.c.b16 %v2824, %v2823
        %v2871 = vpack.c.b16 %v2826, %v2825
        %v2872 = vpack.c.b16 %v2828, %v2827
        %v2873 = vpack.c.b16 %v2830, %v2829
        %v2874 = vpack.c.b16 %v2832, %v2831
        %v2875 = vpack.c.b16 %v2834, %v2833
        %v2876 = vpack.c.b16 %v2836, %v2835
        %v2877 = vpack.c.b16 %v2838, %v2837
        %v2878 = vpack.c.b16 %v2840, %v2839
        %v2879 = vpack.c.b16 %v2842, %v2841
        %v2880 = vpack.c.b16 %v2844, %v2843
        %v2881 = vpack.c.b16 %v2846, %v2845
        %v2882 = vpack.c.b16 %v2848, %v2847
        %v2883 = vpack.c.b16 %v2850, %v2849
        %v2884 = vpack.c.b16 %v2852, %v2851
        %2917 = vmatprep.subr.bf16.mxu0 0
        %2918 = vmatpush1.bf16.msra.mxu0 %v2853
        %2919 = vmatprep.subr.bf16.mxu0 0
        %2920 = vmatpush1.bf16.msra.mxu0 %v2854
        %2921 = vmatprep.subr.bf16.mxu0 0
        %2922 = vmatpush1.bf16.msra.mxu0 %v2855
        %2923 = vmatprep.subr.bf16.mxu0 0
        %2924 = vmatpush1.bf16.msra.mxu0 %v2856
        %2925 = vmatprep.subr.bf16.mxu0 0
        %2926 = vmatpush1.bf16.msra.mxu0 %v2857
        %2927 = vmatprep.subr.bf16.mxu0 0
        %2928 = vmatpush1.bf16.msra.mxu0 %v2858
        %2929 = vmatprep.subr.bf16.mxu0 0
        %2930 = vmatpush1.bf16.msra.mxu0 %v2859
        %2931 = vmatprep.subr.bf16.mxu0 0
        %2932 = vmatpush1.bf16.msra.mxu0 %v2860
        %2933 = vmatprep.subr.bf16.mxu0 0
        %2934 = vmatpush1.bf16.msra.mxu0 %v2861
        %2935 = vmatprep.subr.bf16.mxu0 0
        %2936 = vmatpush1.bf16.msra.mxu0 %v2862
        %2937 = vmatprep.subr.bf16.mxu0 0
        %2938 = vmatpush1.bf16.msra.mxu0 %v2863
        %2939 = vmatprep.subr.bf16.mxu0 0
        %2940 = vmatpush1.bf16.msra.mxu0 %v2864
        %2941 = vmatprep.subr.bf16.mxu0 0
        %2942 = vmatpush1.bf16.msra.mxu0 %v2865
        %2943 = vmatprep.subr.bf16.mxu0 0
        %2944 = vmatpush1.bf16.msra.mxu0 %v2866
        %2945 = vmatprep.subr.bf16.mxu0 0
        %2946 = vmatpush1.bf16.msra.mxu0 %v2867
        %2947 = vmatprep.subr.bf16.mxu0 0
        %2948 = vmatpush1.bf16.msra.mxu0 %v2868
        %2949 = vmatprep.mubr.bf16.mxu0 %v2715
        %2950 = vmatmul.mubr.bf16.gmra.mrb[0].mxu0 %v2714
        %v2951 = vpop.f32.mrb[0].mxu0
        %v2952 = vadd.f32 %v2723, %v2951
        %v2953 = vpop.f32.mrb[0].mxu0
        %v2954 = vpop.f32.mrb[0].mxu0
        %v2955 = vadd.f32 %v2723, %v2954
        %v2956 = vpop.f32.mrb[0].mxu0
        %2957 = vdwg.mxu0
        %2958 = vmatprep.subr.bf16.mxu0 0
        %2959 = vmatpush1.bf16.msra.mxu0 %v2869
        %2960 = vmatprep.subr.bf16.mxu0 0
        %2961 = vmatpush1.bf16.msra.mxu0 %v2870
        %2962 = vmatprep.subr.bf16.mxu0 0
        %2963 = vmatpush1.bf16.msra.mxu0 %v2871
        %2964 = vmatprep.subr.bf16.mxu0 0
        %2965 = vmatpush1.bf16.msra.mxu0 %v2872
        %2966 = vmatprep.subr.bf16.mxu0 0
        %2967 = vmatpush1.bf16.msra.mxu0 %v2873
        %2968 = vmatprep.subr.bf16.mxu0 0
        %2969 = vmatpush1.bf16.msra.mxu0 %v2874
        %2970 = vmatprep.subr.bf16.mxu0 0
        %2971 = vmatpush1.bf16.msra.mxu0 %v2875
        %2972 = vmatprep.subr.bf16.mxu0 0
        %2973 = vmatpush1.bf16.msra.mxu0 %v2876
        %2974 = vmatprep.subr.bf16.mxu0 0
        %2975 = vmatpush1.bf16.msra.mxu0 %v2877
        %2976 = vmatprep.subr.bf16.mxu0 0
        %2977 = vmatpush1.bf16.msra.mxu0 %v2878
        %2978 = vmatprep.subr.bf16.mxu0 0
        %2979 = vmatpush1.bf16.msra.mxu0 %v2879
        %2980 = vmatprep.subr.bf16.mxu0 0
        %2981 = vmatpush1.bf16.msra.mxu0 %v2880
        %2982 = vmatprep.subr.bf16.mxu0 0
        %2983 = vmatpush1.bf16.msra.mxu0 %v2881
        %2984 = vmatprep.subr.bf16.mxu0 0
        %2985 = vmatpush1.bf16.msra.mxu0 %v2882
        %2986 = vmatprep.subr.bf16.mxu0 0
        %2987 = vmatpush1.bf16.msra.mxu0 %v2883
        %2988 = vmatprep.subr.bf16.mxu0 0
        %2989 = vmatpush1.bf16.msra.mxu0 %v2884
        %2990 = vmatprep.mubr.bf16.mxu0 %v2717
        %2991 = vmatmul.mubr.bf16.gmra.mrb[0].mxu0 %v2716
        %v2992 = vpop.f32.mrb[0].mxu0
        %v2993 = vadd.f32 %v2952, %v2992
        %v2994 = vpop.f32.mrb[0].mxu0
        %v2995 = vpop.f32.mrb[0].mxu0
        %v2996 = vadd.f32 %v2955, %v2995
        %v2997 = vpop.f32.mrb[0].mxu0
        %2998 = vdwg.mxu0
        %v2999 = vadd.f32 %v2339, %v2993
        %v3000 = vadd.f32 %v2340, %v2996
        %3001 = vadd.xlane.f32.xlu0 %v2999
        %v3002 = vpop.xlane.xlu0 %3001
        %3003 = vadd.xlane.f32.xlu0 %v3000
        %v3004 = vpop.xlane.xlu0 %3003
        %v3005 = vmul.f32 %v3002, %v2304
        %v3006 = vmul.f32 %v3004, %v2304
        %v3007 = vsub.f32 %v2999, %v3005
        %v3008 = vsub.f32 %v3000, %v3006
        %v3009 = vmul.f32 %v3007, %v3007
        %v3010 = vmul.f32 %v3008, %v3008
        %3011 = vadd.xlane.f32.xlu0 %v3009
        %v3012 = vpop.xlane.xlu0 %3011
        %3013 = vadd.xlane.f32.xlu0 %v3010
        %v3014 = vpop.xlane.xlu0 %3013
        %v3015 = vmul.f32 %v3012, %v2304
        %v3016 = vmul.f32 %v3014, %v2304
        %v3017 = vadd.f32 %v3015, 1e-05
        %v3018 = vadd.f32 %v3016, 1e-05
        %v3019 = vrsqrt.pop %v3017
        %v3020 = vrsqrt.pop %v3018
        %v3021 = vmul.f32 %v3007, %v3019
        %v3022 = vmul.f32 %v3008, %v3020
        %v3023 = vld [vmem:[%s16] sm:$0x1]
        %v3025 = vlaneseq
        %v3026 = vshrl.u32 %v3025, 7
        %v3027 = vsub.s32 0, %v3026
        %v3028 = vrot.slane %v3023, %v3027
        %v3030 = vmul.f32 %v3021, %v3028
        %v3031 = vmul.f32 %v3022, %v3028
        %v3032 = vld [vmem:[%s17] sm:$0x1]
        %v3034 = vlaneseq
        %v3035 = vshrl.u32 %v3034, 7
        %v3036 = vsub.s32 0, %v3035
        %v3037 = vrot.slane %v3032, %v3036
        %v3039 = vadd.f32 %v3030, %v3037
        %v3040 = vadd.f32 %v3031, %v3037
        %3041 = vst [vmem:[%s755] sm:$0xff] %v3039
        %3042 = vst [vmem:[%s755 + $0x8] sm:$0xff] %v3040
        %s3043 = sand.u32 %s456, 1
        %s3044 = scalar_lea.sflag [#allocation4], %s3043
        %s3045 = sand.u32 %s456, 1
        %s3046 = smul.addr %s3045, 16
        %s3047 = scalar_lea.vmem [#allocation16], %s3046
        %s3048 = sand.u32 %s484, 1
        %s3049 = scalar_lea.sflag [#allocation18], %s3048
        %s3050 = sand.u32 %s484, 1
        %s3051 = smul.addr %s3050, 32
        %s3052 = scalar_lea.vmem [#allocation17], %s3051
        // Predicated region
        $region125: #{tpu_custom_call.1} parent=91 // pred_check
          %p3053 = pneg %p466
        $region126: #{tpu_custom_call.1} parent=91 // pred_check_branch
          %3055 = sbr.rel (%p3053) target = $region128
        $region127: #{tpu_custom_call.1} parent=91 // pred_region
          %s3056 = smul.u32 2, %s48
          %s3058 = ssub.s32 256, 256
          %3059 = vsyncadd %s3044, %s3058
          %s3060 = smul.addr %s3056, 2
          %s3061 = sadd.s32 %s49, %s3060
          %s3062 = smul.addr %s3061, 128
          %s3063 = scalar_lea.hbm %s18, %s3062
          %s3064 = sshll.u32 %s3047, 4
          %s3065 = int_to_ptr.vmem [resolvable:$true] %s3064
          %3070 = dma.vmem_to_hbm [thread:$0]  %s3065, 256, %s3063, %s3044, 128, 256, 8
        $region128: #{tpu_custom_call.1} parent=91 // pred_fallthru
          _
        // Predicated region
        $region129: #{tpu_custom_call.1} parent=91 // pred_check
          %p3071 = pneg %p494
        $region130: #{tpu_custom_call.1} parent=91 // pred_check_branch
          %3073 = sbr.rel (%p3071) target = $region132
        $region131: #{tpu_custom_call.1} parent=91 // pred_region
          %s3074 = smul.u32 2, %s48
          %s3076 = ssub.s32 512, 512
          %3077 = vsyncadd %s3049, %s3076
          %s3078 = smul.addr %s3074, 8
          %s3079 = sadd.s32 %s49, %s3078
          %s3080 = smul.addr %s3079, 64
          %s3081 = scalar_lea.hbm %s19, %s3080
          %s3082 = sshll.u32 %s3052, 4
          %s3083 = int_to_ptr.vmem [resolvable:$true] %s3082
          %3088 = dma.vmem_to_hbm [thread:$0]  %s3083, 512, %s3081, %s3049, 64, 128, 4
        $region132: #{tpu_custom_call.1} parent=91 // pred_fallthru
          _
      $region92: #{tpu_custom_call.1} parent=5 // pred_fallthru
        _
      %p3089 = scmp.le.s32.totalorder 2, %s39
      // Predicated region
      $region133: #{tpu_custom_call.1} parent=5 // pred_check
        %p3090 = pneg %p3089
      $region134: #{tpu_custom_call.1} parent=5 // pred_check_branch
        %3092 = sbr.rel (%p3090) target = $region136
      $region135: #{tpu_custom_call.1} parent=5 // pred_region
        %s3093 = ssub.s32 %s39, 2
        // Predicated region
        $region137: #{tpu_custom_call.1} parent=135 // pred_check
          %p3094 = pneg %p472
        $region138: #{tpu_custom_call.1} parent=135 // pred_check_branch
          %3096 = sbr.rel (%p3094) target = $region140
        $region139: #{tpu_custom_call.1} parent=135 // pred_region
          %s3097 = sand.u32 %s457, 1
          %s3098 = scalar_lea.sflag [#allocation4], %s3097
          %s3099 = sand.u32 %s457, 1
          %s3100 = smul.addr %s3099, 16
          %s3101 = scalar_lea.vmem [#allocation16], %s3100
          %3102 = dma.done %s3098, 256
        $region140: #{tpu_custom_call.1} parent=135 // pred_fallthru
          _
        // Predicated region
        $region141: #{tpu_custom_call.1} parent=135 // pred_check
          %p3103 = pneg %p500
        $region142: #{tpu_custom_call.1} parent=135 // pred_check_branch
          %3105 = sbr.rel (%p3103) target = $region144
        $region143: #{tpu_custom_call.1} parent=135 // pred_region
          %s3106 = sand.u32 %s485, 1
          %s3107 = scalar_lea.sflag [#allocation18], %s3106
          %s3108 = sand.u32 %s485, 1
          %s3109 = smul.addr %s3108, 32
          %s3110 = scalar_lea.vmem [#allocation17], %s3109
          %3111 = dma.done %s3107, 512
        $region144: #{tpu_custom_call.1} parent=135 // pred_fallthru
          _
      $region136: #{tpu_custom_call.1} parent=5 // pred_fallthru
        _
    $region6: #{tpu_custom_call.1} parent=1 // loop_footer
      %s43 = sadd.s32 1, %s39
    $region7: #{tpu_custom_call.1} parent=1 // loop_footer_branch
      %38 = sbr.rel target = $region3
    $region8: #{tpu_custom_call.1} parent=1 // loop_exit
      _
    %3112 = vsyncpa [#allocation3], 1
    %s3113 = scalar_lea.sflag [#allocation3], 1
    %3114 = vsyncpa %s3113, 1
    %3115 = vsyncpa [#allocation6], 1
    %3116 = vsyncpa [#allocation9], 1
    %3117 = vsyncpa [#allocation12], 1
    %3118 = vsyncpa [#allocation15], 1
    %3119 = vsyncpa [#allocation4], 1
    %s3120 = scalar_lea.sflag [#allocation4], 1
    %3121 = vsyncpa %s3120, 1
    %3122 = vsyncpa [#allocation18], 1
    %s3123 = scalar_lea.sflag [#allocation18], 1
    %3124 = vsyncpa %s3123, 1

</llo_original>
